<compile_context>
chip_gen: v5e
topology: v5e:2x2
jax: 0.10.0
libtpu: 0.0.40
codegen_flags: <defaults>
</compile_context>

<pallas_src>
import math

import numpy as np
import jax
import jax.numpy as jnp
from jax.experimental import pallas as pl
from jax.experimental.pallas import tpu as pltpu

# ---------------- constants (from FinetuneTrainTransform) ----------------
SR = 16000
MAX_LEN_S = 12
CROP_SIZE = SR * MAX_LEN_S          # 192000, pad=False
N_FFT = 1024
WIN_LENGTH = 1024
HOP = 160
N_MELS = 64
F_MIN = 60.0
F_MAX = 7800.0
N_FREQS = N_FFT // 2 + 1            # 513
TOP_DB = 80.0
AMIN = 1e-10
NORM_MIN = -79.6482
NORM_MAX = 50.6842
DB_SCALE = 10.0 / math.log(10.0)    # 10*log10(x) == DB_SCALE * ln(x)

KF = 512                            # kept (trimmed) freq bins, lane aligned
MEL_PAD = 128                       # mel output lanes (64 real + 64 zero pad)
HALO = 8                            # extra hop-rows per frame tile (need 6, keep 8-aligned)
LAST_W = N_FFT - 6 * HOP            # 64 (width of the 7th hop-column block)


def _round_up(x, m):
    return -(-x // m) * m


# ---------------- deterministic parameter construction (host, f64) --------
def _mel_fbanks_f64():
    # torchaudio.functional.melscale_fbanks(n_freqs=513, f_min=60, f_max=7800,
    #   n_mels=64, sample_rate=16000, norm=None, mel_scale='htk') -> (513, 64)
    def hz_to_mel(f):
        return 2595.0 * np.log10(1.0 + f / 700.0)

    def mel_to_hz(m):
        return 700.0 * (10.0 ** (m / 2595.0) - 1.0)

    all_freqs = np.linspace(0.0, SR // 2, N_FREQS)
    m_pts = np.linspace(hz_to_mel(F_MIN), hz_to_mel(F_MAX), N_MELS + 2)
    f_pts = mel_to_hz(m_pts)
    f_diff = f_pts[1:] - f_pts[:-1]                          # (n_mels+1,)
    slopes = f_pts[None, :] - all_freqs[:, None]             # (n_freqs, n_mels+2)
    down = (-slopes[:, :-2]) / f_diff[:-1]
    up = slopes[:, 2:] / f_diff[1:]
    return np.maximum(0.0, np.minimum(down, up))             # (513, 64) f64


def _build_weights():
    # Hann window (torch.hann_window, periodic=True), float64
    n = np.arange(WIN_LENGTH, dtype=np.float64)
    win = 0.5 - 0.5 * np.cos(2.0 * np.pi * n / WIN_LENGTH)

    fb = _mel_fbanks_f64()                                   # (513, 64)
    # trim to freq bins actually touched by any mel filter (exact: dropped
    # bins have identically-zero filter weight).
    nz = np.nonzero(fb.sum(axis=1) > 0.0)[0]
    k0, k1 = int(nz[0]), int(nz[-1]) + 1
    n_kept = k1 - k0
    assert n_kept <= KF, (n_kept, KF)

    # onesided real-DFT columns for kept bins, Hann window folded in.
    nn = np.arange(N_FFT, dtype=np.int64)[:, None]
    kk = np.arange(k0, k1, dtype=np.int64)[None, :]
    ang = ((nn * kk) % N_FFT).astype(np.float64) * (2.0 * np.pi / N_FFT)
    cos_w = win[:, None] * np.cos(ang)                       # (1024, n_kept)
    sin_w = win[:, None] * np.sin(ang)

    w = np.zeros((N_FFT, 2 * KF), dtype=np.float64)          # [cos | sin]
    w[:, :n_kept] = cos_w
    w[:, KF:KF + n_kept] = sin_w

    # stacked mel filterbank: (y*y) @ [mel; mel] == (re^2 + im^2) @ mel
    mel2 = np.zeros((2 * KF, MEL_PAD), dtype=np.float64)
    mel2[:n_kept, :N_MELS] = fb[k0:k1, :]
    mel2[KF:KF + n_kept, :N_MELS] = fb[k0:k1, :]

    return w.astype(np.float32), mel2.astype(np.float32)


_W_NP, _MEL2_NP = _build_weights()                           # (1024,1024), (1024,128)


# ---------------- Pallas kernel (hot path) --------------------------------
def atst_mel_kernel(wave_ref, w_ref, mel2_ref, o_ref, frames_ref):
    # wave_ref:   (1, 1, TF+8, 160) f32   hop-row slab for this frame tile (halo incl.)
    # w_ref:      (1024, 1024)      bf16  merged windowed-DFT weight [cos | sin]
    # mel2_ref:   (1024, 128)       bf16  stacked mel filterbank [mel; mel]
    # o_ref:      (1, TF, 128)      f32   mel power in dB (un-clamped)
    # frames_ref: (TF, 1024)        bf16  scratch: framed signal
    tfs = frames_ref.shape[0]

    # Build the (TF, 1024) frame matrix:
    #   frames[t, q*160 + r] = slab[t + q, r]   (q = 0..6, last block 64 wide)
    # i.e. 7 statically-shifted copies of the slab; all stores are full-row,
    # lane-dense writes into the bf16 scratch.
    for q in range(7):
        lo = q * HOP
        w = HOP if q < 6 else LAST_W
        frames_ref[:, lo:lo + w] = (
            wave_ref[0, 0, q:q + tfs, :w].astype(jnp.bfloat16))

    # Windowed real DFT on the MXU (bf16 inputs, f32 accumulation):
    # y[:, :512] = Re{X}, y[:, 512:] = -Im{X} (sign irrelevant after squaring).
    y = jnp.dot(frames_ref[...], w_ref[...],
                preferred_element_type=jnp.float32)          # (TF, 1024) f32

    # power spectrum folded into the mel matmul: power @ mel == (y*y) @ [mel;mel]
    sq = (y * y).astype(jnp.bfloat16)
    melspec = jnp.dot(sq, mel2_ref[...],
                      preferred_element_type=jnp.float32)    # (TF, 128) f32

    # AmplitudeToDB(power), ref=1.0 -> db_multiplier term is 0.
    # top_db clamp + MinMax are applied in the wrapper (global per-spectrogram
    # reductions) so the grid stays fully parallel.
    o_ref[0] = DB_SCALE * jnp.log(jnp.maximum(melspec, AMIN))


def _run_mel_kernel(wave_tiles, w_mat, mel2, tf, t_pad):
    B, n_tiles, tile_rows, _ = wave_tiles.shape
    return pl.pallas_call(
        atst_mel_kernel,
        out_shape=jax.ShapeDtypeStruct((B, t_pad, MEL_PAD), jnp.float32),
        grid=(B, n_tiles),
        in_specs=[
            # per-tile hop-row slab (tiny: ~0.26 MiB f32 including lane pad)
            pl.BlockSpec((1, 1, tile_rows, HOP), lambda b, f: (b, f, 0, 0)),
            # constant weights: whole-array VMEM residents (single copy,
            # never re-fetched, no double-buffering).
            pl.BlockSpec(memory_space=pltpu.MemorySpace.VMEM),
            pl.BlockSpec(memory_space=pltpu.MemorySpace.VMEM),
        ],
        out_specs=pl.BlockSpec((1, tf, MEL_PAD), lambda b, f: (b, f, 0)),
        scratch_shapes=[pltpu.VMEM((tf, N_FFT), jnp.bfloat16)],
        compiler_params=pltpu.CompilerParams(
            dimension_semantics=("parallel", "parallel")),
    )(wave_tiles, w_mat, mel2)


# ---------------- wrapper: glue (crop, pad, hop-rows) + kernel --------------
def atst_feature_forward(waveforms):
    """waveforms: (B, L) float32  ->  fbanks: (B, 1, 64, n_frames) float32"""
    B, L = waveforms.shape
    waveforms = waveforms.astype(jnp.float32)

    # CentralCrop(192000, pad=False): identity if L < size, else center crop
    if L >= CROP_SIZE:
        start = (L - CROP_SIZE) // 2
        waveforms = waveforms[:, start:start + CROP_SIZE]
        L = CROP_SIZE
    if L <= N_FFT // 2:
        raise ValueError("reflect padding needs at least n_fft//2 + 1 samples")

    # torch.stft(center=True, pad_mode='reflect')
    padded = jnp.pad(waveforms, ((0, 0), (N_FFT // 2, N_FFT // 2)),
                     mode="reflect")
    lp = L + N_FFT
    n_frames = 1 + L // HOP

    # frame tile: 256 works well on all gens (v7x keeps >=2 tiles per 12s clip
    # for megacore sharding; v5e/v6e working set ~5 MiB in bf16).
    # TODO(synk): per-gen sweep (v6e likes tf=640 for 12 s clips).
    tf = min(256, _round_up(n_frames, 8))
    t_pad = _round_up(n_frames, tf)
    n_tiles = t_pad // tf

    # hop-row matrix: row i = padded[i*160 : (i+1)*160]; pad so every tile's
    # halo rows exist and are zero.
    n_rows = max(t_pad + HALO, _round_up(-(-lp // HOP), HALO))
    padded = jnp.pad(padded, ((0, 0), (0, n_rows * HOP - lp)))
    wave = padded.reshape(B, n_rows, HOP)

    # per-tile halo duplication (n_tiles static slices, ~3% extra HBM); the
    # kernel builds the 6.4x-expanded frame matrix on-chip from this slab.
    wave_tiles = jnp.stack(
        [wave[:, f * tf:f * tf + tf + HALO, :] for f in range(n_tiles)], axis=1)

    w_mat = jnp.asarray(_W_NP).astype(jnp.bfloat16)          # (1024, 1024)
    mel2 = jnp.asarray(_MEL2_NP).astype(jnp.bfloat16)        # (1024, 128)

    db = _run_mel_kernel(wave_tiles, w_mat, mel2, tf, t_pad)  # (B, t_pad, 128)
    db = db[:, :n_frames, :N_MELS]                            # drop frame/mel pad

    # AmplitudeToDB top_db clamp (per spectrogram == per batch element; padded
    # frames/mels already excluded), then MinMax with fixed statistics.
    db_max = jnp.max(db, axis=(1, 2), keepdims=True)
    db = jnp.maximum(db, db_max - TOP_DB)
    db = (db - NORM_MIN) / (NORM_MAX - NORM_MIN) * 2.0 - 1.0

    out = jnp.transpose(db, (0, 2, 1))                       # (B, 64, T)
    return out[:, None, :, :]                                # (B, 1, 64, T)


if __name__ == "__main__":
    key = jax.random.PRNGKey(0)
    B, L = 2, 4000                                           # small demo shapes
    waveforms = jax.random.normal(key, (B, L), dtype=jnp.float32)

    forward = jax.jit(atst_feature_forward)
    fbanks = forward(waveforms)
    fbanks = jax.block_until_ready(fbanks)

    expected_frames = 1 + L // HOP
    assert fbanks.shape == (B, 1, N_MELS, expected_frames), fbanks.shape
    assert fbanks.dtype == jnp.float32
    assert bool(jnp.all(jnp.isfinite(fbanks)))
    print("KERNEL_OK")
</pallas_src>

<mosaic_0001>
module attributes {stable_mosaic.version = 11 : i64} {
  func.func @atst_mel_kernel(%arg0: i32, %arg1: i32, %arg2: memref<1x1x40x160xf32, #tpu.memory_space<vmem>>, %arg3: memref<1024x1024xbf16, #tpu.memory_space<vmem>>, %arg4: memref<1024x128xbf16, #tpu.memory_space<vmem>>, %arg5: memref<1x32x128xf32, #tpu.memory_space<vmem>>, %arg6: memref<32x1024xbf16, #tpu.memory_space<vmem>>) attributes {dimension_semantics = [#tpu.dimension_semantics<parallel>, #tpu.dimension_semantics<parallel>], iteration_bounds = array<i64: 2, 1>, scalar_prefetch = 0 : i64, scratch_operands = 1 : i64, tpu.core_type = #tpu.core_type<tc>, window_params = [{transform_indices = @transform_0, window_bounds = array<i64: 1, 1, 40, 160>}, {pipeline_mode = #tpu.pipeline_mode<synchronous>, transform_indices = @transform_1, window_bounds = array<i64: 1024, 1024>}, {pipeline_mode = #tpu.pipeline_mode<synchronous>, transform_indices = @transform_2, window_bounds = array<i64: 1024, 128>}, {transform_indices = @transform_3, window_bounds = array<i64: 1, 32, 128>}]} {
    %c0 = arith.constant 0 : index
    %c0_0 = arith.constant 0 : index
    %c0_1 = arith.constant 0 : index
    %c0_2 = arith.constant 0 : index
    %0 = vector.load %arg2[%c0, %c0_0, %c0_1, %c0_2] : memref<1x1x40x160xf32, #tpu.memory_space<vmem>>, vector<1x1x32x160xf32>
    %1 = vector.shape_cast %0 : vector<1x1x32x160xf32> to vector<32x160xf32>
    %2 = arith.truncf %1 : vector<32x160xf32> to vector<32x160xbf16>
    %c0_3 = arith.constant 0 : index
    %c0_4 = arith.constant 0 : index
    %3 = vector.load %arg6[%c0_3, %c0_4] : memref<32x1024xbf16, #tpu.memory_space<vmem>>, vector<32x160xbf16>
    tpu.vector_store %arg6[%c0_3, %c0_4], %2 {strides = array<i32>} : memref<32x1024xbf16, #tpu.memory_space<vmem>>, vector<32x160xbf16>,
    %c0_5 = arith.constant 0 : index
    %c0_6 = arith.constant 0 : index
    %c1 = arith.constant 1 : index
    %c0_7 = arith.constant 0 : index
    %4 = vector.load %arg2[%c0_5, %c0_6, %c1, %c0_7] : memref<1x1x40x160xf32, #tpu.memory_space<vmem>>, vector<1x1x32x160xf32>
    %5 = vector.shape_cast %4 : vector<1x1x32x160xf32> to vector<32x160xf32>
    %6 = arith.truncf %5 : vector<32x160xf32> to vector<32x160xbf16>
    %c0_8 = arith.constant 0 : index
    %c160 = arith.constant 160 : index
    %7 = vector.load %arg6[%c0_8, %c160] : memref<32x1024xbf16, #tpu.memory_space<vmem>>, vector<32x160xbf16>
    tpu.vector_store %arg6[%c0_8, %c160], %6 {strides = array<i32>} : memref<32x1024xbf16, #tpu.memory_space<vmem>>, vector<32x160xbf16>,
    %c0_9 = arith.constant 0 : index
    %c0_10 = arith.constant 0 : index
    %c2 = arith.constant 2 : index
    %c0_11 = arith.constant 0 : index
    %8 = vector.load %arg2[%c0_9, %c0_10, %c2, %c0_11] : memref<1x1x40x160xf32, #tpu.memory_space<vmem>>, vector<1x1x32x160xf32>
    %9 = vector.shape_cast %8 : vector<1x1x32x160xf32> to vector<32x160xf32>
    %10 = arith.truncf %9 : vector<32x160xf32> to vector<32x160xbf16>
    %c0_12 = arith.constant 0 : index
    %c320 = arith.constant 320 : index
    %11 = vector.load %arg6[%c0_12, %c320] : memref<32x1024xbf16, #tpu.memory_space<vmem>>, vector<32x160xbf16>
    tpu.vector_store %arg6[%c0_12, %c320], %10 {strides = array<i32>} : memref<32x1024xbf16, #tpu.memory_space<vmem>>, vector<32x160xbf16>,
    %c0_13 = arith.constant 0 : index
    %c0_14 = arith.constant 0 : index
    %c3 = arith.constant 3 : index
    %c0_15 = arith.constant 0 : index
    %12 = vector.load %arg2[%c0_13, %c0_14, %c3, %c0_15] : memref<1x1x40x160xf32, #tpu.memory_space<vmem>>, vector<1x1x32x160xf32>
    %13 = vector.shape_cast %12 : vector<1x1x32x160xf32> to vector<32x160xf32>
    %14 = arith.truncf %13 : vector<32x160xf32> to vector<32x160xbf16>
    %c0_16 = arith.constant 0 : index
    %c480 = arith.constant 480 : index
    %15 = vector.load %arg6[%c0_16, %c480] : memref<32x1024xbf16, #tpu.memory_space<vmem>>, vector<32x160xbf16>
    tpu.vector_store %arg6[%c0_16, %c480], %14 {strides = array<i32>} : memref<32x1024xbf16, #tpu.memory_space<vmem>>, vector<32x160xbf16>,
    %c0_17 = arith.constant 0 : index
    %c0_18 = arith.constant 0 : index
    %c4 = arith.constant 4 : index
    %c0_19 = arith.constant 0 : index
    %16 = vector.load %arg2[%c0_17, %c0_18, %c4, %c0_19] : memref<1x1x40x160xf32, #tpu.memory_space<vmem>>, vector<1x1x32x160xf32>
    %17 = vector.shape_cast %16 : vector<1x1x32x160xf32> to vector<32x160xf32>
    %18 = arith.truncf %17 : vector<32x160xf32> to vector<32x160xbf16>
    %c0_20 = arith.constant 0 : index
    %c640 = arith.constant 640 : index
    %19 = vector.load %arg6[%c0_20, %c640] : memref<32x1024xbf16, #tpu.memory_space<vmem>>, vector<32x160xbf16>
    tpu.vector_store %arg6[%c0_20, %c640], %18 {strides = array<i32>} : memref<32x1024xbf16, #tpu.memory_space<vmem>>, vector<32x160xbf16>,
    %c0_21 = arith.constant 0 : index
    %c0_22 = arith.constant 0 : index
    %c5 = arith.constant 5 : index
    %c0_23 = arith.constant 0 : index
    %20 = vector.load %arg2[%c0_21, %c0_22, %c5, %c0_23] : memref<1x1x40x160xf32, #tpu.memory_space<vmem>>, vector<1x1x32x160xf32>
    %21 = vector.shape_cast %20 : vector<1x1x32x160xf32> to vector<32x160xf32>
    %22 = arith.truncf %21 : vector<32x160xf32> to vector<32x160xbf16>
    %c0_24 = arith.constant 0 : index
    %c800 = arith.constant 800 : index
    %23 = vector.load %arg6[%c0_24, %c800] : memref<32x1024xbf16, #tpu.memory_space<vmem>>, vector<32x160xbf16>
    tpu.vector_store %arg6[%c0_24, %c800], %22 {strides = array<i32>} : memref<32x1024xbf16, #tpu.memory_space<vmem>>, vector<32x160xbf16>,
    %c0_25 = arith.constant 0 : index
    %c0_26 = arith.constant 0 : index
    %c6 = arith.constant 6 : index
    %c0_27 = arith.constant 0 : index
    %24 = vector.load %arg2[%c0_25, %c0_26, %c6, %c0_27] : memref<1x1x40x160xf32, #tpu.memory_space<vmem>>, vector<1x1x32x64xf32>
    %25 = vector.shape_cast %24 : vector<1x1x32x64xf32> to vector<32x64xf32>
    %26 = arith.truncf %25 : vector<32x64xf32> to vector<32x64xbf16>
    %c0_28 = arith.constant 0 : index
    %c960 = arith.constant 960 : index
    %27 = vector.load %arg6[%c0_28, %c960] : memref<32x1024xbf16, #tpu.memory_space<vmem>>, vector<32x64xbf16>
    tpu.vector_store %arg6[%c0_28, %c960], %26 {strides = array<i32>} : memref<32x1024xbf16, #tpu.memory_space<vmem>>, vector<32x64xbf16>,
    %c0_29 = arith.constant 0 : index
    %c0_30 = arith.constant 0 : index
    %28 = vector.load %arg6[%c0_29, %c0_30] : memref<32x1024xbf16, #tpu.memory_space<vmem>>, vector<32x1024xbf16>
    %c0_31 = arith.constant 0 : index
    %c0_32 = arith.constant 0 : index
    %29 = vector.load %arg3[%c0_31, %c0_32] : memref<1024x1024xbf16, #tpu.memory_space<vmem>>, vector<1024x1024xbf16>
    %cst = arith.constant dense<0.000000e+00> : vector<32x1024xf32>
    %30 = tpu.matmul %28, %29, %cst {dimension_numbers = #tpu.dot_dimension_numbers<[1], [0], [0], [1], [0, 0, 1, 1], [], []>} : vector<32x1024xbf16>, vector<1024x1024xbf16>, vector<32x1024xf32> -> vector<32x1024xf32>
    %31 = arith.mulf %30, %30 : vector<32x1024xf32>
    %32 = arith.truncf %31 : vector<32x1024xf32> to vector<32x1024xbf16>
    %c0_33 = arith.constant 0 : index
    %c0_34 = arith.constant 0 : index
    %33 = vector.load %arg4[%c0_33, %c0_34] : memref<1024x128xbf16, #tpu.memory_space<vmem>>, vector<1024x128xbf16>
    %cst_35 = arith.constant dense<0.000000e+00> : vector<32x128xf32>
    %34 = tpu.matmul %32, %33, %cst_35 {dimension_numbers = #tpu.dot_dimension_numbers<[1], [0], [0], [1], [0, 0, 1, 1], [], []>} : vector<32x1024xbf16>, vector<1024x128xbf16>, vector<32x128xf32> -> vector<32x128xf32>
    %cst_36 = arith.constant 1.000000e-10 : f32
    %35 = vector.broadcast %cst_36 : f32 to vector<32x128xf32>
    %36 = arith.maximumf %34, %35 : vector<32x128xf32>
    %37 = math.log %36 : vector<32x128xf32>
    %cst_37 = arith.constant 4.34294462 : f32
    %38 = vector.broadcast %cst_37 : f32 to vector<32x128xf32>
    %39 = arith.mulf %38, %37 : vector<32x128xf32>
    %c0_38 = arith.constant 0 : index
    %c0_39 = arith.constant 0 : index
    %c0_40 = arith.constant 0 : index
    %40 = vector.load %arg5[%c0_38, %c0_39, %c0_40] : memref<1x32x128xf32, #tpu.memory_space<vmem>>, vector<1x32x128xf32>
    %41 = vector.shape_cast %40 : vector<1x32x128xf32> to vector<32x128xf32>
    %42 = vector.shape_cast %39 : vector<32x128xf32> to vector<1x32x128xf32>
    tpu.vector_store %arg5[%c0_38, %c0_39, %c0_40], %42 {strides = array<i32>} : memref<1x32x128xf32, #tpu.memory_space<vmem>>, vector<1x32x128xf32>,
    return
  }
  func.func @transform_0(%arg0: i32, %arg1: i32) -> (i32, i32, i32, i32) {
    %c0_i32 = arith.constant 0 : i32
    %c0_i32_0 = arith.constant 0 : i32
    %c0_i32_1 = arith.constant 0 : i32
    return %arg0, %arg1, %c0_i32, %c0_i32_0 : i32, i32, i32, i32
  }
  func.func @transform_1(%arg0: i32, %arg1: i32) -> (i32, i32) {
    %c0_i32 = arith.constant 0 : i32
    %c0_i32_0 = arith.constant 0 : i32
    %c0_i32_1 = arith.constant 0 : i32
    return %c0_i32, %c0_i32_0 : i32, i32
  }
  func.func @transform_2(%arg0: i32, %arg1: i32) -> (i32, i32) {
    %c0_i32 = arith.constant 0 : i32
    %c0_i32_0 = arith.constant 0 : i32
    %c0_i32_1 = arith.constant 0 : i32
    return %c0_i32, %c0_i32_0 : i32, i32
  }
  func.func @transform_3(%arg0: i32, %arg1: i32) -> (i32, i32, i32) {
    %c0_i32 = arith.constant 0 : i32
    %c0_i32_0 = arith.constant 0 : i32
    return %arg0, %arg1, %c0_i32 : i32, i32, i32
  }
}

</mosaic_0001>

<llo_original>
// kernel: atst_feature_forward.1
$region0: #{atst_feature_forward.1}
  #allocation0 [shape = 'u32[]', space=smem, size = 0x4, offset = 0x4, fixed_abs, tag = 'smem constant byte address 0x4 - core index']
  #allocation1 [shape = 'u32[72,128]{1,0:T(1,128)}', space=vmem, size = 0x9000, scoped, tag = 'internal scratch']
  #allocation2 [shape = 'bf16[32,1024]{1,0:T(8,128)(2,1)}', space=vmem, size = 0x10000, scoped, tag = 'scratch operand']
  %s0 = inlined_call_operand.vmem [shape: f32[2,1,40,160], index: 0, kind: input, shape index: {}]
  %s1 = inlined_call_operand.hbm [shape: bf16[1024,1024], index: 1, kind: input, shape index: {}]
  %s2 = inlined_call_operand.hbm [shape: bf16[1024,128], index: 2, kind: input, shape index: {}]
  %s3 = inlined_call_operand.vmem [shape: f32[2,32,128], index: 3, kind: output, shape index: {}]
  %s4 = sld [smem:[#allocation0]]
  $region53: #{atst_feature_forward.1} parent=0
    _
  %s6 = ssub.s32 1, %s4
  %s7 = scalar_select 0, %s6, %s4
  $region1: #{atst_feature_forward.1} parent=0
    #allocation3 [shape = 'u8[2097152]{0}', space=vmem, size = 0x200000, scoped, tag = 'input window, operand 1, single buffered']
    #allocation4 [shape = 's32[2]{0}', space=sflag, size = 0x8, scoped, tag = 'scoped memory for atst_feature_forward.1']
    #allocation5 [shape = 'u8[262144]{0}', space=vmem, size = 0x40000, scoped, tag = 'input window, operand 2, single buffered']
    #allocation6 [shape = 's32[1]{0}', space=sflag, size = 0x4, scoped, tag = 'scoped memory for atst_feature_forward.1']
    %8 = vsyncpa [#allocation4], 0
    %9 = vsyncpa [#allocation6], 0
    loop: start=0, step=1, limit=4
    $region2: #{atst_feature_forward.1} parent=1 // loop_pre_header
      _
    $region3: #{atst_feature_forward.1} parent=1 // loop_header
      %s11 = sphi 0, %s15
      %p12 = scmp.ge.s32.totalorder %s11, 4
      %s18 = sphi 0, %s30
      %s19 = sphi 0, %s26
      %s20 = sphi 0, %s18
      %s21 = sphi 0, %s19
      %s22 = sphi 0, %s20
      %s23 = sphi 0, %s21
      %s35 = sphi 0, %s37
      %s38 = sphi 0, %s35
      %s39 = sphi 0, %s38
      %s55 = sphi 0, %s39
      %s59 = sphi 0, %s59
      %s61 = sphi 0, %s59
      %s62 = sphi 0, %s61
      %s76 = sphi 0, %s62
      %s80 = sphi 0, %s80
      %s82 = sphi 0, %s80
      %s83 = sphi 0, %s82
      %s97 = sphi 0, %s83
      %s105 = sphi 0, %s107
      %s108 = sphi 0, %s105
      %s109 = sphi 0, %s108
      %s125 = sphi 0, %s109
    $region4: #{atst_feature_forward.1} parent=1 // loop_header_branch
      %14 = sbr.rel (%p12) target = $region8
    $region5: #{atst_feature_forward.1} parent=1 // loop_body
      %s16 = ssub.s32 %s11, 1
      %s17 = ssub.s32 %s11, 2
      %s24 = sadd.s32 1, %s19
      %p25 = scmp.ge.s32.totalorder %s24, 1
      %s26 = scalar_select %p25, 0, %s24
      %s27 = sadd.s32 1, %s18
      %s28 = scalar_select %p25, %s27, %s18
      %p29 = scmp.ge.s32.totalorder %s28, 2
      %s30 = scalar_select %p29, 0, %s28
      %s31 = ssub.s32 %s18, %s30
      %s32 = ssub.s32 %s19, %s26
      %s33 = sor.u32 %s31, %s32
      %p34 = scmp.eq.s32.totalorder %s33, 0
      %s36 = sadd.s32 %s35, 1
      %s37 = scalar_select %p34, %s35, %s36
      %p40 = pneg %p34
      %p41 = scmp.eq.s32.totalorder %s11, 1
      %p42 = por %p40, %p41
      %p43 = scmp.ne.s32.totalorder %s35, %s38
      %p44 = scmp.eq.s32.totalorder %s11, 0
      %p45 = por %p43, %p44
      %p46 = scmp.ne.s32.totalorder %s35, %s38
      %p47 = scmp.eq.s32.totalorder %s16, 1
      %p48 = por %p46, %p47
      %p49 = scmp.ne.s32.totalorder %s38, %s39
      %p50 = scmp.eq.s32.totalorder %s16, 0
      %p51 = por %p49, %p50
      %p52 = scmp.ne.s32.totalorder %s38, %s39
      %p53 = scmp.eq.s32.totalorder %s17, 1
      %p54 = por %p52, %p53
      %p56 = scmp.ne.s32.totalorder %s39, %s55
      %p57 = scmp.eq.s32.totalorder %s17, 0
      %p58 = por %p56, %p57
      %s60 = sadd.s32 %s59, 1
      %p63 = scmp.eq.s32.totalorder %s11, 1
      %p64 = scmp.ne.s32.totalorder %s59, %s61
      %p65 = scmp.eq.s32.totalorder %s11, 0
      %p66 = por %p64, %p65
      %p67 = scmp.ne.s32.totalorder %s59, %s61
      %p68 = scmp.eq.s32.totalorder %s16, 1
      %p69 = por %p67, %p68
      %p70 = scmp.ne.s32.totalorder %s61, %s62
      %p71 = scmp.eq.s32.totalorder %s16, 0
      %p72 = por %p70, %p71
      %p73 = scmp.ne.s32.totalorder %s61, %s62
      %p74 = scmp.eq.s32.totalorder %s17, 1
      %p75 = por %p73, %p74
      %p77 = scmp.ne.s32.totalorder %s62, %s76
      %p78 = scmp.eq.s32.totalorder %s17, 0
      %p79 = por %p77, %p78
      %s81 = sadd.s32 %s80, 1
      %p84 = scmp.eq.s32.totalorder %s11, 1
      %p85 = scmp.ne.s32.totalorder %s80, %s82
      %p86 = scmp.eq.s32.totalorder %s11, 0
      %p87 = por %p85, %p86
      %p88 = scmp.ne.s32.totalorder %s80, %s82
      %p89 = scmp.eq.s32.totalorder %s16, 1
      %p90 = por %p88, %p89
      %p91 = scmp.ne.s32.totalorder %s82, %s83
      %p92 = scmp.eq.s32.totalorder %s16, 0
      %p93 = por %p91, %p92
      %p94 = scmp.ne.s32.totalorder %s82, %s83
      %p95 = scmp.eq.s32.totalorder %s17, 1
      %p96 = por %p94, %p95
      %p98 = scmp.ne.s32.totalorder %s83, %s97
      %p99 = scmp.eq.s32.totalorder %s17, 0
      %p100 = por %p98, %p99
      %s101 = ssub.s32 %s18, %s30
      %s102 = ssub.s32 %s19, %s26
      %s103 = sor.u32 %s101, %s102
      %p104 = scmp.eq.s32.totalorder %s103, 0
      %s106 = sadd.s32 %s105, 1
      %s107 = scalar_select %p104, %s105, %s106
      %p110 = pneg %p104
      %p111 = scmp.eq.s32.totalorder %s11, 1
      %p112 = por %p110, %p111
      %p113 = scmp.ne.s32.totalorder %s105, %s108
      %p114 = scmp.eq.s32.totalorder %s11, 0
      %p115 = por %p113, %p114
      %p116 = scmp.ne.s32.totalorder %s105, %s108
      %p117 = scmp.eq.s32.totalorder %s16, 1
      %p118 = por %p116, %p117
      %p119 = scmp.ne.s32.totalorder %s108, %s109
      %p120 = scmp.eq.s32.totalorder %s16, 0
      %p121 = por %p119, %p120
      %p122 = scmp.ne.s32.totalorder %s108, %s109
      %p123 = scmp.eq.s32.totalorder %s17, 1
      %p124 = por %p122, %p123
      %p126 = scmp.ne.s32.totalorder %s109, %s125
      %p127 = scmp.eq.s32.totalorder %s17, 0
      %p128 = por %p126, %p127
      %p129 = scmp.le.s32.totalorder 1, %s11
      %p130 = scmp.lt.s32.totalorder %s11, 3
      %p131 = pnand %p129, %p130
      %p132 = pneg %p131
      // Predicated region
      $region9: #{atst_feature_forward.1} parent=5 // pred_check
        _
      $region10: #{atst_feature_forward.1} parent=5 // pred_check_branch
        %134 = sbr.rel (%p131) target = $region12
      $region11: #{atst_feature_forward.1} parent=5 // pred_region
        %s135 = ssub.s32 %s11, 1
        // Predicated region
        $region13: #{atst_feature_forward.1} parent=11 // pred_check
          %p136 = pneg %p72
        $region14: #{atst_feature_forward.1} parent=11 // pred_check_branch
          %138 = sbr.rel (%p136) target = $region16
        $region15: #{atst_feature_forward.1} parent=11 // pred_region
          %140 = vsyncadd [#allocation4], 0
          %s141 = sshll.u32 %s1, 4
          %s142 = int_to_ptr.hbm [resolvable:$true] %s141
          %s143 = sshll.u32 [#allocation3], 4
          %s144 = int_to_ptr.vmem [resolvable:$true] %s143
          %149 = dma.hbm_to_vmem [thread:$0]  %s142, 65536, %s144, [#allocation4], 512, 512, 32
        $region16: #{atst_feature_forward.1} parent=11 // pred_fallthru
          _
        // Predicated region
        $region17: #{atst_feature_forward.1} parent=11 // pred_check
          %p150 = pneg %p93
        $region18: #{atst_feature_forward.1} parent=11 // pred_check_branch
          %152 = sbr.rel (%p150) target = $region20
        $region19: #{atst_feature_forward.1} parent=11 // pred_region
          %154 = vsyncadd [#allocation6], 0
          %s155 = sshll.u32 %s2, 4
          %s156 = int_to_ptr.hbm [resolvable:$true] %s155
          %s157 = sshll.u32 [#allocation5], 4
          %s158 = int_to_ptr.vmem [resolvable:$true] %s157
          %163 = dma.hbm_to_vmem [thread:$0]  %s156, 8192, %s158, [#allocation6], 64, 64, 4
        $region20: #{atst_feature_forward.1} parent=11 // pred_fallthru
          _
      $region12: #{atst_feature_forward.1} parent=5 // pred_fallthru
        _
      %p164 = scmp.lt.s32.totalorder %s11, 2
      // Predicated region
      $region21: #{atst_feature_forward.1} parent=5 // pred_check
        %p165 = pneg %p164
      $region22: #{atst_feature_forward.1} parent=5 // pred_check_branch
        %167 = sbr.rel (%p165) target = $region24
      $region23: #{atst_feature_forward.1} parent=5 // pred_region
        // Predicated region
        $region25: #{atst_feature_forward.1} parent=23 // pred_check
          %p168 = pneg %p45
        $region26: #{atst_feature_forward.1} parent=23 // pred_check_branch
          %170 = sbr.rel (%p168) target = $region28
        $region27: #{atst_feature_forward.1} parent=23 // pred_region
          %p171 = scmp.lt.s32.totalorder %s18, 1
          %s172 = scalar_select %p171, %s18, 1
          %p173 = scmp.lt.s32.totalorder %s19, 0
          %s174 = scalar_select %p173, %s19, 0
          %s175 = smul.addr %s174, 10
          %s176 = smul.addr %s172, 10
          %s177 = sadd.s32 %s175, %s176
          %s178 = smul.addr %s177, 8
          %s179 = scalar_lea.vmem %s0, %s178
        $region28: #{atst_feature_forward.1} parent=23 // pred_fallthru
          _
      $region24: #{atst_feature_forward.1} parent=5 // pred_fallthru
        _
      %p180 = scmp.le.s32.totalorder 1, %s11
      %p181 = scmp.lt.s32.totalorder %s11, 3
      %p182 = pnand %p180, %p181
      %p183 = pneg %p182
      // Predicated region
      $region29: #{atst_feature_forward.1} parent=5 // pred_check
        _
      $region30: #{atst_feature_forward.1} parent=5 // pred_check_branch
        %185 = sbr.rel (%p182) target = $region32
      $region31: #{atst_feature_forward.1} parent=5 // pred_region
        %s186 = ssub.s32 %s11, 1
        // Predicated region
        $region33: #{atst_feature_forward.1} parent=31 // pred_check
          %p187 = pneg %p72
        $region34: #{atst_feature_forward.1} parent=31 // pred_check_branch
          %189 = sbr.rel (%p187) target = $region36
        $region35: #{atst_feature_forward.1} parent=31 // pred_region
          %191 = dma.done [#allocation4], 65536
        $region36: #{atst_feature_forward.1} parent=31 // pred_fallthru
          _
        // Predicated region
        $region37: #{atst_feature_forward.1} parent=31 // pred_check
          %p192 = pneg %p93
        $region38: #{atst_feature_forward.1} parent=31 // pred_check_branch
          %194 = sbr.rel (%p192) target = $region40
        $region39: #{atst_feature_forward.1} parent=31 // pred_region
          %196 = dma.done [#allocation6], 8192
        $region40: #{atst_feature_forward.1} parent=31 // pred_fallthru
          _
        %p197 = scmp.lt.s32.totalorder %s20, 1
        %s198 = scalar_select %p197, %s20, 1
        %p199 = scmp.lt.s32.totalorder %s21, 0
        %s200 = scalar_select %p199, %s21, 0
        %s201 = smul.addr %s200, 10
        %s202 = smul.addr %s198, 10
        %s203 = sadd.s32 %s201, %s202
        %s204 = smul.addr %s203, 8
        %s205 = scalar_lea.vmem %s0, %s204
        %p206 = pneg %p51
        %p207 = pneg %p48
        %p208 = pneg %p72
        %p209 = pneg %p69
        %p210 = pneg %p93
        %p211 = pneg %p90
        %p212 = pneg %p121
        %p213 = pneg %p118
        %s214 = smul.u32 4, %s21
        %p215 = scmp.lt.s32.totalorder %s20, 1
        %s216 = scalar_select %p215, %s20, 1
        %p217 = scmp.lt.s32.totalorder %s214, 3
        %s218 = scalar_select %p217, %s214, 3
        %s219 = smul.addr %s216, 4
        %s220 = sadd.s32 %s218, %s219
        %s221 = smul.addr %s220, 8
        %s222 = scalar_lea.vmem %s3, %s221
        %p223 = scmp.lt.s32.totalorder %s20, 1
        %s224 = scalar_select %p223, %s20, 1
        %p225 = scmp.lt.s32.totalorder %s21, 0
        %s226 = scalar_select %p225, %s21, 0
        %s227 = smul.addr %s226, 10
        %s228 = smul.addr %s224, 10
        %s229 = sadd.s32 %s227, %s228
        %s230 = smul.addr %s229, 8
        %s231 = scalar_lea.vmem %s0, %s230
        %s232 = smul.u32 4, %s21
        %p233 = scmp.lt.s32.totalorder %s20, 1
        %s234 = scalar_select %p233, %s20, 1
        %p235 = scmp.lt.s32.totalorder %s232, 3
        %s236 = scalar_select %p235, %s232, 3
        %s237 = smul.addr %s234, 4
        %s238 = sadd.s32 %s236, %s237
        %s239 = smul.addr %s238, 8
        %s240 = scalar_lea.vmem %s3, %s239
        %s241 = smul.u32 4, %s21
        %v242 = vld [vmem:[%s231] sm:$0xff]
        %v243 = vld [vmem:[%s231 + $0x8] sm:$0xff]
        %v244 = vld [vmem:[%s231 + $0x10] sm:$0xff]
        %v245 = vld [vmem:[%s231 + $0x18] sm:$0xff]
        %v246 = vld [vmem:[%s231 + $0x20] sm:$0xff]
        %v247 = vld [vmem:[%s231 + $0x28] sm:$0xff]
        %v248 = vld [vmem:[%s231 + $0x30] sm:$0xff]
        %v249 = vld [vmem:[%s231 + $0x38] sm:$0xff]
        %v250 = vpack.c.bf16 %v243, %v242
        %v251 = vpack.c.bf16 %v245, %v244
        %v252 = vpack.c.bf16 %v247, %v246
        %v253 = vpack.c.bf16 %v249, %v248
        %vm254 = vcmask 1043456
        %vm255 = vcmask 261124
        %vm256 = vmor %vm255, %vm254
        %257 = vst.msk [vmem:[#allocation2] sm:$0xff] %vm256, %v250
        %258 = vst.msk [vmem:[#allocation2 + $0x20] sm:$0xff] %vm256, %v251
        %259 = vst.msk [vmem:[#allocation2 + $0x40] sm:$0xff] %vm256, %v252
        %260 = vst.msk [vmem:[#allocation2 + $0x60] sm:$0xff] %vm256, %v253
        %v261 = vld [vmem:[%s231] sm:$0xfe]
        %v262 = vld [vmem:[%s231 + $0x8] sm:$0xfe]
        %v263 = vld [vmem:[%s231 + $0x10] sm:$0xff]
        %v264 = vld [vmem:[%s231 + $0x18] sm:$0xff]
        %v265 = vld [vmem:[%s231 + $0x20] sm:$0xff]
        %v266 = vld [vmem:[%s231 + $0x28] sm:$0xff]
        %v267 = vld [vmem:[%s231 + $0x30] sm:$0xff]
        %v268 = vld [vmem:[%s231 + $0x38] sm:$0xff]
        %v269 = vld [vmem:[%s231 + $0x40] sm:$0x1]
        %v270 = vld [vmem:[%s231 + $0x48] sm:$0x1]
        %v271 = vpack.c.bf16 %v262, %v261
        %v272 = vpack.c.bf16 %v264, %v263
        %v273 = vpack.c.bf16 %v266, %v265
        %v274 = vpack.c.bf16 %v268, %v267
        %v275 = vpack.c.bf16 %v270, %v269
        %vm276 = vsmask.f32 3328
        %vm277 = vsmask.f32 7440
        %vm278 = vmor %vm276, %vm277
        %v280 = vshrl.u32 %v271, 16
        %v282 = vrot.slane %v280, 4
        %v283 = vshll.u32 %v271, 16
        %v285 = vrot.slane %v283, 5
        %v286 = vor.u32 %v282, %v285
        %v287 = vrot.slane %v286, 4
        %v289 = vshll.u32 %v272, 16
        %v291 = vrot.slane %v289, 5
        %v292 = vsel %vm278, %v287, %v291
        %v293 = vshrl.u32 %v272, 16
        %v295 = vrot.slane %v293, 4
        %v296 = vor.u32 %v295, %v291
        %v297 = vrot.slane %v296, 4
        %v299 = vshll.u32 %v273, 16
        %v301 = vrot.slane %v299, 5
        %v302 = vsel %vm278, %v297, %v301
        %v303 = vshrl.u32 %v273, 16
        %v305 = vrot.slane %v303, 4
        %v306 = vor.u32 %v305, %v301
        %v307 = vrot.slane %v306, 4
        %v309 = vshll.u32 %v274, 16
        %v311 = vrot.slane %v309, 5
        %v312 = vsel %vm278, %v307, %v311
        %v313 = vshrl.u32 %v274, 16
        %v315 = vrot.slane %v313, 4
        %v316 = vor.u32 %v315, %v311
        %v317 = vrot.slane %v316, 4
        %v319 = vshll.u32 %v275, 16
        %v321 = vrot.slane %v319, 5
        %v322 = vsel %vm278, %v317, %v321
        %323 = vrot.lane.b32.xlu0 %v292, 32
        %v324 = vpop.permute.xlu0 %323
        %325 = vrot.lane.b32.xlu0 %v302, 32
        %v326 = vpop.permute.xlu0 %325
        %327 = vrot.lane.b32.xlu0 %v312, 32
        %v328 = vpop.permute.xlu0 %327
        %329 = vrot.lane.b32.xlu0 %v322, 32
        %v330 = vpop.permute.xlu0 %329
        %v331 = vrot.slane %v324, 4
        %v332 = vrot.slane %v326, 4
        %v333 = vrot.slane %v328, 4
        %v334 = vrot.slane %v330, 4
        %vm335 = vcmask 261120
        %v336 = vsel %vm335, %v331, %v324
        %v337 = vsel %vm335, %v332, %v326
        %v338 = vsel %vm335, %v333, %v328
        %v339 = vsel %vm335, %v334, %v330
        %vm344 = vcmask 1043712
        %vm345 = vcmask 523268
        %vm346 = vmor %vm345, %vm344
        %347 = vst.msk [vmem:[#allocation2 + $0x4] sm:$0xff] %vm346, %v336
        %348 = vst.msk [vmem:[#allocation2 + $0x24] sm:$0xff] %vm346, %v337
        %349 = vst.msk [vmem:[#allocation2 + $0x44] sm:$0xff] %vm346, %v338
        %350 = vst.msk [vmem:[#allocation2 + $0x64] sm:$0xff] %vm346, %v339
        %v351 = vld [vmem:[%s231] sm:$0xfc]
        %v352 = vld [vmem:[%s231 + $0x8] sm:$0xfc]
        %v353 = vld [vmem:[%s231 + $0x10] sm:$0xff]
        %v354 = vld [vmem:[%s231 + $0x18] sm:$0xff]
        %v355 = vld [vmem:[%s231 + $0x20] sm:$0xff]
        %v356 = vld [vmem:[%s231 + $0x28] sm:$0xff]
        %v357 = vld [vmem:[%s231 + $0x30] sm:$0xff]
        %v358 = vld [vmem:[%s231 + $0x38] sm:$0xff]
        %v359 = vld [vmem:[%s231 + $0x40] sm:$0x3]
        %v360 = vld [vmem:[%s231 + $0x48] sm:$0x3]
        %v361 = vpack.c.bf16 %v352, %v351
        %v362 = vpack.c.bf16 %v354, %v353
        %v363 = vpack.c.bf16 %v356, %v355
        %v364 = vpack.c.bf16 %v358, %v357
        %v365 = vpack.c.bf16 %v360, %v359
        %vm371 = vcmask 1042432
        %vm372 = vcmask 1046532
        %vm373 = vmor %vm371, %vm372
        %v374 = vrot.slane %v361, 5
        %v375 = vrot.slane %v374, 4
        %v376 = vrot.slane %v362, 5
        %v377 = vsel %vm373, %v375, %v376
        %v378 = vrot.slane %v376, 4
        %v379 = vrot.slane %v363, 5
        %v380 = vsel %vm373, %v378, %v379
        %v381 = vrot.slane %v379, 4
        %v382 = vrot.slane %v364, 5
        %v383 = vsel %vm373, %v381, %v382
        %v384 = vrot.slane %v382, 4
        %v385 = vrot.slane %v365, 5
        %v386 = vsel %vm373, %v384, %v385
        %387 = vrot.lane.b32.xlu0 %v377, 64
        %v388 = vpop.permute.xlu0 %387
        %389 = vrot.lane.b32.xlu0 %v380, 64
        %v390 = vpop.permute.xlu0 %389
        %391 = vrot.lane.b32.xlu0 %v383, 64
        %v392 = vpop.permute.xlu0 %391
        %393 = vrot.lane.b32.xlu0 %v386, 64
        %v394 = vpop.permute.xlu0 %393
        %v395 = vrot.slane %v388, 4
        %v396 = vrot.slane %v390, 4
        %v397 = vrot.slane %v392, 4
        %v398 = vrot.slane %v394, 4
        %vm399 = vcmask 523264
        %v400 = vsel %vm399, %v395, %v388
        %v401 = vsel %vm399, %v396, %v390
        %v402 = vsel %vm399, %v397, %v392
        %v403 = vsel %vm399, %v398, %v394
        %vm408 = vcmask 1043968
        %vm409 = vcmask 785412
        %vm410 = vmor %vm409, %vm408
        %411 = vst.msk [vmem:[#allocation2 + $0x8] sm:$0xff] %vm410, %v400
        %412 = vst.msk [vmem:[#allocation2 + $0x28] sm:$0xff] %vm410, %v401
        %413 = vst.msk [vmem:[#allocation2 + $0x48] sm:$0xff] %vm410, %v402
        %414 = vst.msk [vmem:[#allocation2 + $0x68] sm:$0xff] %vm410, %v403
        %v415 = vld [vmem:[%s231] sm:$0xf8]
        %v416 = vld [vmem:[%s231 + $0x8] sm:$0xf8]
        %v417 = vld [vmem:[%s231 + $0x10] sm:$0xff]
        %v418 = vld [vmem:[%s231 + $0x18] sm:$0xff]
        %v419 = vld [vmem:[%s231 + $0x20] sm:$0xff]
        %v420 = vld [vmem:[%s231 + $0x28] sm:$0xff]
        %v421 = vld [vmem:[%s231 + $0x30] sm:$0xff]
        %v422 = vld [vmem:[%s231 + $0x38] sm:$0xff]
        %v423 = vld [vmem:[%s231 + $0x40] sm:$0x7]
        %v424 = vld [vmem:[%s231 + $0x48] sm:$0x7]
        %v425 = vpack.c.bf16 %v416, %v415
        %v426 = vpack.c.bf16 %v418, %v417
        %v427 = vpack.c.bf16 %v420, %v419
        %v428 = vpack.c.bf16 %v422, %v421
        %v429 = vpack.c.bf16 %v424, %v423
        %vm430 = vsmask.f32 2304
        %vm431 = vsmask.f32 6416
        %vm432 = vmor %vm430, %vm431
        %v434 = vshrl.u32 %v425, 16
        %v436 = vrot.slane %v434, 5
        %v437 = vshll.u32 %v425, 16
        %v439 = vrot.slane %v437, 6
        %v440 = vor.u32 %v436, %v439
        %v441 = vrot.slane %v440, 4
        %v443 = vshrl.u32 %v426, 16
        %v445 = vrot.slane %v443, 5
        %v446 = vshll.u32 %v426, 16
        %v448 = vrot.slane %v446, 6
        %v449 = vor.u32 %v445, %v448
        %v450 = vsel %vm432, %v441, %v449
        %v451 = vrot.slane %v449, 4
        %v453 = vshrl.u32 %v427, 16
        %v455 = vrot.slane %v453, 5
        %v456 = vshll.u32 %v427, 16
        %v458 = vrot.slane %v456, 6
        %v459 = vor.u32 %v455, %v458
        %v460 = vsel %vm432, %v451, %v459
        %v461 = vrot.slane %v459, 4
        %v463 = vshrl.u32 %v428, 16
        %v465 = vrot.slane %v463, 5
        %v466 = vshll.u32 %v428, 16
        %v468 = vrot.slane %v466, 6
        %v469 = vor.u32 %v465, %v468
        %v470 = vsel %vm432, %v461, %v469
        %v471 = vrot.slane %v469, 4
        %v473 = vshrl.u32 %v429, 16
        %v475 = vrot.slane %v473, 5
        %v476 = vshll.u32 %v429, 16
        %v478 = vrot.slane %v476, 6
        %v479 = vor.u32 %v475, %v478
        %v480 = vsel %vm432, %v471, %v479
        %481 = vrot.lane.b32.xlu0 %v450, 96
        %v482 = vpop.permute.xlu0 %481
        %483 = vrot.lane.b32.xlu0 %v460, 96
        %v484 = vpop.permute.xlu0 %483
        %485 = vrot.lane.b32.xlu0 %v470, 96
        %v486 = vpop.permute.xlu0 %485
        %487 = vrot.lane.b32.xlu0 %v480, 96
        %v488 = vpop.permute.xlu0 %487
        %v489 = vrot.slane %v482, 4
        %v490 = vrot.slane %v484, 4
        %v491 = vrot.slane %v486, 4
        %v492 = vrot.slane %v488, 4
        %vm493 = vcmask 785408
        %v494 = vsel %vm493, %v489, %v482
        %v495 = vsel %vm493, %v490, %v484
        %v496 = vsel %vm493, %v491, %v486
        %v497 = vsel %vm493, %v492, %v488
        %vm502 = vcmask 1044224
        %vm503 = vcmask 1047556
        %vm504 = vmor %vm503, %vm502
        %505 = vst.msk [vmem:[#allocation2 + $0xc] sm:$0xff] %vm504, %v494
        %506 = vst.msk [vmem:[#allocation2 + $0x2c] sm:$0xff] %vm504, %v495
        %507 = vst.msk [vmem:[#allocation2 + $0x4c] sm:$0xff] %vm504, %v496
        %508 = vst.msk [vmem:[#allocation2 + $0x6c] sm:$0xff] %vm504, %v497
        %v509 = vld [vmem:[%s231] sm:$0xf0]
        %v510 = vld [vmem:[%s231 + $0x8] sm:$0xf0]
        %v511 = vld [vmem:[%s231 + $0x10] sm:$0xff]
        %v512 = vld [vmem:[%s231 + $0x18] sm:$0xff]
        %v513 = vld [vmem:[%s231 + $0x20] sm:$0xff]
        %v514 = vld [vmem:[%s231 + $0x28] sm:$0xff]
        %v515 = vld [vmem:[%s231 + $0x30] sm:$0xff]
        %v516 = vld [vmem:[%s231 + $0x38] sm:$0xff]
        %v517 = vld [vmem:[%s231 + $0x40] sm:$0xf]
        %v518 = vld [vmem:[%s231 + $0x48] sm:$0xf]
        %v519 = vpack.c.bf16 %v510, %v509
        %v520 = vpack.c.bf16 %v512, %v511
        %v521 = vpack.c.bf16 %v514, %v513
        %v522 = vpack.c.bf16 %v516, %v515
        %v523 = vpack.c.bf16 %v518, %v517
        %vm529 = vcmask 1041408
        %vm530 = vcmask 1045508
        %vm531 = vmor %vm529, %vm530
        %v532 = vrot.slane %v519, 6
        %v533 = vrot.slane %v532, 4
        %v534 = vrot.slane %v520, 6
        %v535 = vsel %vm531, %v533, %v534
        %v536 = vrot.slane %v534, 4
        %v537 = vrot.slane %v521, 6
        %v538 = vsel %vm531, %v536, %v537
        %v539 = vrot.slane %v537, 4
        %v540 = vrot.slane %v522, 6
        %v541 = vsel %vm531, %v539, %v540
        %v542 = vrot.slane %v540, 4
        %v543 = vrot.slane %v523, 6
        %v544 = vsel %vm531, %v542, %v543
        %549 = vst.msk [vmem:[#allocation2 + $0x14] sm:$0xff] %vm256, %v535
        %550 = vst.msk [vmem:[#allocation2 + $0x34] sm:$0xff] %vm256, %v538
        %551 = vst.msk [vmem:[#allocation2 + $0x54] sm:$0xff] %vm256, %v541
        %552 = vst.msk [vmem:[#allocation2 + $0x74] sm:$0xff] %vm256, %v544
        %v553 = vld [vmem:[%s231] sm:$0xe0]
        %v554 = vld [vmem:[%s231 + $0x8] sm:$0xe0]
        %v555 = vld [vmem:[%s231 + $0x10] sm:$0xff]
        %v556 = vld [vmem:[%s231 + $0x18] sm:$0xff]
        %v557 = vld [vmem:[%s231 + $0x20] sm:$0xff]
        %v558 = vld [vmem:[%s231 + $0x28] sm:$0xff]
        %v559 = vld [vmem:[%s231 + $0x30] sm:$0xff]
        %v560 = vld [vmem:[%s231 + $0x38] sm:$0xff]
        %v561 = vld [vmem:[%s231 + $0x40] sm:$0x1f]
        %v562 = vld [vmem:[%s231 + $0x48] sm:$0x1f]
        %v563 = vpack.c.bf16 %v554, %v553
        %v564 = vpack.c.bf16 %v556, %v555
        %v565 = vpack.c.bf16 %v558, %v557
        %v566 = vpack.c.bf16 %v560, %v559
        %v567 = vpack.c.bf16 %v562, %v561
        %vm568 = vsmask.f32 1280
        %vm569 = vsmask.f32 5392
        %vm570 = vmor %vm568, %vm569
        %v572 = vshrl.u32 %v563, 16
        %v574 = vrot.slane %v572, 6
        %v575 = vshll.u32 %v563, 16
        %v577 = vrot.slane %v575, 7
        %v578 = vor.u32 %v574, %v577
        %v579 = vrot.slane %v578, 4
        %v581 = vshrl.u32 %v564, 16
        %v583 = vrot.slane %v581, 6
        %v584 = vshll.u32 %v564, 16
        %v586 = vrot.slane %v584, 7
        %v587 = vor.u32 %v583, %v586
        %v588 = vsel %vm570, %v579, %v587
        %v589 = vrot.slane %v587, 4
        %v591 = vshrl.u32 %v565, 16
        %v593 = vrot.slane %v591, 6
        %v594 = vshll.u32 %v565, 16
        %v596 = vrot.slane %v594, 7
        %v597 = vor.u32 %v593, %v596
        %v598 = vsel %vm570, %v589, %v597
        %v599 = vrot.slane %v597, 4
        %v601 = vshrl.u32 %v566, 16
        %v603 = vrot.slane %v601, 6
        %v604 = vshll.u32 %v566, 16
        %v606 = vrot.slane %v604, 7
        %v607 = vor.u32 %v603, %v606
        %v608 = vsel %vm570, %v599, %v607
        %v609 = vrot.slane %v607, 4
        %v611 = vshrl.u32 %v567, 16
        %v613 = vrot.slane %v611, 6
        %v614 = vshll.u32 %v567, 16
        %v616 = vrot.slane %v614, 7
        %v617 = vor.u32 %v613, %v616
        %v618 = vsel %vm570, %v609, %v617
        %619 = vrot.lane.b32.xlu0 %v588, 32
        %v620 = vpop.permute.xlu0 %619
        %621 = vrot.lane.b32.xlu0 %v598, 32
        %v622 = vpop.permute.xlu0 %621
        %623 = vrot.lane.b32.xlu0 %v608, 32
        %v624 = vpop.permute.xlu0 %623
        %625 = vrot.lane.b32.xlu0 %v618, 32
        %v626 = vpop.permute.xlu0 %625
        %v627 = vrot.slane %v620, 4
        %v628 = vrot.slane %v622, 4
        %v629 = vrot.slane %v624, 4
        %v630 = vrot.slane %v626, 4
        %v631 = vsel %vm335, %v627, %v620
        %v632 = vsel %vm335, %v628, %v622
        %v633 = vsel %vm335, %v629, %v624
        %v634 = vsel %vm335, %v630, %v626
        %639 = vst.msk [vmem:[#allocation2 + $0x18] sm:$0xff] %vm346, %v631
        %640 = vst.msk [vmem:[#allocation2 + $0x38] sm:$0xff] %vm346, %v632
        %641 = vst.msk [vmem:[#allocation2 + $0x58] sm:$0xff] %vm346, %v633
        %642 = vst.msk [vmem:[#allocation2 + $0x78] sm:$0xff] %vm346, %v634
        %v643 = vld [vmem:[%s231] sm:$0xc0]
        %v644 = vld [vmem:[%s231 + $0x10] sm:$0xff]
        %v645 = vld [vmem:[%s231 + $0x20] sm:$0xff]
        %v646 = vld [vmem:[%s231 + $0x30] sm:$0xff]
        %v647 = vld [vmem:[%s231 + $0x40] sm:$0x3f]
        %v648 = vpack.c.bf16 %v643, %v643
        %v649 = vpack.c.bf16 %v644, %v644
        %v650 = vpack.c.bf16 %v645, %v645
        %v651 = vpack.c.bf16 %v646, %v646
        %v652 = vpack.c.bf16 %v647, %v647
        %vm658 = vcmask 1040384
        %vm659 = vcmask 1044484
        %vm660 = vmor %vm658, %vm659
        %v661 = vrot.slane %v648, 7
        %v662 = vrot.slane %v661, 4
        %v663 = vrot.slane %v649, 7
        %v664 = vsel %vm660, %v662, %v663
        %v665 = vrot.slane %v663, 4
        %v666 = vrot.slane %v650, 7
        %v667 = vsel %vm660, %v665, %v666
        %v668 = vrot.slane %v666, 4
        %v669 = vrot.slane %v651, 7
        %v670 = vsel %vm660, %v668, %v669
        %v671 = vrot.slane %v669, 4
        %v672 = vrot.slane %v652, 7
        %v673 = vsel %vm660, %v671, %v672
        %674 = vrot.lane.b32.xlu0 %v664, 64
        %v675 = vpop.permute.xlu0 %674
        %676 = vrot.lane.b32.xlu0 %v667, 64
        %v677 = vpop.permute.xlu0 %676
        %678 = vrot.lane.b32.xlu0 %v670, 64
        %v679 = vpop.permute.xlu0 %678
        %680 = vrot.lane.b32.xlu0 %v673, 64
        %v681 = vpop.permute.xlu0 %680
        %686 = vst.msk [vmem:[#allocation2 + $0x1c] sm:$0xf] %vm408, %v675
        %687 = vst.msk [vmem:[#allocation2 + $0x3c] sm:$0xf] %vm408, %v677
        %688 = vst.msk [vmem:[#allocation2 + $0x5c] sm:$0xf] %vm408, %v679
        %689 = vst.msk [vmem:[#allocation2 + $0x7c] sm:$0xf] %vm408, %v681
        %v690 = vld [vmem:[#allocation2] sm:$0xff]
        %v691 = vld [vmem:[#allocation2 + $0x8] sm:$0xff]
        %v692 = vld [vmem:[#allocation2 + $0x10] sm:$0xff]
        %v693 = vld [vmem:[#allocation2 + $0x18] sm:$0xff]
        %v694 = vld [vmem:[#allocation2 + $0x20] sm:$0xff]
        %v695 = vld [vmem:[#allocation2 + $0x28] sm:$0xff]
        %v696 = vld [vmem:[#allocation2 + $0x30] sm:$0xff]
        %v697 = vld [vmem:[#allocation2 + $0x38] sm:$0xff]
        %v698 = vld [vmem:[#allocation2 + $0x40] sm:$0xff]
        %v699 = vld [vmem:[#allocation2 + $0x48] sm:$0xff]
        %v700 = vld [vmem:[#allocation2 + $0x50] sm:$0xff]
        %v701 = vld [vmem:[#allocation2 + $0x58] sm:$0xff]
        %v702 = vld [vmem:[#allocation2 + $0x60] sm:$0xff]
        %v703 = vld [vmem:[#allocation2 + $0x68] sm:$0xff]
        %v704 = vld [vmem:[#allocation2 + $0x70] sm:$0xff]
        %v705 = vld [vmem:[#allocation2 + $0x78] sm:$0xff]
        %v706 = vld [vmem:[#allocation3] sm:$0xff]
        %v707 = vld [vmem:[#allocation3 + $0x8] sm:$0xff]
        %v708 = vld [vmem:[#allocation3 + $0x10] sm:$0xff]
        %v709 = vld [vmem:[#allocation3 + $0x18] sm:$0xff]
        %v710 = vld [vmem:[#allocation3 + $0x20] sm:$0xff]
        %v711 = vld [vmem:[#allocation3 + $0x28] sm:$0xff]
        %v712 = vld [vmem:[#allocation3 + $0x30] sm:$0xff]
        %v713 = vld [vmem:[#allocation3 + $0x38] sm:$0xff]
        %v714 = vld [vmem:[#allocation3 + $0x40] sm:$0xff]
        %v715 = vld [vmem:[#allocation3 + $0x48] sm:$0xff]
        %v716 = vld [vmem:[#allocation3 + $0x50] sm:$0xff]
        %v717 = vld [vmem:[#allocation3 + $0x58] sm:$0xff]
        %v718 = vld [vmem:[#allocation3 + $0x60] sm:$0xff]
        %v719 = vld [vmem:[#allocation3 + $0x68] sm:$0xff]
        %v720 = vld [vmem:[#allocation3 + $0x70] sm:$0xff]
        %v721 = vld [vmem:[#allocation3 + $0x78] sm:$0xff]
        %v722 = vld [vmem:[#allocation3 + $0x80] sm:$0xff]
        %v723 = vld [vmem:[#allocation3 + $0x88] sm:$0xff]
        %v724 = vld [vmem:[#allocation3 + $0x90] sm:$0xff]
        %v725 = vld [vmem:[#allocation3 + $0x98] sm:$0xff]
        %v726 = vld [vmem:[#allocation3 + $0xa0] sm:$0xff]
        %v727 = vld [vmem:[#allocation3 + $0xa8] sm:$0xff]
        %v728 = vld [vmem:[#allocation3 + $0xb0] sm:$0xff]
        %v729 = vld [vmem:[#allocation3 + $0xb8] sm:$0xff]
        %v730 = vld [vmem:[#allocation3 + $0xc0] sm:$0xff]
        %v731 = vld [vmem:[#allocation3 + $0xc8] sm:$0xff]
        %v732 = vld [vmem:[#allocation3 + $0xd0] sm:$0xff]
        %v733 = vld [vmem:[#allocation3 + $0xd8] sm:$0xff]
        %v734 = vld [vmem:[#allocation3 + $0xe0] sm:$0xff]
        %v735 = vld [vmem:[#allocation3 + $0xe8] sm:$0xff]
        %v736 = vld [vmem:[#allocation3 + $0xf0] sm:$0xff]
        %v737 = vld [vmem:[#allocation3 + $0xf8] sm:$0xff]
        %v738 = vld [vmem:[#allocation3 + $0x100] sm:$0xff]
        %v739 = vld [vmem:[#allocation3 + $0x108] sm:$0xff]
        %v740 = vld [vmem:[#allocation3 + $0x110] sm:$0xff]
        %v741 = vld [vmem:[#allocation3 + $0x118] sm:$0xff]
        %v742 = vld [vmem:[#allocation3 + $0x120] sm:$0xff]
        %v743 = vld [vmem:[#allocation3 + $0x128] sm:$0xff]
        %v744 = vld [vmem:[#allocation3 + $0x130] sm:$0xff]
        %v745 = vld [vmem:[#allocation3 + $0x138] sm:$0xff]
        %v746 = vld [vmem:[#allocation3 + $0x140] sm:$0xff]
        %v747 = vld [vmem:[#allocation3 + $0x148] sm:$0xff]
        %v748 = vld [vmem:[#allocation3 + $0x150] sm:$0xff]
        %v749 = vld [vmem:[#allocation3 + $0x158] sm:$0xff]
        %v750 = vld [vmem:[#allocation3 + $0x160] sm:$0xff]
        %v751 = vld [vmem:[#allocation3 + $0x168] sm:$0xff]
        %v752 = vld [vmem:[#allocation3 + $0x170] sm:$0xff]
        %v753 = vld [vmem:[#allocation3 + $0x178] sm:$0xff]
        %v754 = vld [vmem:[#allocation3 + $0x180] sm:$0xff]
        %v755 = vld [vmem:[#allocation3 + $0x188] sm:$0xff]
        %v756 = vld [vmem:[#allocation3 + $0x190] sm:$0xff]
        %v757 = vld [vmem:[#allocation3 + $0x198] sm:$0xff]
        %v758 = vld [vmem:[#allocation3 + $0x1a0] sm:$0xff]
        %v759 = vld [vmem:[#allocation3 + $0x1a8] sm:$0xff]
        %v760 = vld [vmem:[#allocation3 + $0x1b0] sm:$0xff]
        %v761 = vld [vmem:[#allocation3 + $0x1b8] sm:$0xff]
        %v762 = vld [vmem:[#allocation3 + $0x1c0] sm:$0xff]
        %v763 = vld [vmem:[#allocation3 + $0x1c8] sm:$0xff]
        %v764 = vld [vmem:[#allocation3 + $0x1d0] sm:$0xff]
        %v765 = vld [vmem:[#allocation3 + $0x1d8] sm:$0xff]
        %v766 = vld [vmem:[#allocation3 + $0x1e0] sm:$0xff]
        %v767 = vld [vmem:[#allocation3 + $0x1e8] sm:$0xff]
        %v768 = vld [vmem:[#allocation3 + $0x1f0] sm:$0xff]
        %v769 = vld [vmem:[#allocation3 + $0x1f8] sm:$0xff]
        %v770 = vld [vmem:[#allocation3 + $0x200] sm:$0xff]
        %v771 = vld [vmem:[#allocation3 + $0x208] sm:$0xff]
        %v772 = vld [vmem:[#allocation3 + $0x210] sm:$0xff]
        %v773 = vld [vmem:[#allocation3 + $0x218] sm:$0xff]
        %v774 = vld [vmem:[#allocation3 + $0x220] sm:$0xff]
        %v775 = vld [vmem:[#allocation3 + $0x228] sm:$0xff]
        %v776 = vld [vmem:[#allocation3 + $0x230] sm:$0xff]
        %v777 = vld [vmem:[#allocation3 + $0x238] sm:$0xff]
        %v778 = vld [vmem:[#allocation3 + $0x240] sm:$0xff]
        %v779 = vld [vmem:[#allocation3 + $0x248] sm:$0xff]
        %v780 = vld [vmem:[#allocation3 + $0x250] sm:$0xff]
        %v781 = vld [vmem:[#allocation3 + $0x258] sm:$0xff]
        %v782 = vld [vmem:[#allocation3 + $0x260] sm:$0xff]
        %v783 = vld [vmem:[#allocation3 + $0x268] sm:$0xff]
        %v784 = vld [vmem:[#allocation3 + $0x270] sm:$0xff]
        %v785 = vld [vmem:[#allocation3 + $0x278] sm:$0xff]
        %v786 = vld [vmem:[#allocation3 + $0x280] sm:$0xff]
        %v787 = vld [vmem:[#allocation3 + $0x288] sm:$0xff]
        %v788 = vld [vmem:[#allocation3 + $0x290] sm:$0xff]
        %v789 = vld [vmem:[#allocation3 + $0x298] sm:$0xff]
        %v790 = vld [vmem:[#allocation3 + $0x2a0] sm:$0xff]
        %v791 = vld [vmem:[#allocation3 + $0x2a8] sm:$0xff]
        %v792 = vld [vmem:[#allocation3 + $0x2b0] sm:$0xff]
        %v793 = vld [vmem:[#allocation3 + $0x2b8] sm:$0xff]
        %v794 = vld [vmem:[#allocation3 + $0x2c0] sm:$0xff]
        %v795 = vld [vmem:[#allocation3 + $0x2c8] sm:$0xff]
        %v796 = vld [vmem:[#allocation3 + $0x2d0] sm:$0xff]
        %v797 = vld [vmem:[#allocation3 + $0x2d8] sm:$0xff]
        %v798 = vld [vmem:[#allocation3 + $0x2e0] sm:$0xff]
        %v799 = vld [vmem:[#allocation3 + $0x2e8] sm:$0xff]
        %v800 = vld [vmem:[#allocation3 + $0x2f0] sm:$0xff]
        %v801 = vld [vmem:[#allocation3 + $0x2f8] sm:$0xff]
        %v802 = vld [vmem:[#allocation3 + $0x300] sm:$0xff]
        %v803 = vld [vmem:[#allocation3 + $0x308] sm:$0xff]
        %v804 = vld [vmem:[#allocation3 + $0x310] sm:$0xff]
        %v805 = vld [vmem:[#allocation3 + $0x318] sm:$0xff]
        %v806 = vld [vmem:[#allocation3 + $0x320] sm:$0xff]
        %v807 = vld [vmem:[#allocation3 + $0x328] sm:$0xff]
        %v808 = vld [vmem:[#allocation3 + $0x330] sm:$0xff]
        %v809 = vld [vmem:[#allocation3 + $0x338] sm:$0xff]
        %v810 = vld [vmem:[#allocation3 + $0x340] sm:$0xff]
        %v811 = vld [vmem:[#allocation3 + $0x348] sm:$0xff]
        %v812 = vld [vmem:[#allocation3 + $0x350] sm:$0xff]
        %v813 = vld [vmem:[#allocation3 + $0x358] sm:$0xff]
        %v814 = vld [vmem:[#allocation3 + $0x360] sm:$0xff]
        %v815 = vld [vmem:[#allocation3 + $0x368] sm:$0xff]
        %v816 = vld [vmem:[#allocation3 + $0x370] sm:$0xff]
        %v817 = vld [vmem:[#allocation3 + $0x378] sm:$0xff]
        %v818 = vld [vmem:[#allocation3 + $0x380] sm:$0xff]
        %v819 = vld [vmem:[#allocation3 + $0x388] sm:$0xff]
        %v820 = vld [vmem:[#allocation3 + $0x390] sm:$0xff]
        %v821 = vld [vmem:[#allocation3 + $0x398] sm:$0xff]
        %v822 = vld [vmem:[#allocation3 + $0x3a0] sm:$0xff]
        %v823 = vld [vmem:[#allocation3 + $0x3a8] sm:$0xff]
        %v824 = vld [vmem:[#allocation3 + $0x3b0] sm:$0xff]
        %v825 = vld [vmem:[#allocation3 + $0x3b8] sm:$0xff]
        %v826 = vld [vmem:[#allocation3 + $0x3c0] sm:$0xff]
        %v827 = vld [vmem:[#allocation3 + $0x3c8] sm:$0xff]
        %v828 = vld [vmem:[#allocation3 + $0x3d0] sm:$0xff]
        %v829 = vld [vmem:[#allocation3 + $0x3d8] sm:$0xff]
        %v830 = vld [vmem:[#allocation3 + $0x3e0] sm:$0xff]
        %v831 = vld [vmem:[#allocation3 + $0x3e8] sm:$0xff]
        %v832 = vld [vmem:[#allocation3 + $0x3f0] sm:$0xff]
        %v833 = vld [vmem:[#allocation3 + $0x3f8] sm:$0xff]
        %v834 = vld [vmem:[#allocation3 + $0x400] sm:$0xff]
        %v835 = vld [vmem:[#allocation3 + $0x408] sm:$0xff]
        %v836 = vld [vmem:[#allocation3 + $0x410] sm:$0xff]
        %v837 = vld [vmem:[#allocation3 + $0x418] sm:$0xff]
        %v838 = vld [vmem:[#allocation3 + $0x420] sm:$0xff]
        %v839 = vld [vmem:[#allocation3 + $0x428] sm:$0xff]
        %v840 = vld [vmem:[#allocation3 + $0x430] sm:$0xff]
        %v841 = vld [vmem:[#allocation3 + $0x438] sm:$0xff]
        %v842 = vld [vmem:[#allocation3 + $0x440] sm:$0xff]
        %v843 = vld [vmem:[#allocation3 + $0x448] sm:$0xff]
        %v844 = vld [vmem:[#allocation3 + $0x450] sm:$0xff]
        %v845 = vld [vmem:[#allocation3 + $0x458] sm:$0xff]
        %v846 = vld [vmem:[#allocation3 + $0x460] sm:$0xff]
        %v847 = vld [vmem:[#allocation3 + $0x468] sm:$0xff]
        %v848 = vld [vmem:[#allocation3 + $0x470] sm:$0xff]
        %v849 = vld [vmem:[#allocation3 + $0x478] sm:$0xff]
        %v850 = vld [vmem:[#allocation3 + $0x480] sm:$0xff]
        %v851 = vld [vmem:[#allocation3 + $0x488] sm:$0xff]
        %v852 = vld [vmem:[#allocation3 + $0x490] sm:$0xff]
        %v853 = vld [vmem:[#allocation3 + $0x498] sm:$0xff]
        %v854 = vld [vmem:[#allocation3 + $0x4a0] sm:$0xff]
        %v855 = vld [vmem:[#allocation3 + $0x4a8] sm:$0xff]
        %v856 = vld [vmem:[#allocation3 + $0x4b0] sm:$0xff]
        %v857 = vld [vmem:[#allocation3 + $0x4b8] sm:$0xff]
        %v858 = vld [vmem:[#allocation3 + $0x4c0] sm:$0xff]
        %v859 = vld [vmem:[#allocation3 + $0x4c8] sm:$0xff]
        %v860 = vld [vmem:[#allocation3 + $0x4d0] sm:$0xff]
        %v861 = vld [vmem:[#allocation3 + $0x4d8] sm:$0xff]
        %v862 = vld [vmem:[#allocation3 + $0x4e0] sm:$0xff]
        %v863 = vld [vmem:[#allocation3 + $0x4e8] sm:$0xff]
        %v864 = vld [vmem:[#allocation3 + $0x4f0] sm:$0xff]
        %v865 = vld [vmem:[#allocation3 + $0x4f8] sm:$0xff]
        %v866 = vld [vmem:[#allocation3 + $0x500] sm:$0xff]
        %v867 = vld [vmem:[#allocation3 + $0x508] sm:$0xff]
        %v868 = vld [vmem:[#allocation3 + $0x510] sm:$0xff]
        %v869 = vld [vmem:[#allocation3 + $0x518] sm:$0xff]
        %v870 = vld [vmem:[#allocation3 + $0x520] sm:$0xff]
        %v871 = vld [vmem:[#allocation3 + $0x528] sm:$0xff]
        %v872 = vld [vmem:[#allocation3 + $0x530] sm:$0xff]
        %v873 = vld [vmem:[#allocation3 + $0x538] sm:$0xff]
        %v874 = vld [vmem:[#allocation3 + $0x540] sm:$0xff]
        %v875 = vld [vmem:[#allocation3 + $0x548] sm:$0xff]
        %v876 = vld [vmem:[#allocation3 + $0x550] sm:$0xff]
        %v877 = vld [vmem:[#allocation3 + $0x558] sm:$0xff]
        %v878 = vld [vmem:[#allocation3 + $0x560] sm:$0xff]
        %v879 = vld [vmem:[#allocation3 + $0x568] sm:$0xff]
        %v880 = vld [vmem:[#allocation3 + $0x570] sm:$0xff]
        %v881 = vld [vmem:[#allocation3 + $0x578] sm:$0xff]
        %v882 = vld [vmem:[#allocation3 + $0x580] sm:$0xff]
        %v883 = vld [vmem:[#allocation3 + $0x588] sm:$0xff]
        %v884 = vld [vmem:[#allocation3 + $0x590] sm:$0xff]
        %v885 = vld [vmem:[#allocation3 + $0x598] sm:$0xff]
        %v886 = vld [vmem:[#allocation3 + $0x5a0] sm:$0xff]
        %v887 = vld [vmem:[#allocation3 + $0x5a8] sm:$0xff]
        %v888 = vld [vmem:[#allocation3 + $0x5b0] sm:$0xff]
        %v889 = vld [vmem:[#allocation3 + $0x5b8] sm:$0xff]
        %v890 = vld [vmem:[#allocation3 + $0x5c0] sm:$0xff]
        %v891 = vld [vmem:[#allocation3 + $0x5c8] sm:$0xff]
        %v892 = vld [vmem:[#allocation3 + $0x5d0] sm:$0xff]
        %v893 = vld [vmem:[#allocation3 + $0x5d8] sm:$0xff]
        %v894 = vld [vmem:[#allocation3 + $0x5e0] sm:$0xff]
        %v895 = vld [vmem:[#allocation3 + $0x5e8] sm:$0xff]
        %v896 = vld [vmem:[#allocation3 + $0x5f0] sm:$0xff]
        %v897 = vld [vmem:[#allocation3 + $0x5f8] sm:$0xff]
        %v898 = vld [vmem:[#allocation3 + $0x600] sm:$0xff]
        %v899 = vld [vmem:[#allocation3 + $0x608] sm:$0xff]
        %v900 = vld [vmem:[#allocation3 + $0x610] sm:$0xff]
        %v901 = vld [vmem:[#allocation3 + $0x618] sm:$0xff]
        %v902 = vld [vmem:[#allocation3 + $0x620] sm:$0xff]
        %v903 = vld [vmem:[#allocation3 + $0x628] sm:$0xff]
        %v904 = vld [vmem:[#allocation3 + $0x630] sm:$0xff]
        %v905 = vld [vmem:[#allocation3 + $0x638] sm:$0xff]
        %v906 = vld [vmem:[#allocation3 + $0x640] sm:$0xff]
        %v907 = vld [vmem:[#allocation3 + $0x648] sm:$0xff]
        %v908 = vld [vmem:[#allocation3 + $0x650] sm:$0xff]
        %v909 = vld [vmem:[#allocation3 + $0x658] sm:$0xff]
        %v910 = vld [vmem:[#allocation3 + $0x660] sm:$0xff]
        %v911 = vld [vmem:[#allocation3 + $0x668] sm:$0xff]
        %v912 = vld [vmem:[#allocation3 + $0x670] sm:$0xff]
        %v913 = vld [vmem:[#allocation3 + $0x678] sm:$0xff]
        %v914 = vld [vmem:[#allocation3 + $0x680] sm:$0xff]
        %v915 = vld [vmem:[#allocation3 + $0x688] sm:$0xff]
        %v916 = vld [vmem:[#allocation3 + $0x690] sm:$0xff]
        %v917 = vld [vmem:[#allocation3 + $0x698] sm:$0xff]
        %v918 = vld [vmem:[#allocation3 + $0x6a0] sm:$0xff]
        %v919 = vld [vmem:[#allocation3 + $0x6a8] sm:$0xff]
        %v920 = vld [vmem:[#allocation3 + $0x6b0] sm:$0xff]
        %v921 = vld [vmem:[#allocation3 + $0x6b8] sm:$0xff]
        %v922 = vld [vmem:[#allocation3 + $0x6c0] sm:$0xff]
        %v923 = vld [vmem:[#allocation3 + $0x6c8] sm:$0xff]
        %v924 = vld [vmem:[#allocation3 + $0x6d0] sm:$0xff]
        %v925 = vld [vmem:[#allocation3 + $0x6d8] sm:$0xff]
        %v926 = vld [vmem:[#allocation3 + $0x6e0] sm:$0xff]
        %v927 = vld [vmem:[#allocation3 + $0x6e8] sm:$0xff]
        %v928 = vld [vmem:[#allocation3 + $0x6f0] sm:$0xff]
        %v929 = vld [vmem:[#allocation3 + $0x6f8] sm:$0xff]
        %v930 = vld [vmem:[#allocation3 + $0x700] sm:$0xff]
        %v931 = vld [vmem:[#allocation3 + $0x708] sm:$0xff]
        %v932 = vld [vmem:[#allocation3 + $0x710] sm:$0xff]
        %v933 = vld [vmem:[#allocation3 + $0x718] sm:$0xff]
        %v934 = vld [vmem:[#allocation3 + $0x720] sm:$0xff]
        %v935 = vld [vmem:[#allocation3 + $0x728] sm:$0xff]
        %v936 = vld [vmem:[#allocation3 + $0x730] sm:$0xff]
        %v937 = vld [vmem:[#allocation3 + $0x738] sm:$0xff]
        %v938 = vld [vmem:[#allocation3 + $0x740] sm:$0xff]
        %v939 = vld [vmem:[#allocation3 + $0x748] sm:$0xff]
        %v940 = vld [vmem:[#allocation3 + $0x750] sm:$0xff]
        %v941 = vld [vmem:[#allocation3 + $0x758] sm:$0xff]
        %v942 = vld [vmem:[#allocation3 + $0x760] sm:$0xff]
        %v943 = vld [vmem:[#allocation3 + $0x768] sm:$0xff]
        %v944 = vld [vmem:[#allocation3 + $0x770] sm:$0xff]
        %v945 = vld [vmem:[#allocation3 + $0x778] sm:$0xff]
        %v946 = vld [vmem:[#allocation3 + $0x780] sm:$0xff]
        %v947 = vld [vmem:[#allocation3 + $0x788] sm:$0xff]
        %v948 = vld [vmem:[#allocation3 + $0x790] sm:$0xff]
        %v949 = vld [vmem:[#allocation3 + $0x798] sm:$0xff]
        %v950 = vld [vmem:[#allocation3 + $0x7a0] sm:$0xff]
        %v951 = vld [vmem:[#allocation3 + $0x7a8] sm:$0xff]
        %v952 = vld [vmem:[#allocation3 + $0x7b0] sm:$0xff]
        %v953 = vld [vmem:[#allocation3 + $0x7b8] sm:$0xff]
        %v954 = vld [vmem:[#allocation3 + $0x7c0] sm:$0xff]
        %v955 = vld [vmem:[#allocation3 + $0x7c8] sm:$0xff]
        %v956 = vld [vmem:[#allocation3 + $0x7d0] sm:$0xff]
        %v957 = vld [vmem:[#allocation3 + $0x7d8] sm:$0xff]
        %v958 = vld [vmem:[#allocation3 + $0x7e0] sm:$0xff]
        %v959 = vld [vmem:[#allocation3 + $0x7e8] sm:$0xff]
        %v960 = vld [vmem:[#allocation3 + $0x7f0] sm:$0xff]
        %v961 = vld [vmem:[#allocation3 + $0x7f8] sm:$0xff]
        %v962 = vld [vmem:[#allocation3 + $0x800] sm:$0xff]
        %v963 = vld [vmem:[#allocation3 + $0x808] sm:$0xff]
        %v964 = vld [vmem:[#allocation3 + $0x810] sm:$0xff]
        %v965 = vld [vmem:[#allocation3 + $0x818] sm:$0xff]
        %v966 = vld [vmem:[#allocation3 + $0x820] sm:$0xff]
        %v967 = vld [vmem:[#allocation3 + $0x828] sm:$0xff]
        %v968 = vld [vmem:[#allocation3 + $0x830] sm:$0xff]
        %v969 = vld [vmem:[#allocation3 + $0x838] sm:$0xff]
        %v970 = vld [vmem:[#allocation3 + $0x840] sm:$0xff]
        %v971 = vld [vmem:[#allocation3 + $0x848] sm:$0xff]
        %v972 = vld [vmem:[#allocation3 + $0x850] sm:$0xff]
        %v973 = vld [vmem:[#allocation3 + $0x858] sm:$0xff]
        %v974 = vld [vmem:[#allocation3 + $0x860] sm:$0xff]
        %v975 = vld [vmem:[#allocation3 + $0x868] sm:$0xff]
        %v976 = vld [vmem:[#allocation3 + $0x870] sm:$0xff]
        %v977 = vld [vmem:[#allocation3 + $0x878] sm:$0xff]
        %v978 = vld [vmem:[#allocation3 + $0x880] sm:$0xff]
        %v979 = vld [vmem:[#allocation3 + $0x888] sm:$0xff]
        %v980 = vld [vmem:[#allocation3 + $0x890] sm:$0xff]
        %v981 = vld [vmem:[#allocation3 + $0x898] sm:$0xff]
        %v982 = vld [vmem:[#allocation3 + $0x8a0] sm:$0xff]
        %v983 = vld [vmem:[#allocation3 + $0x8a8] sm:$0xff]
        %v984 = vld [vmem:[#allocation3 + $0x8b0] sm:$0xff]
        %v985 = vld [vmem:[#allocation3 + $0x8b8] sm:$0xff]
        %v986 = vld [vmem:[#allocation3 + $0x8c0] sm:$0xff]
        %v987 = vld [vmem:[#allocation3 + $0x8c8] sm:$0xff]
        %v988 = vld [vmem:[#allocation3 + $0x8d0] sm:$0xff]
        %v989 = vld [vmem:[#allocation3 + $0x8d8] sm:$0xff]
        %v990 = vld [vmem:[#allocation3 + $0x8e0] sm:$0xff]
        %v991 = vld [vmem:[#allocation3 + $0x8e8] sm:$0xff]
        %v992 = vld [vmem:[#allocation3 + $0x8f0] sm:$0xff]
        %v993 = vld [vmem:[#allocation3 + $0x8f8] sm:$0xff]
        %v994 = vld [vmem:[#allocation3 + $0x900] sm:$0xff]
        %v995 = vld [vmem:[#allocation3 + $0x908] sm:$0xff]
        %v996 = vld [vmem:[#allocation3 + $0x910] sm:$0xff]
        %v997 = vld [vmem:[#allocation3 + $0x918] sm:$0xff]
        %v998 = vld [vmem:[#allocation3 + $0x920] sm:$0xff]
        %v999 = vld [vmem:[#allocation3 + $0x928] sm:$0xff]
        %v1000 = vld [vmem:[#allocation3 + $0x930] sm:$0xff]
        %v1001 = vld [vmem:[#allocation3 + $0x938] sm:$0xff]
        %v1002 = vld [vmem:[#allocation3 + $0x940] sm:$0xff]
        %v1003 = vld [vmem:[#allocation3 + $0x948] sm:$0xff]
        %v1004 = vld [vmem:[#allocation3 + $0x950] sm:$0xff]
        %v1005 = vld [vmem:[#allocation3 + $0x958] sm:$0xff]
        %v1006 = vld [vmem:[#allocation3 + $0x960] sm:$0xff]
        %v1007 = vld [vmem:[#allocation3 + $0x968] sm:$0xff]
        %v1008 = vld [vmem:[#allocation3 + $0x970] sm:$0xff]
        %v1009 = vld [vmem:[#allocation3 + $0x978] sm:$0xff]
        %v1010 = vld [vmem:[#allocation3 + $0x980] sm:$0xff]
        %v1011 = vld [vmem:[#allocation3 + $0x988] sm:$0xff]
        %v1012 = vld [vmem:[#allocation3 + $0x990] sm:$0xff]
        %v1013 = vld [vmem:[#allocation3 + $0x998] sm:$0xff]
        %v1014 = vld [vmem:[#allocation3 + $0x9a0] sm:$0xff]
        %v1015 = vld [vmem:[#allocation3 + $0x9a8] sm:$0xff]
        %v1016 = vld [vmem:[#allocation3 + $0x9b0] sm:$0xff]
        %v1017 = vld [vmem:[#allocation3 + $0x9b8] sm:$0xff]
        %v1018 = vld [vmem:[#allocation3 + $0x9c0] sm:$0xff]
        %v1019 = vld [vmem:[#allocation3 + $0x9c8] sm:$0xff]
        %v1020 = vld [vmem:[#allocation3 + $0x9d0] sm:$0xff]
        %v1021 = vld [vmem:[#allocation3 + $0x9d8] sm:$0xff]
        %v1022 = vld [vmem:[#allocation3 + $0x9e0] sm:$0xff]
        %v1023 = vld [vmem:[#allocation3 + $0x9e8] sm:$0xff]
        %v1024 = vld [vmem:[#allocation3 + $0x9f0] sm:$0xff]
        %v1025 = vld [vmem:[#allocation3 + $0x9f8] sm:$0xff]
        %v1026 = vld [vmem:[#allocation3 + $0xa00] sm:$0xff]
        %v1027 = vld [vmem:[#allocation3 + $0xa08] sm:$0xff]
        %v1028 = vld [vmem:[#allocation3 + $0xa10] sm:$0xff]
        %v1029 = vld [vmem:[#allocation3 + $0xa18] sm:$0xff]
        %v1030 = vld [vmem:[#allocation3 + $0xa20] sm:$0xff]
        %v1031 = vld [vmem:[#allocation3 + $0xa28] sm:$0xff]
        %v1032 = vld [vmem:[#allocation3 + $0xa30] sm:$0xff]
        %v1033 = vld [vmem:[#allocation3 + $0xa38] sm:$0xff]
        %v1034 = vld [vmem:[#allocation3 + $0xa40] sm:$0xff]
        %v1035 = vld [vmem:[#allocation3 + $0xa48] sm:$0xff]
        %v1036 = vld [vmem:[#allocation3 + $0xa50] sm:$0xff]
        %v1037 = vld [vmem:[#allocation3 + $0xa58] sm:$0xff]
        %v1038 = vld [vmem:[#allocation3 + $0xa60] sm:$0xff]
        %v1039 = vld [vmem:[#allocation3 + $0xa68] sm:$0xff]
        %v1040 = vld [vmem:[#allocation3 + $0xa70] sm:$0xff]
        %v1041 = vld [vmem:[#allocation3 + $0xa78] sm:$0xff]
        %v1042 = vld [vmem:[#allocation3 + $0xa80] sm:$0xff]
        %v1043 = vld [vmem:[#allocation3 + $0xa88] sm:$0xff]
        %v1044 = vld [vmem:[#allocation3 + $0xa90] sm:$0xff]
        %v1045 = vld [vmem:[#allocation3 + $0xa98] sm:$0xff]
        %v1046 = vld [vmem:[#allocation3 + $0xaa0] sm:$0xff]
        %v1047 = vld [vmem:[#allocation3 + $0xaa8] sm:$0xff]
        %v1048 = vld [vmem:[#allocation3 + $0xab0] sm:$0xff]
        %v1049 = vld [vmem:[#allocation3 + $0xab8] sm:$0xff]
        %v1050 = vld [vmem:[#allocation3 + $0xac0] sm:$0xff]
        %v1051 = vld [vmem:[#allocation3 + $0xac8] sm:$0xff]
        %v1052 = vld [vmem:[#allocation3 + $0xad0] sm:$0xff]
        %v1053 = vld [vmem:[#allocation3 + $0xad8] sm:$0xff]
        %v1054 = vld [vmem:[#allocation3 + $0xae0] sm:$0xff]
        %v1055 = vld [vmem:[#allocation3 + $0xae8] sm:$0xff]
        %v1056 = vld [vmem:[#allocation3 + $0xaf0] sm:$0xff]
        %v1057 = vld [vmem:[#allocation3 + $0xaf8] sm:$0xff]
        %v1058 = vld [vmem:[#allocation3 + $0xb00] sm:$0xff]
        %v1059 = vld [vmem:[#allocation3 + $0xb08] sm:$0xff]
        %v1060 = vld [vmem:[#allocation3 + $0xb10] sm:$0xff]
        %v1061 = vld [vmem:[#allocation3 + $0xb18] sm:$0xff]
        %v1062 = vld [vmem:[#allocation3 + $0xb20] sm:$0xff]
        %v1063 = vld [vmem:[#allocation3 + $0xb28] sm:$0xff]
        %v1064 = vld [vmem:[#allocation3 + $0xb30] sm:$0xff]
        %v1065 = vld [vmem:[#allocation3 + $0xb38] sm:$0xff]
        %v1066 = vld [vmem:[#allocation3 + $0xb40] sm:$0xff]
        %v1067 = vld [vmem:[#allocation3 + $0xb48] sm:$0xff]
        %v1068 = vld [vmem:[#allocation3 + $0xb50] sm:$0xff]
        %v1069 = vld [vmem:[#allocation3 + $0xb58] sm:$0xff]
        %v1070 = vld [vmem:[#allocation3 + $0xb60] sm:$0xff]
        %v1071 = vld [vmem:[#allocation3 + $0xb68] sm:$0xff]
        %v1072 = vld [vmem:[#allocation3 + $0xb70] sm:$0xff]
        %v1073 = vld [vmem:[#allocation3 + $0xb78] sm:$0xff]
        %v1074 = vld [vmem:[#allocation3 + $0xb80] sm:$0xff]
        %v1075 = vld [vmem:[#allocation3 + $0xb88] sm:$0xff]
        %v1076 = vld [vmem:[#allocation3 + $0xb90] sm:$0xff]
        %v1077 = vld [vmem:[#allocation3 + $0xb98] sm:$0xff]
        %v1078 = vld [vmem:[#allocation3 + $0xba0] sm:$0xff]
        %v1079 = vld [vmem:[#allocation3 + $0xba8] sm:$0xff]
        %v1080 = vld [vmem:[#allocation3 + $0xbb0] sm:$0xff]
        %v1081 = vld [vmem:[#allocation3 + $0xbb8] sm:$0xff]
        %v1082 = vld [vmem:[#allocation3 + $0xbc0] sm:$0xff]
        %v1083 = vld [vmem:[#allocation3 + $0xbc8] sm:$0xff]
        %v1084 = vld [vmem:[#allocation3 + $0xbd0] sm:$0xff]
        %v1085 = vld [vmem:[#allocation3 + $0xbd8] sm:$0xff]
        %v1086 = vld [vmem:[#allocation3 + $0xbe0] sm:$0xff]
        %v1087 = vld [vmem:[#allocation3 + $0xbe8] sm:$0xff]
        %v1088 = vld [vmem:[#allocation3 + $0xbf0] sm:$0xff]
        %v1089 = vld [vmem:[#allocation3 + $0xbf8] sm:$0xff]
        %v1090 = vld [vmem:[#allocation3 + $0xc00] sm:$0xff]
        %v1091 = vld [vmem:[#allocation3 + $0xc08] sm:$0xff]
        %v1092 = vld [vmem:[#allocation3 + $0xc10] sm:$0xff]
        %v1093 = vld [vmem:[#allocation3 + $0xc18] sm:$0xff]
        %v1094 = vld [vmem:[#allocation3 + $0xc20] sm:$0xff]
        %v1095 = vld [vmem:[#allocation3 + $0xc28] sm:$0xff]
        %v1096 = vld [vmem:[#allocation3 + $0xc30] sm:$0xff]
        %v1097 = vld [vmem:[#allocation3 + $0xc38] sm:$0xff]
        %v1098 = vld [vmem:[#allocation3 + $0xc40] sm:$0xff]
        %v1099 = vld [vmem:[#allocation3 + $0xc48] sm:$0xff]
        %v1100 = vld [vmem:[#allocation3 + $0xc50] sm:$0xff]
        %v1101 = vld [vmem:[#allocation3 + $0xc58] sm:$0xff]
        %v1102 = vld [vmem:[#allocation3 + $0xc60] sm:$0xff]
        %v1103 = vld [vmem:[#allocation3 + $0xc68] sm:$0xff]
        %v1104 = vld [vmem:[#allocation3 + $0xc70] sm:$0xff]
        %v1105 = vld [vmem:[#allocation3 + $0xc78] sm:$0xff]
        %v1106 = vld [vmem:[#allocation3 + $0xc80] sm:$0xff]
        %v1107 = vld [vmem:[#allocation3 + $0xc88] sm:$0xff]
        %v1108 = vld [vmem:[#allocation3 + $0xc90] sm:$0xff]
        %v1109 = vld [vmem:[#allocation3 + $0xc98] sm:$0xff]
        %v1110 = vld [vmem:[#allocation3 + $0xca0] sm:$0xff]
        %v1111 = vld [vmem:[#allocation3 + $0xca8] sm:$0xff]
        %v1112 = vld [vmem:[#allocation3 + $0xcb0] sm:$0xff]
        %v1113 = vld [vmem:[#allocation3 + $0xcb8] sm:$0xff]
        %v1114 = vld [vmem:[#allocation3 + $0xcc0] sm:$0xff]
        %v1115 = vld [vmem:[#allocation3 + $0xcc8] sm:$0xff]
        %v1116 = vld [vmem:[#allocation3 + $0xcd0] sm:$0xff]
        %v1117 = vld [vmem:[#allocation3 + $0xcd8] sm:$0xff]
        %v1118 = vld [vmem:[#allocation3 + $0xce0] sm:$0xff]
        %v1119 = vld [vmem:[#allocation3 + $0xce8] sm:$0xff]
        %v1120 = vld [vmem:[#allocation3 + $0xcf0] sm:$0xff]
        %v1121 = vld [vmem:[#allocation3 + $0xcf8] sm:$0xff]
        %v1122 = vld [vmem:[#allocation3 + $0xd00] sm:$0xff]
        %v1123 = vld [vmem:[#allocation3 + $0xd08] sm:$0xff]
        %v1124 = vld [vmem:[#allocation3 + $0xd10] sm:$0xff]
        %v1125 = vld [vmem:[#allocation3 + $0xd18] sm:$0xff]
        %v1126 = vld [vmem:[#allocation3 + $0xd20] sm:$0xff]
        %v1127 = vld [vmem:[#allocation3 + $0xd28] sm:$0xff]
        %v1128 = vld [vmem:[#allocation3 + $0xd30] sm:$0xff]
        %v1129 = vld [vmem:[#allocation3 + $0xd38] sm:$0xff]
        %v1130 = vld [vmem:[#allocation3 + $0xd40] sm:$0xff]
        %v1131 = vld [vmem:[#allocation3 + $0xd48] sm:$0xff]
        %v1132 = vld [vmem:[#allocation3 + $0xd50] sm:$0xff]
        %v1133 = vld [vmem:[#allocation3 + $0xd58] sm:$0xff]
        %v1134 = vld [vmem:[#allocation3 + $0xd60] sm:$0xff]
        %v1135 = vld [vmem:[#allocation3 + $0xd68] sm:$0xff]
        %v1136 = vld [vmem:[#allocation3 + $0xd70] sm:$0xff]
        %v1137 = vld [vmem:[#allocation3 + $0xd78] sm:$0xff]
        %v1138 = vld [vmem:[#allocation3 + $0xd80] sm:$0xff]
        %v1139 = vld [vmem:[#allocation3 + $0xd88] sm:$0xff]
        %v1140 = vld [vmem:[#allocation3 + $0xd90] sm:$0xff]
        %v1141 = vld [vmem:[#allocation3 + $0xd98] sm:$0xff]
        %v1142 = vld [vmem:[#allocation3 + $0xda0] sm:$0xff]
        %v1143 = vld [vmem:[#allocation3 + $0xda8] sm:$0xff]
        %v1144 = vld [vmem:[#allocation3 + $0xdb0] sm:$0xff]
        %v1145 = vld [vmem:[#allocation3 + $0xdb8] sm:$0xff]
        %v1146 = vld [vmem:[#allocation3 + $0xdc0] sm:$0xff]
        %v1147 = vld [vmem:[#allocation3 + $0xdc8] sm:$0xff]
        %v1148 = vld [vmem:[#allocation3 + $0xdd0] sm:$0xff]
        %v1149 = vld [vmem:[#allocation3 + $0xdd8] sm:$0xff]
        %v1150 = vld [vmem:[#allocation3 + $0xde0] sm:$0xff]
        %v1151 = vld [vmem:[#allocation3 + $0xde8] sm:$0xff]
        %v1152 = vld [vmem:[#allocation3 + $0xdf0] sm:$0xff]
        %v1153 = vld [vmem:[#allocation3 + $0xdf8] sm:$0xff]
        %v1154 = vld [vmem:[#allocation3 + $0xe00] sm:$0xff]
        %v1155 = vld [vmem:[#allocation3 + $0xe08] sm:$0xff]
        %v1156 = vld [vmem:[#allocation3 + $0xe10] sm:$0xff]
        %v1157 = vld [vmem:[#allocation3 + $0xe18] sm:$0xff]
        %v1158 = vld [vmem:[#allocation3 + $0xe20] sm:$0xff]
        %v1159 = vld [vmem:[#allocation3 + $0xe28] sm:$0xff]
        %v1160 = vld [vmem:[#allocation3 + $0xe30] sm:$0xff]
        %v1161 = vld [vmem:[#allocation3 + $0xe38] sm:$0xff]
        %v1162 = vld [vmem:[#allocation3 + $0xe40] sm:$0xff]
        %v1163 = vld [vmem:[#allocation3 + $0xe48] sm:$0xff]
        %v1164 = vld [vmem:[#allocation3 + $0xe50] sm:$0xff]
        %v1165 = vld [vmem:[#allocation3 + $0xe58] sm:$0xff]
        %v1166 = vld [vmem:[#allocation3 + $0xe60] sm:$0xff]
        %v1167 = vld [vmem:[#allocation3 + $0xe68] sm:$0xff]
        %v1168 = vld [vmem:[#allocation3 + $0xe70] sm:$0xff]
        %v1169 = vld [vmem:[#allocation3 + $0xe78] sm:$0xff]
        %v1170 = vld [vmem:[#allocation3 + $0xe80] sm:$0xff]
        %v1171 = vld [vmem:[#allocation3 + $0xe88] sm:$0xff]
        %v1172 = vld [vmem:[#allocation3 + $0xe90] sm:$0xff]
        %v1173 = vld [vmem:[#allocation3 + $0xe98] sm:$0xff]
        %v1174 = vld [vmem:[#allocation3 + $0xea0] sm:$0xff]
        %v1175 = vld [vmem:[#allocation3 + $0xea8] sm:$0xff]
        %v1176 = vld [vmem:[#allocation3 + $0xeb0] sm:$0xff]
        %v1177 = vld [vmem:[#allocation3 + $0xeb8] sm:$0xff]
        %v1178 = vld [vmem:[#allocation3 + $0xec0] sm:$0xff]
        %v1179 = vld [vmem:[#allocation3 + $0xec8] sm:$0xff]
        %v1180 = vld [vmem:[#allocation3 + $0xed0] sm:$0xff]
        %v1181 = vld [vmem:[#allocation3 + $0xed8] sm:$0xff]
        %v1182 = vld [vmem:[#allocation3 + $0xee0] sm:$0xff]
        %v1183 = vld [vmem:[#allocation3 + $0xee8] sm:$0xff]
        %v1184 = vld [vmem:[#allocation3 + $0xef0] sm:$0xff]
        %v1185 = vld [vmem:[#allocation3 + $0xef8] sm:$0xff]
        %v1186 = vld [vmem:[#allocation3 + $0xf00] sm:$0xff]
        %v1187 = vld [vmem:[#allocation3 + $0xf08] sm:$0xff]
        %v1188 = vld [vmem:[#allocation3 + $0xf10] sm:$0xff]
        %v1189 = vld [vmem:[#allocation3 + $0xf18] sm:$0xff]
        %v1190 = vld [vmem:[#allocation3 + $0xf20] sm:$0xff]
        %v1191 = vld [vmem:[#allocation3 + $0xf28] sm:$0xff]
        %v1192 = vld [vmem:[#allocation3 + $0xf30] sm:$0xff]
        %v1193 = vld [vmem:[#allocation3 + $0xf38] sm:$0xff]
        %v1194 = vld [vmem:[#allocation3 + $0xf40] sm:$0xff]
        %v1195 = vld [vmem:[#allocation3 + $0xf48] sm:$0xff]
        %v1196 = vld [vmem:[#allocation3 + $0xf50] sm:$0xff]
        %v1197 = vld [vmem:[#allocation3 + $0xf58] sm:$0xff]
        %v1198 = vld [vmem:[#allocation3 + $0xf60] sm:$0xff]
        %v1199 = vld [vmem:[#allocation3 + $0xf68] sm:$0xff]
        %v1200 = vld [vmem:[#allocation3 + $0xf70] sm:$0xff]
        %v1201 = vld [vmem:[#allocation3 + $0xf78] sm:$0xff]
        %v1202 = vld [vmem:[#allocation3 + $0xf80] sm:$0xff]
        %v1203 = vld [vmem:[#allocation3 + $0xf88] sm:$0xff]
        %v1204 = vld [vmem:[#allocation3 + $0xf90] sm:$0xff]
        %v1205 = vld [vmem:[#allocation3 + $0xf98] sm:$0xff]
        %v1206 = vld [vmem:[#allocation3 + $0xfa0] sm:$0xff]
        %v1207 = vld [vmem:[#allocation3 + $0xfa8] sm:$0xff]
        %v1208 = vld [vmem:[#allocation3 + $0xfb0] sm:$0xff]
        %v1209 = vld [vmem:[#allocation3 + $0xfb8] sm:$0xff]
        %v1210 = vld [vmem:[#allocation3 + $0xfc0] sm:$0xff]
        %v1211 = vld [vmem:[#allocation3 + $0xfc8] sm:$0xff]
        %v1212 = vld [vmem:[#allocation3 + $0xfd0] sm:$0xff]
        %v1213 = vld [vmem:[#allocation3 + $0xfd8] sm:$0xff]
        %v1214 = vld [vmem:[#allocation3 + $0xfe0] sm:$0xff]
        %v1215 = vld [vmem:[#allocation3 + $0xfe8] sm:$0xff]
        %v1216 = vld [vmem:[#allocation3 + $0xff0] sm:$0xff]
        %v1217 = vld [vmem:[#allocation3 + $0xff8] sm:$0xff]
        %v1234 = vunpack.c.l.b16 %v690
        %v1235 = vunpack.c.h.b16 %v690
        %v1236 = vunpack.c.l.b16 %v691
        %v1237 = vunpack.c.h.b16 %v691
        %v1238 = vunpack.c.l.b16 %v692
        %v1239 = vunpack.c.h.b16 %v692
        %v1240 = vunpack.c.l.b16 %v693
        %v1241 = vunpack.c.h.b16 %v693
        %v1242 = vunpack.c.l.b16 %v694
        %v1243 = vunpack.c.h.b16 %v694
        %v1244 = vunpack.c.l.b16 %v695
        %v1245 = vunpack.c.h.b16 %v695
        %v1246 = vunpack.c.l.b16 %v696
        %v1247 = vunpack.c.h.b16 %v696
        %v1248 = vunpack.c.l.b16 %v697
        %v1249 = vunpack.c.h.b16 %v697
        %v1250 = vunpack.c.l.b16 %v698
        %v1251 = vunpack.c.h.b16 %v698
        %v1252 = vunpack.c.l.b16 %v699
        %v1253 = vunpack.c.h.b16 %v699
        %v1254 = vunpack.c.l.b16 %v700
        %v1255 = vunpack.c.h.b16 %v700
        %v1256 = vunpack.c.l.b16 %v701
        %v1257 = vunpack.c.h.b16 %v701
        %v1258 = vunpack.c.l.b16 %v702
        %v1259 = vunpack.c.h.b16 %v702
        %v1260 = vunpack.c.l.b16 %v703
        %v1261 = vunpack.c.h.b16 %v703
        %v1262 = vunpack.c.l.b16 %v704
        %v1263 = vunpack.c.h.b16 %v704
        %v1264 = vunpack.c.l.b16 %v705
        %v1265 = vunpack.c.h.b16 %v705
        %v1266 = vpack.c.b16 %v1242, %v1234
        %v1267 = vpack.c.b16 %v1243, %v1235
        %v1268 = vpack.c.b16 %v1244, %v1236
        %v1269 = vpack.c.b16 %v1245, %v1237
        %v1270 = vpack.c.b16 %v1246, %v1238
        %v1271 = vpack.c.b16 %v1247, %v1239
        %v1272 = vpack.c.b16 %v1248, %v1240
        %v1273 = vpack.c.b16 %v1249, %v1241
        %v1274 = vpack.c.b16 %v1258, %v1250
        %v1275 = vpack.c.b16 %v1259, %v1251
        %v1276 = vpack.c.b16 %v1260, %v1252
        %v1277 = vpack.c.b16 %v1261, %v1253
        %v1278 = vpack.c.b16 %v1262, %v1254
        %v1279 = vpack.c.b16 %v1263, %v1255
        %v1280 = vpack.c.b16 %v1264, %v1256
        %v1281 = vpack.c.b16 %v1265, %v1257
        %v1810 = vunpack.c.l.b16 %v706
        %v1811 = vunpack.c.h.b16 %v706
        %v1812 = vunpack.c.l.b16 %v707
        %v1813 = vunpack.c.h.b16 %v707
        %v1814 = vunpack.c.l.b16 %v708
        %v1815 = vunpack.c.h.b16 %v708
        %v1816 = vunpack.c.l.b16 %v709
        %v1817 = vunpack.c.h.b16 %v709
        %v1818 = vunpack.c.l.b16 %v710
        %v1819 = vunpack.c.h.b16 %v710
        %v1820 = vunpack.c.l.b16 %v711
        %v1821 = vunpack.c.h.b16 %v711
        %v1822 = vunpack.c.l.b16 %v712
        %v1823 = vunpack.c.h.b16 %v712
        %v1824 = vunpack.c.l.b16 %v713
        %v1825 = vunpack.c.h.b16 %v713
        %v1826 = vunpack.c.l.b16 %v714
        %v1827 = vunpack.c.h.b16 %v714
        %v1828 = vunpack.c.l.b16 %v715
        %v1829 = vunpack.c.h.b16 %v715
        %v1830 = vunpack.c.l.b16 %v716
        %v1831 = vunpack.c.h.b16 %v716
        %v1832 = vunpack.c.l.b16 %v717
        %v1833 = vunpack.c.h.b16 %v717
        %v1834 = vunpack.c.l.b16 %v718
        %v1835 = vunpack.c.h.b16 %v718
        %v1836 = vunpack.c.l.b16 %v719
        %v1837 = vunpack.c.h.b16 %v719
        %v1838 = vunpack.c.l.b16 %v720
        %v1839 = vunpack.c.h.b16 %v720
        %v1840 = vunpack.c.l.b16 %v721
        %v1841 = vunpack.c.h.b16 %v721
        %v1842 = vunpack.c.l.b16 %v722
        %v1843 = vunpack.c.h.b16 %v722
        %v1844 = vunpack.c.l.b16 %v723
        %v1845 = vunpack.c.h.b16 %v723
        %v1846 = vunpack.c.l.b16 %v724
        %v1847 = vunpack.c.h.b16 %v724
        %v1848 = vunpack.c.l.b16 %v725
        %v1849 = vunpack.c.h.b16 %v725
        %v1850 = vunpack.c.l.b16 %v726
        %v1851 = vunpack.c.h.b16 %v726
        %v1852 = vunpack.c.l.b16 %v727
        %v1853 = vunpack.c.h.b16 %v727
        %v1854 = vunpack.c.l.b16 %v728
        %v1855 = vunpack.c.h.b16 %v728
        %v1856 = vunpack.c.l.b16 %v729
        %v1857 = vunpack.c.h.b16 %v729
        %v1858 = vunpack.c.l.b16 %v730
        %v1859 = vunpack.c.h.b16 %v730
        %v1860 = vunpack.c.l.b16 %v731
        %v1861 = vunpack.c.h.b16 %v731
        %v1862 = vunpack.c.l.b16 %v732
        %v1863 = vunpack.c.h.b16 %v732
        %v1864 = vunpack.c.l.b16 %v733
        %v1865 = vunpack.c.h.b16 %v733
        %v1866 = vunpack.c.l.b16 %v734
        %v1867 = vunpack.c.h.b16 %v734
        %v1868 = vunpack.c.l.b16 %v735
        %v1869 = vunpack.c.h.b16 %v735
        %v1870 = vunpack.c.l.b16 %v736
        %v1871 = vunpack.c.h.b16 %v736
        %v1872 = vunpack.c.l.b16 %v737
        %v1873 = vunpack.c.h.b16 %v737
        %v1874 = vunpack.c.l.b16 %v738
        %v1875 = vunpack.c.h.b16 %v738
        %v1876 = vunpack.c.l.b16 %v739
        %v1877 = vunpack.c.h.b16 %v739
        %v1878 = vunpack.c.l.b16 %v740
        %v1879 = vunpack.c.h.b16 %v740
        %v1880 = vunpack.c.l.b16 %v741
        %v1881 = vunpack.c.h.b16 %v741
        %v1882 = vunpack.c.l.b16 %v742
        %v1883 = vunpack.c.h.b16 %v742
        %v1884 = vunpack.c.l.b16 %v743
        %v1885 = vunpack.c.h.b16 %v743
        %v1886 = vunpack.c.l.b16 %v744
        %v1887 = vunpack.c.h.b16 %v744
        %v1888 = vunpack.c.l.b16 %v745
        %v1889 = vunpack.c.h.b16 %v745
        %v1890 = vunpack.c.l.b16 %v746
        %v1891 = vunpack.c.h.b16 %v746
        %v1892 = vunpack.c.l.b16 %v747
        %v1893 = vunpack.c.h.b16 %v747
        %v1894 = vunpack.c.l.b16 %v748
        %v1895 = vunpack.c.h.b16 %v748
        %v1896 = vunpack.c.l.b16 %v749
        %v1897 = vunpack.c.h.b16 %v749
        %v1898 = vunpack.c.l.b16 %v750
        %v1899 = vunpack.c.h.b16 %v750
        %v1900 = vunpack.c.l.b16 %v751
        %v1901 = vunpack.c.h.b16 %v751
        %v1902 = vunpack.c.l.b16 %v752
        %v1903 = vunpack.c.h.b16 %v752
        %v1904 = vunpack.c.l.b16 %v753
        %v1905 = vunpack.c.h.b16 %v753
        %v1906 = vunpack.c.l.b16 %v754
        %v1907 = vunpack.c.h.b16 %v754
        %v1908 = vunpack.c.l.b16 %v755
        %v1909 = vunpack.c.h.b16 %v755
        %v1910 = vunpack.c.l.b16 %v756
        %v1911 = vunpack.c.h.b16 %v756
        %v1912 = vunpack.c.l.b16 %v757
        %v1913 = vunpack.c.h.b16 %v757
        %v1914 = vunpack.c.l.b16 %v758
        %v1915 = vunpack.c.h.b16 %v758
        %v1916 = vunpack.c.l.b16 %v759
        %v1917 = vunpack.c.h.b16 %v759
        %v1918 = vunpack.c.l.b16 %v760
        %v1919 = vunpack.c.h.b16 %v760
        %v1920 = vunpack.c.l.b16 %v761
        %v1921 = vunpack.c.h.b16 %v761
        %v1922 = vunpack.c.l.b16 %v762
        %v1923 = vunpack.c.h.b16 %v762
        %v1924 = vunpack.c.l.b16 %v763
        %v1925 = vunpack.c.h.b16 %v763
        %v1926 = vunpack.c.l.b16 %v764
        %v1927 = vunpack.c.h.b16 %v764
        %v1928 = vunpack.c.l.b16 %v765
        %v1929 = vunpack.c.h.b16 %v765
        %v1930 = vunpack.c.l.b16 %v766
        %v1931 = vunpack.c.h.b16 %v766
        %v1932 = vunpack.c.l.b16 %v767
        %v1933 = vunpack.c.h.b16 %v767
        %v1934 = vunpack.c.l.b16 %v768
        %v1935 = vunpack.c.h.b16 %v768
        %v1936 = vunpack.c.l.b16 %v769
        %v1937 = vunpack.c.h.b16 %v769
        %v1938 = vunpack.c.l.b16 %v770
        %v1939 = vunpack.c.h.b16 %v770
        %v1940 = vunpack.c.l.b16 %v771
        %v1941 = vunpack.c.h.b16 %v771
        %v1942 = vunpack.c.l.b16 %v772
        %v1943 = vunpack.c.h.b16 %v772
        %v1944 = vunpack.c.l.b16 %v773
        %v1945 = vunpack.c.h.b16 %v773
        %v1946 = vunpack.c.l.b16 %v774
        %v1947 = vunpack.c.h.b16 %v774
        %v1948 = vunpack.c.l.b16 %v775
        %v1949 = vunpack.c.h.b16 %v775
        %v1950 = vunpack.c.l.b16 %v776
        %v1951 = vunpack.c.h.b16 %v776
        %v1952 = vunpack.c.l.b16 %v777
        %v1953 = vunpack.c.h.b16 %v777
        %v1954 = vunpack.c.l.b16 %v778
        %v1955 = vunpack.c.h.b16 %v778
        %v1956 = vunpack.c.l.b16 %v779
        %v1957 = vunpack.c.h.b16 %v779
        %v1958 = vunpack.c.l.b16 %v780
        %v1959 = vunpack.c.h.b16 %v780
        %v1960 = vunpack.c.l.b16 %v781
        %v1961 = vunpack.c.h.b16 %v781
        %v1962 = vunpack.c.l.b16 %v782
        %v1963 = vunpack.c.h.b16 %v782
        %v1964 = vunpack.c.l.b16 %v783
        %v1965 = vunpack.c.h.b16 %v783
        %v1966 = vunpack.c.l.b16 %v784
        %v1967 = vunpack.c.h.b16 %v784
        %v1968 = vunpack.c.l.b16 %v785
        %v1969 = vunpack.c.h.b16 %v785
        %v1970 = vunpack.c.l.b16 %v786
        %v1971 = vunpack.c.h.b16 %v786
        %v1972 = vunpack.c.l.b16 %v787
        %v1973 = vunpack.c.h.b16 %v787
        %v1974 = vunpack.c.l.b16 %v788
        %v1975 = vunpack.c.h.b16 %v788
        %v1976 = vunpack.c.l.b16 %v789
        %v1977 = vunpack.c.h.b16 %v789
        %v1978 = vunpack.c.l.b16 %v790
        %v1979 = vunpack.c.h.b16 %v790
        %v1980 = vunpack.c.l.b16 %v791
        %v1981 = vunpack.c.h.b16 %v791
        %v1982 = vunpack.c.l.b16 %v792
        %v1983 = vunpack.c.h.b16 %v792
        %v1984 = vunpack.c.l.b16 %v793
        %v1985 = vunpack.c.h.b16 %v793
        %v1986 = vunpack.c.l.b16 %v794
        %v1987 = vunpack.c.h.b16 %v794
        %v1988 = vunpack.c.l.b16 %v795
        %v1989 = vunpack.c.h.b16 %v795
        %v1990 = vunpack.c.l.b16 %v796
        %v1991 = vunpack.c.h.b16 %v796
        %v1992 = vunpack.c.l.b16 %v797
        %v1993 = vunpack.c.h.b16 %v797
        %v1994 = vunpack.c.l.b16 %v798
        %v1995 = vunpack.c.h.b16 %v798
        %v1996 = vunpack.c.l.b16 %v799
        %v1997 = vunpack.c.h.b16 %v799
        %v1998 = vunpack.c.l.b16 %v800
        %v1999 = vunpack.c.h.b16 %v800
        %v2000 = vunpack.c.l.b16 %v801
        %v2001 = vunpack.c.h.b16 %v801
        %v2002 = vunpack.c.l.b16 %v802
        %v2003 = vunpack.c.h.b16 %v802
        %v2004 = vunpack.c.l.b16 %v803
        %v2005 = vunpack.c.h.b16 %v803
        %v2006 = vunpack.c.l.b16 %v804
        %v2007 = vunpack.c.h.b16 %v804
        %v2008 = vunpack.c.l.b16 %v805
        %v2009 = vunpack.c.h.b16 %v805
        %v2010 = vunpack.c.l.b16 %v806
        %v2011 = vunpack.c.h.b16 %v806
        %v2012 = vunpack.c.l.b16 %v807
        %v2013 = vunpack.c.h.b16 %v807
        %v2014 = vunpack.c.l.b16 %v808
        %v2015 = vunpack.c.h.b16 %v808
        %v2016 = vunpack.c.l.b16 %v809
        %v2017 = vunpack.c.h.b16 %v809
        %v2018 = vunpack.c.l.b16 %v810
        %v2019 = vunpack.c.h.b16 %v810
        %v2020 = vunpack.c.l.b16 %v811
        %v2021 = vunpack.c.h.b16 %v811
        %v2022 = vunpack.c.l.b16 %v812
        %v2023 = vunpack.c.h.b16 %v812
        %v2024 = vunpack.c.l.b16 %v813
        %v2025 = vunpack.c.h.b16 %v813
        %v2026 = vunpack.c.l.b16 %v814
        %v2027 = vunpack.c.h.b16 %v814
        %v2028 = vunpack.c.l.b16 %v815
        %v2029 = vunpack.c.h.b16 %v815
        %v2030 = vunpack.c.l.b16 %v816
        %v2031 = vunpack.c.h.b16 %v816
        %v2032 = vunpack.c.l.b16 %v817
        %v2033 = vunpack.c.h.b16 %v817
        %v2034 = vunpack.c.l.b16 %v818
        %v2035 = vunpack.c.h.b16 %v818
        %v2036 = vunpack.c.l.b16 %v819
        %v2037 = vunpack.c.h.b16 %v819
        %v2038 = vunpack.c.l.b16 %v820
        %v2039 = vunpack.c.h.b16 %v820
        %v2040 = vunpack.c.l.b16 %v821
        %v2041 = vunpack.c.h.b16 %v821
        %v2042 = vunpack.c.l.b16 %v822
        %v2043 = vunpack.c.h.b16 %v822
        %v2044 = vunpack.c.l.b16 %v823
        %v2045 = vunpack.c.h.b16 %v823
        %v2046 = vunpack.c.l.b16 %v824
        %v2047 = vunpack.c.h.b16 %v824
        %v2048 = vunpack.c.l.b16 %v825
        %v2049 = vunpack.c.h.b16 %v825
        %v2050 = vunpack.c.l.b16 %v826
        %v2051 = vunpack.c.h.b16 %v826
        %v2052 = vunpack.c.l.b16 %v827
        %v2053 = vunpack.c.h.b16 %v827
        %v2054 = vunpack.c.l.b16 %v828
        %v2055 = vunpack.c.h.b16 %v828
        %v2056 = vunpack.c.l.b16 %v829
        %v2057 = vunpack.c.h.b16 %v829
        %v2058 = vunpack.c.l.b16 %v830
        %v2059 = vunpack.c.h.b16 %v830
        %v2060 = vunpack.c.l.b16 %v831
        %v2061 = vunpack.c.h.b16 %v831
        %v2062 = vunpack.c.l.b16 %v832
        %v2063 = vunpack.c.h.b16 %v832
        %v2064 = vunpack.c.l.b16 %v833
        %v2065 = vunpack.c.h.b16 %v833
        %v2066 = vunpack.c.l.b16 %v834
        %v2067 = vunpack.c.h.b16 %v834
        %v2068 = vunpack.c.l.b16 %v835
        %v2069 = vunpack.c.h.b16 %v835
        %v2070 = vunpack.c.l.b16 %v836
        %v2071 = vunpack.c.h.b16 %v836
        %v2072 = vunpack.c.l.b16 %v837
        %v2073 = vunpack.c.h.b16 %v837
        %v2074 = vunpack.c.l.b16 %v838
        %v2075 = vunpack.c.h.b16 %v838
        %v2076 = vunpack.c.l.b16 %v839
        %v2077 = vunpack.c.h.b16 %v839
        %v2078 = vunpack.c.l.b16 %v840
        %v2079 = vunpack.c.h.b16 %v840
        %v2080 = vunpack.c.l.b16 %v841
        %v2081 = vunpack.c.h.b16 %v841
        %v2082 = vunpack.c.l.b16 %v842
        %v2083 = vunpack.c.h.b16 %v842
        %v2084 = vunpack.c.l.b16 %v843
        %v2085 = vunpack.c.h.b16 %v843
        %v2086 = vunpack.c.l.b16 %v844
        %v2087 = vunpack.c.h.b16 %v844
        %v2088 = vunpack.c.l.b16 %v845
        %v2089 = vunpack.c.h.b16 %v845
        %v2090 = vunpack.c.l.b16 %v846
        %v2091 = vunpack.c.h.b16 %v846
        %v2092 = vunpack.c.l.b16 %v847
        %v2093 = vunpack.c.h.b16 %v847
        %v2094 = vunpack.c.l.b16 %v848
        %v2095 = vunpack.c.h.b16 %v848
        %v2096 = vunpack.c.l.b16 %v849
        %v2097 = vunpack.c.h.b16 %v849
        %v2098 = vunpack.c.l.b16 %v850
        %v2099 = vunpack.c.h.b16 %v850
        %v2100 = vunpack.c.l.b16 %v851
        %v2101 = vunpack.c.h.b16 %v851
        %v2102 = vunpack.c.l.b16 %v852
        %v2103 = vunpack.c.h.b16 %v852
        %v2104 = vunpack.c.l.b16 %v853
        %v2105 = vunpack.c.h.b16 %v853
        %v2106 = vunpack.c.l.b16 %v854
        %v2107 = vunpack.c.h.b16 %v854
        %v2108 = vunpack.c.l.b16 %v855
        %v2109 = vunpack.c.h.b16 %v855
        %v2110 = vunpack.c.l.b16 %v856
        %v2111 = vunpack.c.h.b16 %v856
        %v2112 = vunpack.c.l.b16 %v857
        %v2113 = vunpack.c.h.b16 %v857
        %v2114 = vunpack.c.l.b16 %v858
        %v2115 = vunpack.c.h.b16 %v858
        %v2116 = vunpack.c.l.b16 %v859
        %v2117 = vunpack.c.h.b16 %v859
        %v2118 = vunpack.c.l.b16 %v860
        %v2119 = vunpack.c.h.b16 %v860
        %v2120 = vunpack.c.l.b16 %v861
        %v2121 = vunpack.c.h.b16 %v861
        %v2122 = vunpack.c.l.b16 %v862
        %v2123 = vunpack.c.h.b16 %v862
        %v2124 = vunpack.c.l.b16 %v863
        %v2125 = vunpack.c.h.b16 %v863
        %v2126 = vunpack.c.l.b16 %v864
        %v2127 = vunpack.c.h.b16 %v864
        %v2128 = vunpack.c.l.b16 %v865
        %v2129 = vunpack.c.h.b16 %v865
        %v2130 = vunpack.c.l.b16 %v866
        %v2131 = vunpack.c.h.b16 %v866
        %v2132 = vunpack.c.l.b16 %v867
        %v2133 = vunpack.c.h.b16 %v867
        %v2134 = vunpack.c.l.b16 %v868
        %v2135 = vunpack.c.h.b16 %v868
        %v2136 = vunpack.c.l.b16 %v869
        %v2137 = vunpack.c.h.b16 %v869
        %v2138 = vunpack.c.l.b16 %v870
        %v2139 = vunpack.c.h.b16 %v870
        %v2140 = vunpack.c.l.b16 %v871
        %v2141 = vunpack.c.h.b16 %v871
        %v2142 = vunpack.c.l.b16 %v872
        %v2143 = vunpack.c.h.b16 %v872
        %v2144 = vunpack.c.l.b16 %v873
        %v2145 = vunpack.c.h.b16 %v873
        %v2146 = vunpack.c.l.b16 %v874
        %v2147 = vunpack.c.h.b16 %v874
        %v2148 = vunpack.c.l.b16 %v875
        %v2149 = vunpack.c.h.b16 %v875
        %v2150 = vunpack.c.l.b16 %v876
        %v2151 = vunpack.c.h.b16 %v876
        %v2152 = vunpack.c.l.b16 %v877
        %v2153 = vunpack.c.h.b16 %v877
        %v2154 = vunpack.c.l.b16 %v878
        %v2155 = vunpack.c.h.b16 %v878
        %v2156 = vunpack.c.l.b16 %v879
        %v2157 = vunpack.c.h.b16 %v879
        %v2158 = vunpack.c.l.b16 %v880
        %v2159 = vunpack.c.h.b16 %v880
        %v2160 = vunpack.c.l.b16 %v881
        %v2161 = vunpack.c.h.b16 %v881
        %v2162 = vunpack.c.l.b16 %v882
        %v2163 = vunpack.c.h.b16 %v882
        %v2164 = vunpack.c.l.b16 %v883
        %v2165 = vunpack.c.h.b16 %v883
        %v2166 = vunpack.c.l.b16 %v884
        %v2167 = vunpack.c.h.b16 %v884
        %v2168 = vunpack.c.l.b16 %v885
        %v2169 = vunpack.c.h.b16 %v885
        %v2170 = vunpack.c.l.b16 %v886
        %v2171 = vunpack.c.h.b16 %v886
        %v2172 = vunpack.c.l.b16 %v887
        %v2173 = vunpack.c.h.b16 %v887
        %v2174 = vunpack.c.l.b16 %v888
        %v2175 = vunpack.c.h.b16 %v888
        %v2176 = vunpack.c.l.b16 %v889
        %v2177 = vunpack.c.h.b16 %v889
        %v2178 = vunpack.c.l.b16 %v890
        %v2179 = vunpack.c.h.b16 %v890
        %v2180 = vunpack.c.l.b16 %v891
        %v2181 = vunpack.c.h.b16 %v891
        %v2182 = vunpack.c.l.b16 %v892
        %v2183 = vunpack.c.h.b16 %v892
        %v2184 = vunpack.c.l.b16 %v893
        %v2185 = vunpack.c.h.b16 %v893
        %v2186 = vunpack.c.l.b16 %v894
        %v2187 = vunpack.c.h.b16 %v894
        %v2188 = vunpack.c.l.b16 %v895
        %v2189 = vunpack.c.h.b16 %v895
        %v2190 = vunpack.c.l.b16 %v896
        %v2191 = vunpack.c.h.b16 %v896
        %v2192 = vunpack.c.l.b16 %v897
        %v2193 = vunpack.c.h.b16 %v897
        %v2194 = vunpack.c.l.b16 %v898
        %v2195 = vunpack.c.h.b16 %v898
        %v2196 = vunpack.c.l.b16 %v899
        %v2197 = vunpack.c.h.b16 %v899
        %v2198 = vunpack.c.l.b16 %v900
        %v2199 = vunpack.c.h.b16 %v900
        %v2200 = vunpack.c.l.b16 %v901
        %v2201 = vunpack.c.h.b16 %v901
        %v2202 = vunpack.c.l.b16 %v902
        %v2203 = vunpack.c.h.b16 %v902
        %v2204 = vunpack.c.l.b16 %v903
        %v2205 = vunpack.c.h.b16 %v903
        %v2206 = vunpack.c.l.b16 %v904
        %v2207 = vunpack.c.h.b16 %v904
        %v2208 = vunpack.c.l.b16 %v905
        %v2209 = vunpack.c.h.b16 %v905
        %v2210 = vunpack.c.l.b16 %v906
        %v2211 = vunpack.c.h.b16 %v906
        %v2212 = vunpack.c.l.b16 %v907
        %v2213 = vunpack.c.h.b16 %v907
        %v2214 = vunpack.c.l.b16 %v908
        %v2215 = vunpack.c.h.b16 %v908
        %v2216 = vunpack.c.l.b16 %v909
        %v2217 = vunpack.c.h.b16 %v909
        %v2218 = vunpack.c.l.b16 %v910
        %v2219 = vunpack.c.h.b16 %v910
        %v2220 = vunpack.c.l.b16 %v911
        %v2221 = vunpack.c.h.b16 %v911
        %v2222 = vunpack.c.l.b16 %v912
        %v2223 = vunpack.c.h.b16 %v912
        %v2224 = vunpack.c.l.b16 %v913
        %v2225 = vunpack.c.h.b16 %v913
        %v2226 = vunpack.c.l.b16 %v914
        %v2227 = vunpack.c.h.b16 %v914
        %v2228 = vunpack.c.l.b16 %v915
        %v2229 = vunpack.c.h.b16 %v915
        %v2230 = vunpack.c.l.b16 %v916
        %v2231 = vunpack.c.h.b16 %v916
        %v2232 = vunpack.c.l.b16 %v917
        %v2233 = vunpack.c.h.b16 %v917
        %v2234 = vunpack.c.l.b16 %v918
        %v2235 = vunpack.c.h.b16 %v918
        %v2236 = vunpack.c.l.b16 %v919
        %v2237 = vunpack.c.h.b16 %v919
        %v2238 = vunpack.c.l.b16 %v920
        %v2239 = vunpack.c.h.b16 %v920
        %v2240 = vunpack.c.l.b16 %v921
        %v2241 = vunpack.c.h.b16 %v921
        %v2242 = vunpack.c.l.b16 %v922
        %v2243 = vunpack.c.h.b16 %v922
        %v2244 = vunpack.c.l.b16 %v923
        %v2245 = vunpack.c.h.b16 %v923
        %v2246 = vunpack.c.l.b16 %v924
        %v2247 = vunpack.c.h.b16 %v924
        %v2248 = vunpack.c.l.b16 %v925
        %v2249 = vunpack.c.h.b16 %v925
        %v2250 = vunpack.c.l.b16 %v926
        %v2251 = vunpack.c.h.b16 %v926
        %v2252 = vunpack.c.l.b16 %v927
        %v2253 = vunpack.c.h.b16 %v927
        %v2254 = vunpack.c.l.b16 %v928
        %v2255 = vunpack.c.h.b16 %v928
        %v2256 = vunpack.c.l.b16 %v929
        %v2257 = vunpack.c.h.b16 %v929
        %v2258 = vunpack.c.l.b16 %v930
        %v2259 = vunpack.c.h.b16 %v930
        %v2260 = vunpack.c.l.b16 %v931
        %v2261 = vunpack.c.h.b16 %v931
        %v2262 = vunpack.c.l.b16 %v932
        %v2263 = vunpack.c.h.b16 %v932
        %v2264 = vunpack.c.l.b16 %v933
        %v2265 = vunpack.c.h.b16 %v933
        %v2266 = vunpack.c.l.b16 %v934
        %v2267 = vunpack.c.h.b16 %v934
        %v2268 = vunpack.c.l.b16 %v935
        %v2269 = vunpack.c.h.b16 %v935
        %v2270 = vunpack.c.l.b16 %v936
        %v2271 = vunpack.c.h.b16 %v936
        %v2272 = vunpack.c.l.b16 %v937
        %v2273 = vunpack.c.h.b16 %v937
        %v2274 = vunpack.c.l.b16 %v938
        %v2275 = vunpack.c.h.b16 %v938
        %v2276 = vunpack.c.l.b16 %v939
        %v2277 = vunpack.c.h.b16 %v939
        %v2278 = vunpack.c.l.b16 %v940
        %v2279 = vunpack.c.h.b16 %v940
        %v2280 = vunpack.c.l.b16 %v941
        %v2281 = vunpack.c.h.b16 %v941
        %v2282 = vunpack.c.l.b16 %v942
        %v2283 = vunpack.c.h.b16 %v942
        %v2284 = vunpack.c.l.b16 %v943
        %v2285 = vunpack.c.h.b16 %v943
        %v2286 = vunpack.c.l.b16 %v944
        %v2287 = vunpack.c.h.b16 %v944
        %v2288 = vunpack.c.l.b16 %v945
        %v2289 = vunpack.c.h.b16 %v945
        %v2290 = vunpack.c.l.b16 %v946
        %v2291 = vunpack.c.h.b16 %v946
        %v2292 = vunpack.c.l.b16 %v947
        %v2293 = vunpack.c.h.b16 %v947
        %v2294 = vunpack.c.l.b16 %v948
        %v2295 = vunpack.c.h.b16 %v948
        %v2296 = vunpack.c.l.b16 %v949
        %v2297 = vunpack.c.h.b16 %v949
        %v2298 = vunpack.c.l.b16 %v950
        %v2299 = vunpack.c.h.b16 %v950
        %v2300 = vunpack.c.l.b16 %v951
        %v2301 = vunpack.c.h.b16 %v951
        %v2302 = vunpack.c.l.b16 %v952
        %v2303 = vunpack.c.h.b16 %v952
        %v2304 = vunpack.c.l.b16 %v953
        %v2305 = vunpack.c.h.b16 %v953
        %v2306 = vunpack.c.l.b16 %v954
        %v2307 = vunpack.c.h.b16 %v954
        %v2308 = vunpack.c.l.b16 %v955
        %v2309 = vunpack.c.h.b16 %v955
        %v2310 = vunpack.c.l.b16 %v956
        %v2311 = vunpack.c.h.b16 %v956
        %v2312 = vunpack.c.l.b16 %v957
        %v2313 = vunpack.c.h.b16 %v957
        %v2314 = vunpack.c.l.b16 %v958
        %v2315 = vunpack.c.h.b16 %v958
        %v2316 = vunpack.c.l.b16 %v959
        %v2317 = vunpack.c.h.b16 %v959
        %v2318 = vunpack.c.l.b16 %v960
        %v2319 = vunpack.c.h.b16 %v960
        %v2320 = vunpack.c.l.b16 %v961
        %v2321 = vunpack.c.h.b16 %v961
        %v2322 = vunpack.c.l.b16 %v962
        %v2323 = vunpack.c.h.b16 %v962
        %v2324 = vunpack.c.l.b16 %v963
        %v2325 = vunpack.c.h.b16 %v963
        %v2326 = vunpack.c.l.b16 %v964
        %v2327 = vunpack.c.h.b16 %v964
        %v2328 = vunpack.c.l.b16 %v965
        %v2329 = vunpack.c.h.b16 %v965
        %v2330 = vunpack.c.l.b16 %v966
        %v2331 = vunpack.c.h.b16 %v966
        %v2332 = vunpack.c.l.b16 %v967
        %v2333 = vunpack.c.h.b16 %v967
        %v2334 = vunpack.c.l.b16 %v968
        %v2335 = vunpack.c.h.b16 %v968
        %v2336 = vunpack.c.l.b16 %v969
        %v2337 = vunpack.c.h.b16 %v969
        %v2338 = vunpack.c.l.b16 %v970
        %v2339 = vunpack.c.h.b16 %v970
        %v2340 = vunpack.c.l.b16 %v971
        %v2341 = vunpack.c.h.b16 %v971
        %v2342 = vunpack.c.l.b16 %v972
        %v2343 = vunpack.c.h.b16 %v972
        %v2344 = vunpack.c.l.b16 %v973
        %v2345 = vunpack.c.h.b16 %v973
        %v2346 = vunpack.c.l.b16 %v974
        %v2347 = vunpack.c.h.b16 %v974
        %v2348 = vunpack.c.l.b16 %v975
        %v2349 = vunpack.c.h.b16 %v975
        %v2350 = vunpack.c.l.b16 %v976
        %v2351 = vunpack.c.h.b16 %v976
        %v2352 = vunpack.c.l.b16 %v977
        %v2353 = vunpack.c.h.b16 %v977
        %v2354 = vunpack.c.l.b16 %v978
        %v2355 = vunpack.c.h.b16 %v978
        %v2356 = vunpack.c.l.b16 %v979
        %v2357 = vunpack.c.h.b16 %v979
        %v2358 = vunpack.c.l.b16 %v980
        %v2359 = vunpack.c.h.b16 %v980
        %v2360 = vunpack.c.l.b16 %v981
        %v2361 = vunpack.c.h.b16 %v981
        %v2362 = vunpack.c.l.b16 %v982
        %v2363 = vunpack.c.h.b16 %v982
        %v2364 = vunpack.c.l.b16 %v983
        %v2365 = vunpack.c.h.b16 %v983
        %v2366 = vunpack.c.l.b16 %v984
        %v2367 = vunpack.c.h.b16 %v984
        %v2368 = vunpack.c.l.b16 %v985
        %v2369 = vunpack.c.h.b16 %v985
        %v2370 = vunpack.c.l.b16 %v986
        %v2371 = vunpack.c.h.b16 %v986
        %v2372 = vunpack.c.l.b16 %v987
        %v2373 = vunpack.c.h.b16 %v987
        %v2374 = vunpack.c.l.b16 %v988
        %v2375 = vunpack.c.h.b16 %v988
        %v2376 = vunpack.c.l.b16 %v989
        %v2377 = vunpack.c.h.b16 %v989
        %v2378 = vunpack.c.l.b16 %v990
        %v2379 = vunpack.c.h.b16 %v990
        %v2380 = vunpack.c.l.b16 %v991
        %v2381 = vunpack.c.h.b16 %v991
        %v2382 = vunpack.c.l.b16 %v992
        %v2383 = vunpack.c.h.b16 %v992
        %v2384 = vunpack.c.l.b16 %v993
        %v2385 = vunpack.c.h.b16 %v993
        %v2386 = vunpack.c.l.b16 %v994
        %v2387 = vunpack.c.h.b16 %v994
        %v2388 = vunpack.c.l.b16 %v995
        %v2389 = vunpack.c.h.b16 %v995
        %v2390 = vunpack.c.l.b16 %v996
        %v2391 = vunpack.c.h.b16 %v996
        %v2392 = vunpack.c.l.b16 %v997
        %v2393 = vunpack.c.h.b16 %v997
        %v2394 = vunpack.c.l.b16 %v998
        %v2395 = vunpack.c.h.b16 %v998
        %v2396 = vunpack.c.l.b16 %v999
        %v2397 = vunpack.c.h.b16 %v999
        %v2398 = vunpack.c.l.b16 %v1000
        %v2399 = vunpack.c.h.b16 %v1000
        %v2400 = vunpack.c.l.b16 %v1001
        %v2401 = vunpack.c.h.b16 %v1001
        %v2402 = vunpack.c.l.b16 %v1002
        %v2403 = vunpack.c.h.b16 %v1002
        %v2404 = vunpack.c.l.b16 %v1003
        %v2405 = vunpack.c.h.b16 %v1003
        %v2406 = vunpack.c.l.b16 %v1004
        %v2407 = vunpack.c.h.b16 %v1004
        %v2408 = vunpack.c.l.b16 %v1005
        %v2409 = vunpack.c.h.b16 %v1005
        %v2410 = vunpack.c.l.b16 %v1006
        %v2411 = vunpack.c.h.b16 %v1006
        %v2412 = vunpack.c.l.b16 %v1007
        %v2413 = vunpack.c.h.b16 %v1007
        %v2414 = vunpack.c.l.b16 %v1008
        %v2415 = vunpack.c.h.b16 %v1008
        %v2416 = vunpack.c.l.b16 %v1009
        %v2417 = vunpack.c.h.b16 %v1009
        %v2418 = vunpack.c.l.b16 %v1010
        %v2419 = vunpack.c.h.b16 %v1010
        %v2420 = vunpack.c.l.b16 %v1011
        %v2421 = vunpack.c.h.b16 %v1011
        %v2422 = vunpack.c.l.b16 %v1012
        %v2423 = vunpack.c.h.b16 %v1012
        %v2424 = vunpack.c.l.b16 %v1013
        %v2425 = vunpack.c.h.b16 %v1013
        %v2426 = vunpack.c.l.b16 %v1014
        %v2427 = vunpack.c.h.b16 %v1014
        %v2428 = vunpack.c.l.b16 %v1015
        %v2429 = vunpack.c.h.b16 %v1015
        %v2430 = vunpack.c.l.b16 %v1016
        %v2431 = vunpack.c.h.b16 %v1016
        %v2432 = vunpack.c.l.b16 %v1017
        %v2433 = vunpack.c.h.b16 %v1017
        %v2434 = vunpack.c.l.b16 %v1018
        %v2435 = vunpack.c.h.b16 %v1018
        %v2436 = vunpack.c.l.b16 %v1019
        %v2437 = vunpack.c.h.b16 %v1019
        %v2438 = vunpack.c.l.b16 %v1020
        %v2439 = vunpack.c.h.b16 %v1020
        %v2440 = vunpack.c.l.b16 %v1021
        %v2441 = vunpack.c.h.b16 %v1021
        %v2442 = vunpack.c.l.b16 %v1022
        %v2443 = vunpack.c.h.b16 %v1022
        %v2444 = vunpack.c.l.b16 %v1023
        %v2445 = vunpack.c.h.b16 %v1023
        %v2446 = vunpack.c.l.b16 %v1024
        %v2447 = vunpack.c.h.b16 %v1024
        %v2448 = vunpack.c.l.b16 %v1025
        %v2449 = vunpack.c.h.b16 %v1025
        %v2450 = vunpack.c.l.b16 %v1026
        %v2451 = vunpack.c.h.b16 %v1026
        %v2452 = vunpack.c.l.b16 %v1027
        %v2453 = vunpack.c.h.b16 %v1027
        %v2454 = vunpack.c.l.b16 %v1028
        %v2455 = vunpack.c.h.b16 %v1028
        %v2456 = vunpack.c.l.b16 %v1029
        %v2457 = vunpack.c.h.b16 %v1029
        %v2458 = vunpack.c.l.b16 %v1030
        %v2459 = vunpack.c.h.b16 %v1030
        %v2460 = vunpack.c.l.b16 %v1031
        %v2461 = vunpack.c.h.b16 %v1031
        %v2462 = vunpack.c.l.b16 %v1032
        %v2463 = vunpack.c.h.b16 %v1032
        %v2464 = vunpack.c.l.b16 %v1033
        %v2465 = vunpack.c.h.b16 %v1033
        %v2466 = vunpack.c.l.b16 %v1034
        %v2467 = vunpack.c.h.b16 %v1034
        %v2468 = vunpack.c.l.b16 %v1035
        %v2469 = vunpack.c.h.b16 %v1035
        %v2470 = vunpack.c.l.b16 %v1036
        %v2471 = vunpack.c.h.b16 %v1036
        %v2472 = vunpack.c.l.b16 %v1037
        %v2473 = vunpack.c.h.b16 %v1037
        %v2474 = vunpack.c.l.b16 %v1038
        %v2475 = vunpack.c.h.b16 %v1038
        %v2476 = vunpack.c.l.b16 %v1039
        %v2477 = vunpack.c.h.b16 %v1039
        %v2478 = vunpack.c.l.b16 %v1040
        %v2479 = vunpack.c.h.b16 %v1040
        %v2480 = vunpack.c.l.b16 %v1041
        %v2481 = vunpack.c.h.b16 %v1041
        %v2482 = vunpack.c.l.b16 %v1042
        %v2483 = vunpack.c.h.b16 %v1042
        %v2484 = vunpack.c.l.b16 %v1043
        %v2485 = vunpack.c.h.b16 %v1043
        %v2486 = vunpack.c.l.b16 %v1044
        %v2487 = vunpack.c.h.b16 %v1044
        %v2488 = vunpack.c.l.b16 %v1045
        %v2489 = vunpack.c.h.b16 %v1045
        %v2490 = vunpack.c.l.b16 %v1046
        %v2491 = vunpack.c.h.b16 %v1046
        %v2492 = vunpack.c.l.b16 %v1047
        %v2493 = vunpack.c.h.b16 %v1047
        %v2494 = vunpack.c.l.b16 %v1048
        %v2495 = vunpack.c.h.b16 %v1048
        %v2496 = vunpack.c.l.b16 %v1049
        %v2497 = vunpack.c.h.b16 %v1049
        %v2498 = vunpack.c.l.b16 %v1050
        %v2499 = vunpack.c.h.b16 %v1050
        %v2500 = vunpack.c.l.b16 %v1051
        %v2501 = vunpack.c.h.b16 %v1051
        %v2502 = vunpack.c.l.b16 %v1052
        %v2503 = vunpack.c.h.b16 %v1052
        %v2504 = vunpack.c.l.b16 %v1053
        %v2505 = vunpack.c.h.b16 %v1053
        %v2506 = vunpack.c.l.b16 %v1054
        %v2507 = vunpack.c.h.b16 %v1054
        %v2508 = vunpack.c.l.b16 %v1055
        %v2509 = vunpack.c.h.b16 %v1055
        %v2510 = vunpack.c.l.b16 %v1056
        %v2511 = vunpack.c.h.b16 %v1056
        %v2512 = vunpack.c.l.b16 %v1057
        %v2513 = vunpack.c.h.b16 %v1057
        %v2514 = vunpack.c.l.b16 %v1058
        %v2515 = vunpack.c.h.b16 %v1058
        %v2516 = vunpack.c.l.b16 %v1059
        %v2517 = vunpack.c.h.b16 %v1059
        %v2518 = vunpack.c.l.b16 %v1060
        %v2519 = vunpack.c.h.b16 %v1060
        %v2520 = vunpack.c.l.b16 %v1061
        %v2521 = vunpack.c.h.b16 %v1061
        %v2522 = vunpack.c.l.b16 %v1062
        %v2523 = vunpack.c.h.b16 %v1062
        %v2524 = vunpack.c.l.b16 %v1063
        %v2525 = vunpack.c.h.b16 %v1063
        %v2526 = vunpack.c.l.b16 %v1064
        %v2527 = vunpack.c.h.b16 %v1064
        %v2528 = vunpack.c.l.b16 %v1065
        %v2529 = vunpack.c.h.b16 %v1065
        %v2530 = vunpack.c.l.b16 %v1066
        %v2531 = vunpack.c.h.b16 %v1066
        %v2532 = vunpack.c.l.b16 %v1067
        %v2533 = vunpack.c.h.b16 %v1067
        %v2534 = vunpack.c.l.b16 %v1068
        %v2535 = vunpack.c.h.b16 %v1068
        %v2536 = vunpack.c.l.b16 %v1069
        %v2537 = vunpack.c.h.b16 %v1069
        %v2538 = vunpack.c.l.b16 %v1070
        %v2539 = vunpack.c.h.b16 %v1070
        %v2540 = vunpack.c.l.b16 %v1071
        %v2541 = vunpack.c.h.b16 %v1071
        %v2542 = vunpack.c.l.b16 %v1072
        %v2543 = vunpack.c.h.b16 %v1072
        %v2544 = vunpack.c.l.b16 %v1073
        %v2545 = vunpack.c.h.b16 %v1073
        %v2546 = vunpack.c.l.b16 %v1074
        %v2547 = vunpack.c.h.b16 %v1074
        %v2548 = vunpack.c.l.b16 %v1075
        %v2549 = vunpack.c.h.b16 %v1075
        %v2550 = vunpack.c.l.b16 %v1076
        %v2551 = vunpack.c.h.b16 %v1076
        %v2552 = vunpack.c.l.b16 %v1077
        %v2553 = vunpack.c.h.b16 %v1077
        %v2554 = vunpack.c.l.b16 %v1078
        %v2555 = vunpack.c.h.b16 %v1078
        %v2556 = vunpack.c.l.b16 %v1079
        %v2557 = vunpack.c.h.b16 %v1079
        %v2558 = vunpack.c.l.b16 %v1080
        %v2559 = vunpack.c.h.b16 %v1080
        %v2560 = vunpack.c.l.b16 %v1081
        %v2561 = vunpack.c.h.b16 %v1081
        %v2562 = vunpack.c.l.b16 %v1082
        %v2563 = vunpack.c.h.b16 %v1082
        %v2564 = vunpack.c.l.b16 %v1083
        %v2565 = vunpack.c.h.b16 %v1083
        %v2566 = vunpack.c.l.b16 %v1084
        %v2567 = vunpack.c.h.b16 %v1084
        %v2568 = vunpack.c.l.b16 %v1085
        %v2569 = vunpack.c.h.b16 %v1085
        %v2570 = vunpack.c.l.b16 %v1086
        %v2571 = vunpack.c.h.b16 %v1086
        %v2572 = vunpack.c.l.b16 %v1087
        %v2573 = vunpack.c.h.b16 %v1087
        %v2574 = vunpack.c.l.b16 %v1088
        %v2575 = vunpack.c.h.b16 %v1088
        %v2576 = vunpack.c.l.b16 %v1089
        %v2577 = vunpack.c.h.b16 %v1089
        %v2578 = vunpack.c.l.b16 %v1090
        %v2579 = vunpack.c.h.b16 %v1090
        %v2580 = vunpack.c.l.b16 %v1091
        %v2581 = vunpack.c.h.b16 %v1091
        %v2582 = vunpack.c.l.b16 %v1092
        %v2583 = vunpack.c.h.b16 %v1092
        %v2584 = vunpack.c.l.b16 %v1093
        %v2585 = vunpack.c.h.b16 %v1093
        %v2586 = vunpack.c.l.b16 %v1094
        %v2587 = vunpack.c.h.b16 %v1094
        %v2588 = vunpack.c.l.b16 %v1095
        %v2589 = vunpack.c.h.b16 %v1095
        %v2590 = vunpack.c.l.b16 %v1096
        %v2591 = vunpack.c.h.b16 %v1096
        %v2592 = vunpack.c.l.b16 %v1097
        %v2593 = vunpack.c.h.b16 %v1097
        %v2594 = vunpack.c.l.b16 %v1098
        %v2595 = vunpack.c.h.b16 %v1098
        %v2596 = vunpack.c.l.b16 %v1099
        %v2597 = vunpack.c.h.b16 %v1099
        %v2598 = vunpack.c.l.b16 %v1100
        %v2599 = vunpack.c.h.b16 %v1100
        %v2600 = vunpack.c.l.b16 %v1101
        %v2601 = vunpack.c.h.b16 %v1101
        %v2602 = vunpack.c.l.b16 %v1102
        %v2603 = vunpack.c.h.b16 %v1102
        %v2604 = vunpack.c.l.b16 %v1103
        %v2605 = vunpack.c.h.b16 %v1103
        %v2606 = vunpack.c.l.b16 %v1104
        %v2607 = vunpack.c.h.b16 %v1104
        %v2608 = vunpack.c.l.b16 %v1105
        %v2609 = vunpack.c.h.b16 %v1105
        %v2610 = vunpack.c.l.b16 %v1106
        %v2611 = vunpack.c.h.b16 %v1106
        %v2612 = vunpack.c.l.b16 %v1107
        %v2613 = vunpack.c.h.b16 %v1107
        %v2614 = vunpack.c.l.b16 %v1108
        %v2615 = vunpack.c.h.b16 %v1108
        %v2616 = vunpack.c.l.b16 %v1109
        %v2617 = vunpack.c.h.b16 %v1109
        %v2618 = vunpack.c.l.b16 %v1110
        %v2619 = vunpack.c.h.b16 %v1110
        %v2620 = vunpack.c.l.b16 %v1111
        %v2621 = vunpack.c.h.b16 %v1111
        %v2622 = vunpack.c.l.b16 %v1112
        %v2623 = vunpack.c.h.b16 %v1112
        %v2624 = vunpack.c.l.b16 %v1113
        %v2625 = vunpack.c.h.b16 %v1113
        %v2626 = vunpack.c.l.b16 %v1114
        %v2627 = vunpack.c.h.b16 %v1114
        %v2628 = vunpack.c.l.b16 %v1115
        %v2629 = vunpack.c.h.b16 %v1115
        %v2630 = vunpack.c.l.b16 %v1116
        %v2631 = vunpack.c.h.b16 %v1116
        %v2632 = vunpack.c.l.b16 %v1117
        %v2633 = vunpack.c.h.b16 %v1117
        %v2634 = vunpack.c.l.b16 %v1118
        %v2635 = vunpack.c.h.b16 %v1118
        %v2636 = vunpack.c.l.b16 %v1119
        %v2637 = vunpack.c.h.b16 %v1119
        %v2638 = vunpack.c.l.b16 %v1120
        %v2639 = vunpack.c.h.b16 %v1120
        %v2640 = vunpack.c.l.b16 %v1121
        %v2641 = vunpack.c.h.b16 %v1121
        %v2642 = vunpack.c.l.b16 %v1122
        %v2643 = vunpack.c.h.b16 %v1122
        %v2644 = vunpack.c.l.b16 %v1123
        %v2645 = vunpack.c.h.b16 %v1123
        %v2646 = vunpack.c.l.b16 %v1124
        %v2647 = vunpack.c.h.b16 %v1124
        %v2648 = vunpack.c.l.b16 %v1125
        %v2649 = vunpack.c.h.b16 %v1125
        %v2650 = vunpack.c.l.b16 %v1126
        %v2651 = vunpack.c.h.b16 %v1126
        %v2652 = vunpack.c.l.b16 %v1127
        %v2653 = vunpack.c.h.b16 %v1127
        %v2654 = vunpack.c.l.b16 %v1128
        %v2655 = vunpack.c.h.b16 %v1128
        %v2656 = vunpack.c.l.b16 %v1129
        %v2657 = vunpack.c.h.b16 %v1129
        %v2658 = vunpack.c.l.b16 %v1130
        %v2659 = vunpack.c.h.b16 %v1130
        %v2660 = vunpack.c.l.b16 %v1131
        %v2661 = vunpack.c.h.b16 %v1131
        %v2662 = vunpack.c.l.b16 %v1132
        %v2663 = vunpack.c.h.b16 %v1132
        %v2664 = vunpack.c.l.b16 %v1133
        %v2665 = vunpack.c.h.b16 %v1133
        %v2666 = vunpack.c.l.b16 %v1134
        %v2667 = vunpack.c.h.b16 %v1134
        %v2668 = vunpack.c.l.b16 %v1135
        %v2669 = vunpack.c.h.b16 %v1135
        %v2670 = vunpack.c.l.b16 %v1136
        %v2671 = vunpack.c.h.b16 %v1136
        %v2672 = vunpack.c.l.b16 %v1137
        %v2673 = vunpack.c.h.b16 %v1137
        %v2674 = vunpack.c.l.b16 %v1138
        %v2675 = vunpack.c.h.b16 %v1138
        %v2676 = vunpack.c.l.b16 %v1139
        %v2677 = vunpack.c.h.b16 %v1139
        %v2678 = vunpack.c.l.b16 %v1140
        %v2679 = vunpack.c.h.b16 %v1140
        %v2680 = vunpack.c.l.b16 %v1141
        %v2681 = vunpack.c.h.b16 %v1141
        %v2682 = vunpack.c.l.b16 %v1142
        %v2683 = vunpack.c.h.b16 %v1142
        %v2684 = vunpack.c.l.b16 %v1143
        %v2685 = vunpack.c.h.b16 %v1143
        %v2686 = vunpack.c.l.b16 %v1144
        %v2687 = vunpack.c.h.b16 %v1144
        %v2688 = vunpack.c.l.b16 %v1145
        %v2689 = vunpack.c.h.b16 %v1145
        %v2690 = vunpack.c.l.b16 %v1146
        %v2691 = vunpack.c.h.b16 %v1146
        %v2692 = vunpack.c.l.b16 %v1147
        %v2693 = vunpack.c.h.b16 %v1147
        %v2694 = vunpack.c.l.b16 %v1148
        %v2695 = vunpack.c.h.b16 %v1148
        %v2696 = vunpack.c.l.b16 %v1149
        %v2697 = vunpack.c.h.b16 %v1149
        %v2698 = vunpack.c.l.b16 %v1150
        %v2699 = vunpack.c.h.b16 %v1150
        %v2700 = vunpack.c.l.b16 %v1151
        %v2701 = vunpack.c.h.b16 %v1151
        %v2702 = vunpack.c.l.b16 %v1152
        %v2703 = vunpack.c.h.b16 %v1152
        %v2704 = vunpack.c.l.b16 %v1153
        %v2705 = vunpack.c.h.b16 %v1153
        %v2706 = vunpack.c.l.b16 %v1154
        %v2707 = vunpack.c.h.b16 %v1154
        %v2708 = vunpack.c.l.b16 %v1155
        %v2709 = vunpack.c.h.b16 %v1155
        %v2710 = vunpack.c.l.b16 %v1156
        %v2711 = vunpack.c.h.b16 %v1156
        %v2712 = vunpack.c.l.b16 %v1157
        %v2713 = vunpack.c.h.b16 %v1157
        %v2714 = vunpack.c.l.b16 %v1158
        %v2715 = vunpack.c.h.b16 %v1158
        %v2716 = vunpack.c.l.b16 %v1159
        %v2717 = vunpack.c.h.b16 %v1159
        %v2718 = vunpack.c.l.b16 %v1160
        %v2719 = vunpack.c.h.b16 %v1160
        %v2720 = vunpack.c.l.b16 %v1161
        %v2721 = vunpack.c.h.b16 %v1161
        %v2722 = vunpack.c.l.b16 %v1162
        %v2723 = vunpack.c.h.b16 %v1162
        %v2724 = vunpack.c.l.b16 %v1163
        %v2725 = vunpack.c.h.b16 %v1163
        %v2726 = vunpack.c.l.b16 %v1164
        %v2727 = vunpack.c.h.b16 %v1164
        %v2728 = vunpack.c.l.b16 %v1165
        %v2729 = vunpack.c.h.b16 %v1165
        %v2730 = vunpack.c.l.b16 %v1166
        %v2731 = vunpack.c.h.b16 %v1166
        %v2732 = vunpack.c.l.b16 %v1167
        %v2733 = vunpack.c.h.b16 %v1167
        %v2734 = vunpack.c.l.b16 %v1168
        %v2735 = vunpack.c.h.b16 %v1168
        %v2736 = vunpack.c.l.b16 %v1169
        %v2737 = vunpack.c.h.b16 %v1169
        %v2738 = vunpack.c.l.b16 %v1170
        %v2739 = vunpack.c.h.b16 %v1170
        %v2740 = vunpack.c.l.b16 %v1171
        %v2741 = vunpack.c.h.b16 %v1171
        %v2742 = vunpack.c.l.b16 %v1172
        %v2743 = vunpack.c.h.b16 %v1172
        %v2744 = vunpack.c.l.b16 %v1173
        %v2745 = vunpack.c.h.b16 %v1173
        %v2746 = vunpack.c.l.b16 %v1174
        %v2747 = vunpack.c.h.b16 %v1174
        %v2748 = vunpack.c.l.b16 %v1175
        %v2749 = vunpack.c.h.b16 %v1175
        %v2750 = vunpack.c.l.b16 %v1176
        %v2751 = vunpack.c.h.b16 %v1176
        %v2752 = vunpack.c.l.b16 %v1177
        %v2753 = vunpack.c.h.b16 %v1177
        %v2754 = vunpack.c.l.b16 %v1178
        %v2755 = vunpack.c.h.b16 %v1178
        %v2756 = vunpack.c.l.b16 %v1179
        %v2757 = vunpack.c.h.b16 %v1179
        %v2758 = vunpack.c.l.b16 %v1180
        %v2759 = vunpack.c.h.b16 %v1180
        %v2760 = vunpack.c.l.b16 %v1181
        %v2761 = vunpack.c.h.b16 %v1181
        %v2762 = vunpack.c.l.b16 %v1182
        %v2763 = vunpack.c.h.b16 %v1182
        %v2764 = vunpack.c.l.b16 %v1183
        %v2765 = vunpack.c.h.b16 %v1183
        %v2766 = vunpack.c.l.b16 %v1184
        %v2767 = vunpack.c.h.b16 %v1184
        %v2768 = vunpack.c.l.b16 %v1185
        %v2769 = vunpack.c.h.b16 %v1185
        %v2770 = vunpack.c.l.b16 %v1186
        %v2771 = vunpack.c.h.b16 %v1186
        %v2772 = vunpack.c.l.b16 %v1187
        %v2773 = vunpack.c.h.b16 %v1187
        %v2774 = vunpack.c.l.b16 %v1188
        %v2775 = vunpack.c.h.b16 %v1188
        %v2776 = vunpack.c.l.b16 %v1189
        %v2777 = vunpack.c.h.b16 %v1189
        %v2778 = vunpack.c.l.b16 %v1190
        %v2779 = vunpack.c.h.b16 %v1190
        %v2780 = vunpack.c.l.b16 %v1191
        %v2781 = vunpack.c.h.b16 %v1191
        %v2782 = vunpack.c.l.b16 %v1192
        %v2783 = vunpack.c.h.b16 %v1192
        %v2784 = vunpack.c.l.b16 %v1193
        %v2785 = vunpack.c.h.b16 %v1193
        %v2786 = vunpack.c.l.b16 %v1194
        %v2787 = vunpack.c.h.b16 %v1194
        %v2788 = vunpack.c.l.b16 %v1195
        %v2789 = vunpack.c.h.b16 %v1195
        %v2790 = vunpack.c.l.b16 %v1196
        %v2791 = vunpack.c.h.b16 %v1196
        %v2792 = vunpack.c.l.b16 %v1197
        %v2793 = vunpack.c.h.b16 %v1197
        %v2794 = vunpack.c.l.b16 %v1198
        %v2795 = vunpack.c.h.b16 %v1198
        %v2796 = vunpack.c.l.b16 %v1199
        %v2797 = vunpack.c.h.b16 %v1199
        %v2798 = vunpack.c.l.b16 %v1200
        %v2799 = vunpack.c.h.b16 %v1200
        %v2800 = vunpack.c.l.b16 %v1201
        %v2801 = vunpack.c.h.b16 %v1201
        %v2802 = vunpack.c.l.b16 %v1202
        %v2803 = vunpack.c.h.b16 %v1202
        %v2804 = vunpack.c.l.b16 %v1203
        %v2805 = vunpack.c.h.b16 %v1203
        %v2806 = vunpack.c.l.b16 %v1204
        %v2807 = vunpack.c.h.b16 %v1204
        %v2808 = vunpack.c.l.b16 %v1205
        %v2809 = vunpack.c.h.b16 %v1205
        %v2810 = vunpack.c.l.b16 %v1206
        %v2811 = vunpack.c.h.b16 %v1206
        %v2812 = vunpack.c.l.b16 %v1207
        %v2813 = vunpack.c.h.b16 %v1207
        %v2814 = vunpack.c.l.b16 %v1208
        %v2815 = vunpack.c.h.b16 %v1208
        %v2816 = vunpack.c.l.b16 %v1209
        %v2817 = vunpack.c.h.b16 %v1209
        %v2818 = vunpack.c.l.b16 %v1210
        %v2819 = vunpack.c.h.b16 %v1210
        %v2820 = vunpack.c.l.b16 %v1211
        %v2821 = vunpack.c.h.b16 %v1211
        %v2822 = vunpack.c.l.b16 %v1212
        %v2823 = vunpack.c.h.b16 %v1212
        %v2824 = vunpack.c.l.b16 %v1213
        %v2825 = vunpack.c.h.b16 %v1213
        %v2826 = vunpack.c.l.b16 %v1214
        %v2827 = vunpack.c.h.b16 %v1214
        %v2828 = vunpack.c.l.b16 %v1215
        %v2829 = vunpack.c.h.b16 %v1215
        %v2830 = vunpack.c.l.b16 %v1216
        %v2831 = vunpack.c.h.b16 %v1216
        %v2832 = vunpack.c.l.b16 %v1217
        %v2833 = vunpack.c.h.b16 %v1217
        %v2834 = vpack.c.b16 %v1818, %v1810
        %v2835 = vpack.c.b16 %v1819, %v1811
        %v2836 = vpack.c.b16 %v1820, %v1812
        %v2837 = vpack.c.b16 %v1821, %v1813
        %v2838 = vpack.c.b16 %v1822, %v1814
        %v2839 = vpack.c.b16 %v1823, %v1815
        %v2840 = vpack.c.b16 %v1824, %v1816
        %v2841 = vpack.c.b16 %v1825, %v1817
        %v2842 = vpack.c.b16 %v1834, %v1826
        %v2843 = vpack.c.b16 %v1835, %v1827
        %v2844 = vpack.c.b16 %v1836, %v1828
        %v2845 = vpack.c.b16 %v1837, %v1829
        %v2846 = vpack.c.b16 %v1838, %v1830
        %v2847 = vpack.c.b16 %v1839, %v1831
        %v2848 = vpack.c.b16 %v1840, %v1832
        %v2849 = vpack.c.b16 %v1841, %v1833
        %v2850 = vpack.c.b16 %v1850, %v1842
        %v2851 = vpack.c.b16 %v1851, %v1843
        %v2852 = vpack.c.b16 %v1852, %v1844
        %v2853 = vpack.c.b16 %v1853, %v1845
        %v2854 = vpack.c.b16 %v1854, %v1846
        %v2855 = vpack.c.b16 %v1855, %v1847
        %v2856 = vpack.c.b16 %v1856, %v1848
        %v2857 = vpack.c.b16 %v1857, %v1849
        %v2858 = vpack.c.b16 %v1866, %v1858
        %v2859 = vpack.c.b16 %v1867, %v1859
        %v2860 = vpack.c.b16 %v1868, %v1860
        %v2861 = vpack.c.b16 %v1869, %v1861
        %v2862 = vpack.c.b16 %v1870, %v1862
        %v2863 = vpack.c.b16 %v1871, %v1863
        %v2864 = vpack.c.b16 %v1872, %v1864
        %v2865 = vpack.c.b16 %v1873, %v1865
        %v2866 = vpack.c.b16 %v1882, %v1874
        %v2867 = vpack.c.b16 %v1883, %v1875
        %v2868 = vpack.c.b16 %v1884, %v1876
        %v2869 = vpack.c.b16 %v1885, %v1877
        %v2870 = vpack.c.b16 %v1886, %v1878
        %v2871 = vpack.c.b16 %v1887, %v1879
        %v2872 = vpack.c.b16 %v1888, %v1880
        %v2873 = vpack.c.b16 %v1889, %v1881
        %v2874 = vpack.c.b16 %v1898, %v1890
        %v2875 = vpack.c.b16 %v1899, %v1891
        %v2876 = vpack.c.b16 %v1900, %v1892
        %v2877 = vpack.c.b16 %v1901, %v1893
        %v2878 = vpack.c.b16 %v1902, %v1894
        %v2879 = vpack.c.b16 %v1903, %v1895
        %v2880 = vpack.c.b16 %v1904, %v1896
        %v2881 = vpack.c.b16 %v1905, %v1897
        %v2882 = vpack.c.b16 %v1914, %v1906
        %v2883 = vpack.c.b16 %v1915, %v1907
        %v2884 = vpack.c.b16 %v1916, %v1908
        %v2885 = vpack.c.b16 %v1917, %v1909
        %v2886 = vpack.c.b16 %v1918, %v1910
        %v2887 = vpack.c.b16 %v1919, %v1911
        %v2888 = vpack.c.b16 %v1920, %v1912
        %v2889 = vpack.c.b16 %v1921, %v1913
        %v2890 = vpack.c.b16 %v1930, %v1922
        %v2891 = vpack.c.b16 %v1931, %v1923
        %v2892 = vpack.c.b16 %v1932, %v1924
        %v2893 = vpack.c.b16 %v1933, %v1925
        %v2894 = vpack.c.b16 %v1934, %v1926
        %v2895 = vpack.c.b16 %v1935, %v1927
        %v2896 = vpack.c.b16 %v1936, %v1928
        %v2897 = vpack.c.b16 %v1937, %v1929
        %v2898 = vpack.c.b16 %v1946, %v1938
        %v2899 = vpack.c.b16 %v1947, %v1939
        %v2900 = vpack.c.b16 %v1948, %v1940
        %v2901 = vpack.c.b16 %v1949, %v1941
        %v2902 = vpack.c.b16 %v1950, %v1942
        %v2903 = vpack.c.b16 %v1951, %v1943
        %v2904 = vpack.c.b16 %v1952, %v1944
        %v2905 = vpack.c.b16 %v1953, %v1945
        %v2906 = vpack.c.b16 %v1962, %v1954
        %v2907 = vpack.c.b16 %v1963, %v1955
        %v2908 = vpack.c.b16 %v1964, %v1956
        %v2909 = vpack.c.b16 %v1965, %v1957
        %v2910 = vpack.c.b16 %v1966, %v1958
        %v2911 = vpack.c.b16 %v1967, %v1959
        %v2912 = vpack.c.b16 %v1968, %v1960
        %v2913 = vpack.c.b16 %v1969, %v1961
        %v2914 = vpack.c.b16 %v1978, %v1970
        %v2915 = vpack.c.b16 %v1979, %v1971
        %v2916 = vpack.c.b16 %v1980, %v1972
        %v2917 = vpack.c.b16 %v1981, %v1973
        %v2918 = vpack.c.b16 %v1982, %v1974
        %v2919 = vpack.c.b16 %v1983, %v1975
        %v2920 = vpack.c.b16 %v1984, %v1976
        %v2921 = vpack.c.b16 %v1985, %v1977
        %v2922 = vpack.c.b16 %v1994, %v1986
        %v2923 = vpack.c.b16 %v1995, %v1987
        %v2924 = vpack.c.b16 %v1996, %v1988
        %v2925 = vpack.c.b16 %v1997, %v1989
        %v2926 = vpack.c.b16 %v1998, %v1990
        %v2927 = vpack.c.b16 %v1999, %v1991
        %v2928 = vpack.c.b16 %v2000, %v1992
        %v2929 = vpack.c.b16 %v2001, %v1993
        %v2930 = vpack.c.b16 %v2010, %v2002
        %v2931 = vpack.c.b16 %v2011, %v2003
        %v2932 = vpack.c.b16 %v2012, %v2004
        %v2933 = vpack.c.b16 %v2013, %v2005
        %v2934 = vpack.c.b16 %v2014, %v2006
        %v2935 = vpack.c.b16 %v2015, %v2007
        %v2936 = vpack.c.b16 %v2016, %v2008
        %v2937 = vpack.c.b16 %v2017, %v2009
        %v2938 = vpack.c.b16 %v2026, %v2018
        %v2939 = vpack.c.b16 %v2027, %v2019
        %v2940 = vpack.c.b16 %v2028, %v2020
        %v2941 = vpack.c.b16 %v2029, %v2021
        %v2942 = vpack.c.b16 %v2030, %v2022
        %v2943 = vpack.c.b16 %v2031, %v2023
        %v2944 = vpack.c.b16 %v2032, %v2024
        %v2945 = vpack.c.b16 %v2033, %v2025
        %v2946 = vpack.c.b16 %v2042, %v2034
        %v2947 = vpack.c.b16 %v2043, %v2035
        %v2948 = vpack.c.b16 %v2044, %v2036
        %v2949 = vpack.c.b16 %v2045, %v2037
        %v2950 = vpack.c.b16 %v2046, %v2038
        %v2951 = vpack.c.b16 %v2047, %v2039
        %v2952 = vpack.c.b16 %v2048, %v2040
        %v2953 = vpack.c.b16 %v2049, %v2041
        %v2954 = vpack.c.b16 %v2058, %v2050
        %v2955 = vpack.c.b16 %v2059, %v2051
        %v2956 = vpack.c.b16 %v2060, %v2052
        %v2957 = vpack.c.b16 %v2061, %v2053
        %v2958 = vpack.c.b16 %v2062, %v2054
        %v2959 = vpack.c.b16 %v2063, %v2055
        %v2960 = vpack.c.b16 %v2064, %v2056
        %v2961 = vpack.c.b16 %v2065, %v2057
        %v2962 = vpack.c.b16 %v2074, %v2066
        %v2963 = vpack.c.b16 %v2075, %v2067
        %v2964 = vpack.c.b16 %v2076, %v2068
        %v2965 = vpack.c.b16 %v2077, %v2069
        %v2966 = vpack.c.b16 %v2078, %v2070
        %v2967 = vpack.c.b16 %v2079, %v2071
        %v2968 = vpack.c.b16 %v2080, %v2072
        %v2969 = vpack.c.b16 %v2081, %v2073
        %v2970 = vpack.c.b16 %v2090, %v2082
        %v2971 = vpack.c.b16 %v2091, %v2083
        %v2972 = vpack.c.b16 %v2092, %v2084
        %v2973 = vpack.c.b16 %v2093, %v2085
        %v2974 = vpack.c.b16 %v2094, %v2086
        %v2975 = vpack.c.b16 %v2095, %v2087
        %v2976 = vpack.c.b16 %v2096, %v2088
        %v2977 = vpack.c.b16 %v2097, %v2089
        %v2978 = vpack.c.b16 %v2106, %v2098
        %v2979 = vpack.c.b16 %v2107, %v2099
        %v2980 = vpack.c.b16 %v2108, %v2100
        %v2981 = vpack.c.b16 %v2109, %v2101
        %v2982 = vpack.c.b16 %v2110, %v2102
        %v2983 = vpack.c.b16 %v2111, %v2103
        %v2984 = vpack.c.b16 %v2112, %v2104
        %v2985 = vpack.c.b16 %v2113, %v2105
        %v2986 = vpack.c.b16 %v2122, %v2114
        %v2987 = vpack.c.b16 %v2123, %v2115
        %v2988 = vpack.c.b16 %v2124, %v2116
        %v2989 = vpack.c.b16 %v2125, %v2117
        %v2990 = vpack.c.b16 %v2126, %v2118
        %v2991 = vpack.c.b16 %v2127, %v2119
        %v2992 = vpack.c.b16 %v2128, %v2120
        %v2993 = vpack.c.b16 %v2129, %v2121
        %v2994 = vpack.c.b16 %v2138, %v2130
        %v2995 = vpack.c.b16 %v2139, %v2131
        %v2996 = vpack.c.b16 %v2140, %v2132
        %v2997 = vpack.c.b16 %v2141, %v2133
        %v2998 = vpack.c.b16 %v2142, %v2134
        %v2999 = vpack.c.b16 %v2143, %v2135
        %v3000 = vpack.c.b16 %v2144, %v2136
        %v3001 = vpack.c.b16 %v2145, %v2137
        %v3002 = vpack.c.b16 %v2154, %v2146
        %v3003 = vpack.c.b16 %v2155, %v2147
        %v3004 = vpack.c.b16 %v2156, %v2148
        %v3005 = vpack.c.b16 %v2157, %v2149
        %v3006 = vpack.c.b16 %v2158, %v2150
        %v3007 = vpack.c.b16 %v2159, %v2151
        %v3008 = vpack.c.b16 %v2160, %v2152
        %v3009 = vpack.c.b16 %v2161, %v2153
        %v3010 = vpack.c.b16 %v2170, %v2162
        %v3011 = vpack.c.b16 %v2171, %v2163
        %v3012 = vpack.c.b16 %v2172, %v2164
        %v3013 = vpack.c.b16 %v2173, %v2165
        %v3014 = vpack.c.b16 %v2174, %v2166
        %v3015 = vpack.c.b16 %v2175, %v2167
        %v3016 = vpack.c.b16 %v2176, %v2168
        %v3017 = vpack.c.b16 %v2177, %v2169
        %v3018 = vpack.c.b16 %v2186, %v2178
        %v3019 = vpack.c.b16 %v2187, %v2179
        %v3020 = vpack.c.b16 %v2188, %v2180
        %v3021 = vpack.c.b16 %v2189, %v2181
        %v3022 = vpack.c.b16 %v2190, %v2182
        %v3023 = vpack.c.b16 %v2191, %v2183
        %v3024 = vpack.c.b16 %v2192, %v2184
        %v3025 = vpack.c.b16 %v2193, %v2185
        %v3026 = vpack.c.b16 %v2202, %v2194
        %v3027 = vpack.c.b16 %v2203, %v2195
        %v3028 = vpack.c.b16 %v2204, %v2196
        %v3029 = vpack.c.b16 %v2205, %v2197
        %v3030 = vpack.c.b16 %v2206, %v2198
        %v3031 = vpack.c.b16 %v2207, %v2199
        %v3032 = vpack.c.b16 %v2208, %v2200
        %v3033 = vpack.c.b16 %v2209, %v2201
        %v3034 = vpack.c.b16 %v2218, %v2210
        %v3035 = vpack.c.b16 %v2219, %v2211
        %v3036 = vpack.c.b16 %v2220, %v2212
        %v3037 = vpack.c.b16 %v2221, %v2213
        %v3038 = vpack.c.b16 %v2222, %v2214
        %v3039 = vpack.c.b16 %v2223, %v2215
        %v3040 = vpack.c.b16 %v2224, %v2216
        %v3041 = vpack.c.b16 %v2225, %v2217
        %v3042 = vpack.c.b16 %v2234, %v2226
        %v3043 = vpack.c.b16 %v2235, %v2227
        %v3044 = vpack.c.b16 %v2236, %v2228
        %v3045 = vpack.c.b16 %v2237, %v2229
        %v3046 = vpack.c.b16 %v2238, %v2230
        %v3047 = vpack.c.b16 %v2239, %v2231
        %v3048 = vpack.c.b16 %v2240, %v2232
        %v3049 = vpack.c.b16 %v2241, %v2233
        %v3050 = vpack.c.b16 %v2250, %v2242
        %v3051 = vpack.c.b16 %v2251, %v2243
        %v3052 = vpack.c.b16 %v2252, %v2244
        %v3053 = vpack.c.b16 %v2253, %v2245
        %v3054 = vpack.c.b16 %v2254, %v2246
        %v3055 = vpack.c.b16 %v2255, %v2247
        %v3056 = vpack.c.b16 %v2256, %v2248
        %v3057 = vpack.c.b16 %v2257, %v2249
        %v3058 = vpack.c.b16 %v2266, %v2258
        %v3059 = vpack.c.b16 %v2267, %v2259
        %v3060 = vpack.c.b16 %v2268, %v2260
        %v3061 = vpack.c.b16 %v2269, %v2261
        %v3062 = vpack.c.b16 %v2270, %v2262
        %v3063 = vpack.c.b16 %v2271, %v2263
        %v3064 = vpack.c.b16 %v2272, %v2264
        %v3065 = vpack.c.b16 %v2273, %v2265
        %v3066 = vpack.c.b16 %v2282, %v2274
        %v3067 = vpack.c.b16 %v2283, %v2275
        %v3068 = vpack.c.b16 %v2284, %v2276
        %v3069 = vpack.c.b16 %v2285, %v2277
        %v3070 = vpack.c.b16 %v2286, %v2278
        %v3071 = vpack.c.b16 %v2287, %v2279
        %v3072 = vpack.c.b16 %v2288, %v2280
        %v3073 = vpack.c.b16 %v2289, %v2281
        %v3074 = vpack.c.b16 %v2298, %v2290
        %v3075 = vpack.c.b16 %v2299, %v2291
        %v3076 = vpack.c.b16 %v2300, %v2292
        %v3077 = vpack.c.b16 %v2301, %v2293
        %v3078 = vpack.c.b16 %v2302, %v2294
        %v3079 = vpack.c.b16 %v2303, %v2295
        %v3080 = vpack.c.b16 %v2304, %v2296
        %v3081 = vpack.c.b16 %v2305, %v2297
        %v3082 = vpack.c.b16 %v2314, %v2306
        %v3083 = vpack.c.b16 %v2315, %v2307
        %v3084 = vpack.c.b16 %v2316, %v2308
        %v3085 = vpack.c.b16 %v2317, %v2309
        %v3086 = vpack.c.b16 %v2318, %v2310
        %v3087 = vpack.c.b16 %v2319, %v2311
        %v3088 = vpack.c.b16 %v2320, %v2312
        %v3089 = vpack.c.b16 %v2321, %v2313
        %v3090 = vpack.c.b16 %v2330, %v2322
        %v3091 = vpack.c.b16 %v2331, %v2323
        %v3092 = vpack.c.b16 %v2332, %v2324
        %v3093 = vpack.c.b16 %v2333, %v2325
        %v3094 = vpack.c.b16 %v2334, %v2326
        %v3095 = vpack.c.b16 %v2335, %v2327
        %v3096 = vpack.c.b16 %v2336, %v2328
        %v3097 = vpack.c.b16 %v2337, %v2329
        %v3098 = vpack.c.b16 %v2346, %v2338
        %v3099 = vpack.c.b16 %v2347, %v2339
        %v3100 = vpack.c.b16 %v2348, %v2340
        %v3101 = vpack.c.b16 %v2349, %v2341
        %v3102 = vpack.c.b16 %v2350, %v2342
        %v3103 = vpack.c.b16 %v2351, %v2343
        %v3104 = vpack.c.b16 %v2352, %v2344
        %v3105 = vpack.c.b16 %v2353, %v2345
        %v3106 = vpack.c.b16 %v2362, %v2354
        %v3107 = vpack.c.b16 %v2363, %v2355
        %v3108 = vpack.c.b16 %v2364, %v2356
        %v3109 = vpack.c.b16 %v2365, %v2357
        %v3110 = vpack.c.b16 %v2366, %v2358
        %v3111 = vpack.c.b16 %v2367, %v2359
        %v3112 = vpack.c.b16 %v2368, %v2360
        %v3113 = vpack.c.b16 %v2369, %v2361
        %v3114 = vpack.c.b16 %v2378, %v2370
        %v3115 = vpack.c.b16 %v2379, %v2371
        %v3116 = vpack.c.b16 %v2380, %v2372
        %v3117 = vpack.c.b16 %v2381, %v2373
        %v3118 = vpack.c.b16 %v2382, %v2374
        %v3119 = vpack.c.b16 %v2383, %v2375
        %v3120 = vpack.c.b16 %v2384, %v2376
        %v3121 = vpack.c.b16 %v2385, %v2377
        %v3122 = vpack.c.b16 %v2394, %v2386
        %v3123 = vpack.c.b16 %v2395, %v2387
        %v3124 = vpack.c.b16 %v2396, %v2388
        %v3125 = vpack.c.b16 %v2397, %v2389
        %v3126 = vpack.c.b16 %v2398, %v2390
        %v3127 = vpack.c.b16 %v2399, %v2391
        %v3128 = vpack.c.b16 %v2400, %v2392
        %v3129 = vpack.c.b16 %v2401, %v2393
        %v3130 = vpack.c.b16 %v2410, %v2402
        %v3131 = vpack.c.b16 %v2411, %v2403
        %v3132 = vpack.c.b16 %v2412, %v2404
        %v3133 = vpack.c.b16 %v2413, %v2405
        %v3134 = vpack.c.b16 %v2414, %v2406
        %v3135 = vpack.c.b16 %v2415, %v2407
        %v3136 = vpack.c.b16 %v2416, %v2408
        %v3137 = vpack.c.b16 %v2417, %v2409
        %v3138 = vpack.c.b16 %v2426, %v2418
        %v3139 = vpack.c.b16 %v2427, %v2419
        %v3140 = vpack.c.b16 %v2428, %v2420
        %v3141 = vpack.c.b16 %v2429, %v2421
        %v3142 = vpack.c.b16 %v2430, %v2422
        %v3143 = vpack.c.b16 %v2431, %v2423
        %v3144 = vpack.c.b16 %v2432, %v2424
        %v3145 = vpack.c.b16 %v2433, %v2425
        %v3146 = vpack.c.b16 %v2442, %v2434
        %v3147 = vpack.c.b16 %v2443, %v2435
        %v3148 = vpack.c.b16 %v2444, %v2436
        %v3149 = vpack.c.b16 %v2445, %v2437
        %v3150 = vpack.c.b16 %v2446, %v2438
        %v3151 = vpack.c.b16 %v2447, %v2439
        %v3152 = vpack.c.b16 %v2448, %v2440
        %v3153 = vpack.c.b16 %v2449, %v2441
        %v3154 = vpack.c.b16 %v2458, %v2450
        %v3155 = vpack.c.b16 %v2459, %v2451
        %v3156 = vpack.c.b16 %v2460, %v2452
        %v3157 = vpack.c.b16 %v2461, %v2453
        %v3158 = vpack.c.b16 %v2462, %v2454
        %v3159 = vpack.c.b16 %v2463, %v2455
        %v3160 = vpack.c.b16 %v2464, %v2456
        %v3161 = vpack.c.b16 %v2465, %v2457
        %v3162 = vpack.c.b16 %v2474, %v2466
        %v3163 = vpack.c.b16 %v2475, %v2467
        %v3164 = vpack.c.b16 %v2476, %v2468
        %v3165 = vpack.c.b16 %v2477, %v2469
        %v3166 = vpack.c.b16 %v2478, %v2470
        %v3167 = vpack.c.b16 %v2479, %v2471
        %v3168 = vpack.c.b16 %v2480, %v2472
        %v3169 = vpack.c.b16 %v2481, %v2473
        %v3170 = vpack.c.b16 %v2490, %v2482
        %v3171 = vpack.c.b16 %v2491, %v2483
        %v3172 = vpack.c.b16 %v2492, %v2484
        %v3173 = vpack.c.b16 %v2493, %v2485
        %v3174 = vpack.c.b16 %v2494, %v2486
        %v3175 = vpack.c.b16 %v2495, %v2487
        %v3176 = vpack.c.b16 %v2496, %v2488
        %v3177 = vpack.c.b16 %v2497, %v2489
        %v3178 = vpack.c.b16 %v2506, %v2498
        %v3179 = vpack.c.b16 %v2507, %v2499
        %v3180 = vpack.c.b16 %v2508, %v2500
        %v3181 = vpack.c.b16 %v2509, %v2501
        %v3182 = vpack.c.b16 %v2510, %v2502
        %v3183 = vpack.c.b16 %v2511, %v2503
        %v3184 = vpack.c.b16 %v2512, %v2504
        %v3185 = vpack.c.b16 %v2513, %v2505
        %v3186 = vpack.c.b16 %v2522, %v2514
        %v3187 = vpack.c.b16 %v2523, %v2515
        %v3188 = vpack.c.b16 %v2524, %v2516
        %v3189 = vpack.c.b16 %v2525, %v2517
        %v3190 = vpack.c.b16 %v2526, %v2518
        %v3191 = vpack.c.b16 %v2527, %v2519
        %v3192 = vpack.c.b16 %v2528, %v2520
        %v3193 = vpack.c.b16 %v2529, %v2521
        %v3194 = vpack.c.b16 %v2538, %v2530
        %v3195 = vpack.c.b16 %v2539, %v2531
        %v3196 = vpack.c.b16 %v2540, %v2532
        %v3197 = vpack.c.b16 %v2541, %v2533
        %v3198 = vpack.c.b16 %v2542, %v2534
        %v3199 = vpack.c.b16 %v2543, %v2535
        %v3200 = vpack.c.b16 %v2544, %v2536
        %v3201 = vpack.c.b16 %v2545, %v2537
        %v3202 = vpack.c.b16 %v2554, %v2546
        %v3203 = vpack.c.b16 %v2555, %v2547
        %v3204 = vpack.c.b16 %v2556, %v2548
        %v3205 = vpack.c.b16 %v2557, %v2549
        %v3206 = vpack.c.b16 %v2558, %v2550
        %v3207 = vpack.c.b16 %v2559, %v2551
        %v3208 = vpack.c.b16 %v2560, %v2552
        %v3209 = vpack.c.b16 %v2561, %v2553
        %v3210 = vpack.c.b16 %v2570, %v2562
        %v3211 = vpack.c.b16 %v2571, %v2563
        %v3212 = vpack.c.b16 %v2572, %v2564
        %v3213 = vpack.c.b16 %v2573, %v2565
        %v3214 = vpack.c.b16 %v2574, %v2566
        %v3215 = vpack.c.b16 %v2575, %v2567
        %v3216 = vpack.c.b16 %v2576, %v2568
        %v3217 = vpack.c.b16 %v2577, %v2569
        %v3218 = vpack.c.b16 %v2586, %v2578
        %v3219 = vpack.c.b16 %v2587, %v2579
        %v3220 = vpack.c.b16 %v2588, %v2580
        %v3221 = vpack.c.b16 %v2589, %v2581
        %v3222 = vpack.c.b16 %v2590, %v2582
        %v3223 = vpack.c.b16 %v2591, %v2583
        %v3224 = vpack.c.b16 %v2592, %v2584
        %v3225 = vpack.c.b16 %v2593, %v2585
        %v3226 = vpack.c.b16 %v2602, %v2594
        %v3227 = vpack.c.b16 %v2603, %v2595
        %v3228 = vpack.c.b16 %v2604, %v2596
        %v3229 = vpack.c.b16 %v2605, %v2597
        %v3230 = vpack.c.b16 %v2606, %v2598
        %v3231 = vpack.c.b16 %v2607, %v2599
        %v3232 = vpack.c.b16 %v2608, %v2600
        %v3233 = vpack.c.b16 %v2609, %v2601
        %v3234 = vpack.c.b16 %v2618, %v2610
        %v3235 = vpack.c.b16 %v2619, %v2611
        %v3236 = vpack.c.b16 %v2620, %v2612
        %v3237 = vpack.c.b16 %v2621, %v2613
        %v3238 = vpack.c.b16 %v2622, %v2614
        %v3239 = vpack.c.b16 %v2623, %v2615
        %v3240 = vpack.c.b16 %v2624, %v2616
        %v3241 = vpack.c.b16 %v2625, %v2617
        %v3242 = vpack.c.b16 %v2634, %v2626
        %v3243 = vpack.c.b16 %v2635, %v2627
        %v3244 = vpack.c.b16 %v2636, %v2628
        %v3245 = vpack.c.b16 %v2637, %v2629
        %v3246 = vpack.c.b16 %v2638, %v2630
        %v3247 = vpack.c.b16 %v2639, %v2631
        %v3248 = vpack.c.b16 %v2640, %v2632
        %v3249 = vpack.c.b16 %v2641, %v2633
        %v3250 = vpack.c.b16 %v2650, %v2642
        %v3251 = vpack.c.b16 %v2651, %v2643
        %v3252 = vpack.c.b16 %v2652, %v2644
        %v3253 = vpack.c.b16 %v2653, %v2645
        %v3254 = vpack.c.b16 %v2654, %v2646
        %v3255 = vpack.c.b16 %v2655, %v2647
        %v3256 = vpack.c.b16 %v2656, %v2648
        %v3257 = vpack.c.b16 %v2657, %v2649
        %v3258 = vpack.c.b16 %v2666, %v2658
        %v3259 = vpack.c.b16 %v2667, %v2659
        %v3260 = vpack.c.b16 %v2668, %v2660
        %v3261 = vpack.c.b16 %v2669, %v2661
        %v3262 = vpack.c.b16 %v2670, %v2662
        %v3263 = vpack.c.b16 %v2671, %v2663
        %v3264 = vpack.c.b16 %v2672, %v2664
        %v3265 = vpack.c.b16 %v2673, %v2665
        %v3266 = vpack.c.b16 %v2682, %v2674
        %v3267 = vpack.c.b16 %v2683, %v2675
        %v3268 = vpack.c.b16 %v2684, %v2676
        %v3269 = vpack.c.b16 %v2685, %v2677
        %v3270 = vpack.c.b16 %v2686, %v2678
        %v3271 = vpack.c.b16 %v2687, %v2679
        %v3272 = vpack.c.b16 %v2688, %v2680
        %v3273 = vpack.c.b16 %v2689, %v2681
        %v3274 = vpack.c.b16 %v2698, %v2690
        %v3275 = vpack.c.b16 %v2699, %v2691
        %v3276 = vpack.c.b16 %v2700, %v2692
        %v3277 = vpack.c.b16 %v2701, %v2693
        %v3278 = vpack.c.b16 %v2702, %v2694
        %v3279 = vpack.c.b16 %v2703, %v2695
        %v3280 = vpack.c.b16 %v2704, %v2696
        %v3281 = vpack.c.b16 %v2705, %v2697
        %v3282 = vpack.c.b16 %v2714, %v2706
        %v3283 = vpack.c.b16 %v2715, %v2707
        %v3284 = vpack.c.b16 %v2716, %v2708
        %v3285 = vpack.c.b16 %v2717, %v2709
        %v3286 = vpack.c.b16 %v2718, %v2710
        %v3287 = vpack.c.b16 %v2719, %v2711
        %v3288 = vpack.c.b16 %v2720, %v2712
        %v3289 = vpack.c.b16 %v2721, %v2713
        %v3290 = vpack.c.b16 %v2730, %v2722
        %v3291 = vpack.c.b16 %v2731, %v2723
        %v3292 = vpack.c.b16 %v2732, %v2724
        %v3293 = vpack.c.b16 %v2733, %v2725
        %v3294 = vpack.c.b16 %v2734, %v2726
        %v3295 = vpack.c.b16 %v2735, %v2727
        %v3296 = vpack.c.b16 %v2736, %v2728
        %v3297 = vpack.c.b16 %v2737, %v2729
        %v3298 = vpack.c.b16 %v2746, %v2738
        %v3299 = vpack.c.b16 %v2747, %v2739
        %v3300 = vpack.c.b16 %v2748, %v2740
        %v3301 = vpack.c.b16 %v2749, %v2741
        %v3302 = vpack.c.b16 %v2750, %v2742
        %v3303 = vpack.c.b16 %v2751, %v2743
        %v3304 = vpack.c.b16 %v2752, %v2744
        %v3305 = vpack.c.b16 %v2753, %v2745
        %v3306 = vpack.c.b16 %v2762, %v2754
        %v3307 = vpack.c.b16 %v2763, %v2755
        %v3308 = vpack.c.b16 %v2764, %v2756
        %v3309 = vpack.c.b16 %v2765, %v2757
        %v3310 = vpack.c.b16 %v2766, %v2758
        %v3311 = vpack.c.b16 %v2767, %v2759
        %v3312 = vpack.c.b16 %v2768, %v2760
        %v3313 = vpack.c.b16 %v2769, %v2761
        %v3314 = vpack.c.b16 %v2778, %v2770
        %v3315 = vpack.c.b16 %v2779, %v2771
        %v3316 = vpack.c.b16 %v2780, %v2772
        %v3317 = vpack.c.b16 %v2781, %v2773
        %v3318 = vpack.c.b16 %v2782, %v2774
        %v3319 = vpack.c.b16 %v2783, %v2775
        %v3320 = vpack.c.b16 %v2784, %v2776
        %v3321 = vpack.c.b16 %v2785, %v2777
        %v3322 = vpack.c.b16 %v2794, %v2786
        %v3323 = vpack.c.b16 %v2795, %v2787
        %v3324 = vpack.c.b16 %v2796, %v2788
        %v3325 = vpack.c.b16 %v2797, %v2789
        %v3326 = vpack.c.b16 %v2798, %v2790
        %v3327 = vpack.c.b16 %v2799, %v2791
        %v3328 = vpack.c.b16 %v2800, %v2792
        %v3329 = vpack.c.b16 %v2801, %v2793
        %v3330 = vpack.c.b16 %v2810, %v2802
        %v3331 = vpack.c.b16 %v2811, %v2803
        %v3332 = vpack.c.b16 %v2812, %v2804
        %v3333 = vpack.c.b16 %v2813, %v2805
        %v3334 = vpack.c.b16 %v2814, %v2806
        %v3335 = vpack.c.b16 %v2815, %v2807
        %v3336 = vpack.c.b16 %v2816, %v2808
        %v3337 = vpack.c.b16 %v2817, %v2809
        %v3338 = vpack.c.b16 %v2826, %v2818
        %v3339 = vpack.c.b16 %v2827, %v2819
        %v3340 = vpack.c.b16 %v2828, %v2820
        %v3341 = vpack.c.b16 %v2829, %v2821
        %v3342 = vpack.c.b16 %v2830, %v2822
        %v3343 = vpack.c.b16 %v2831, %v2823
        %v3344 = vpack.c.b16 %v2832, %v2824
        %v3345 = vpack.c.b16 %v2833, %v2825
        %3858 = vmatpush.bf16.msra.mxu0 %v2890
        %3859 = vmatpush.bf16.msra.mxu0 %v2882
        %3860 = vmatpush.bf16.msra.mxu0 %v2874
        %3861 = vmatpush.bf16.msra.mxu0 %v2866
        %3862 = vmatpush.bf16.msra.mxu0 %v2858
        %3863 = vmatpush.bf16.msra.mxu0 %v2850
        %3864 = vmatpush.bf16.msra.mxu0 %v2842
        %3865 = vmatpush.bf16.msra.mxu0 %v2834
        %3866 = vmatmul.bf16.gmra.mxu0 %v1266
        %v3867 = vpop.f32.mrf.mxu0
        %v3868 = vadd.f32 0.0, %v3867
        %v3869 = vpop.f32.mrf.mxu0
        %v3870 = vadd.f32 0.0, %v3869
        %3871 = vmatmul.bf16.gmra.mxu0 %v1274
        %v3872 = vpop.f32.mrf.mxu0
        %v3873 = vadd.f32 0.0, %v3872
        %v3874 = vpop.f32.mrf.mxu0
        %v3875 = vadd.f32 0.0, %v3874
        %3876 = vdwg.mxu0
        %3877 = vmatpush.bf16.msra.mxu0 %v2954
        %3878 = vmatpush.bf16.msra.mxu0 %v2946
        %3879 = vmatpush.bf16.msra.mxu0 %v2938
        %3880 = vmatpush.bf16.msra.mxu0 %v2930
        %3881 = vmatpush.bf16.msra.mxu0 %v2922
        %3882 = vmatpush.bf16.msra.mxu0 %v2914
        %3883 = vmatpush.bf16.msra.mxu0 %v2906
        %3884 = vmatpush.bf16.msra.mxu0 %v2898
        %3885 = vmatmul.bf16.gmra.mxu0 %v1267
        %v3886 = vpop.f32.mrf.mxu0
        %v3887 = vadd.f32 %v3868, %v3886
        %v3888 = vpop.f32.mrf.mxu0
        %v3889 = vadd.f32 %v3870, %v3888
        %3890 = vmatmul.bf16.gmra.mxu0 %v1275
        %v3891 = vpop.f32.mrf.mxu0
        %v3892 = vadd.f32 %v3873, %v3891
        %v3893 = vpop.f32.mrf.mxu0
        %v3894 = vadd.f32 %v3875, %v3893
        %3895 = vdwg.mxu0
        %3896 = vmatpush.bf16.msra.mxu0 %v3018
        %3897 = vmatpush.bf16.msra.mxu0 %v3010
        %3898 = vmatpush.bf16.msra.mxu0 %v3002
        %3899 = vmatpush.bf16.msra.mxu0 %v2994
        %3900 = vmatpush.bf16.msra.mxu0 %v2986
        %3901 = vmatpush.bf16.msra.mxu0 %v2978
        %3902 = vmatpush.bf16.msra.mxu0 %v2970
        %3903 = vmatpush.bf16.msra.mxu0 %v2962
        %3904 = vmatmul.bf16.gmra.mxu0 %v1268
        %v3905 = vpop.f32.mrf.mxu0
        %v3906 = vadd.f32 %v3887, %v3905
        %v3907 = vpop.f32.mrf.mxu0
        %v3908 = vadd.f32 %v3889, %v3907
        %3909 = vmatmul.bf16.gmra.mxu0 %v1276
        %v3910 = vpop.f32.mrf.mxu0
        %v3911 = vadd.f32 %v3892, %v3910
        %v3912 = vpop.f32.mrf.mxu0
        %v3913 = vadd.f32 %v3894, %v3912
        %3914 = vdwg.mxu0
        %3915 = vmatpush.bf16.msra.mxu0 %v3082
        %3916 = vmatpush.bf16.msra.mxu0 %v3074
        %3917 = vmatpush.bf16.msra.mxu0 %v3066
        %3918 = vmatpush.bf16.msra.mxu0 %v3058
        %3919 = vmatpush.bf16.msra.mxu0 %v3050
        %3920 = vmatpush.bf16.msra.mxu0 %v3042
        %3921 = vmatpush.bf16.msra.mxu0 %v3034
        %3922 = vmatpush.bf16.msra.mxu0 %v3026
        %3923 = vmatmul.bf16.gmra.mxu0 %v1269
        %v3924 = vpop.f32.mrf.mxu0
        %v3925 = vadd.f32 %v3906, %v3924
        %v3926 = vpop.f32.mrf.mxu0
        %v3927 = vadd.f32 %v3908, %v3926
        %3928 = vmatmul.bf16.gmra.mxu0 %v1277
        %v3929 = vpop.f32.mrf.mxu0
        %v3930 = vadd.f32 %v3911, %v3929
        %v3931 = vpop.f32.mrf.mxu0
        %v3932 = vadd.f32 %v3913, %v3931
        %3933 = vdwg.mxu0
        %3934 = vmatpush.bf16.msra.mxu0 %v3146
        %3935 = vmatpush.bf16.msra.mxu0 %v3138
        %3936 = vmatpush.bf16.msra.mxu0 %v3130
        %3937 = vmatpush.bf16.msra.mxu0 %v3122
        %3938 = vmatpush.bf16.msra.mxu0 %v3114
        %3939 = vmatpush.bf16.msra.mxu0 %v3106
        %3940 = vmatpush.bf16.msra.mxu0 %v3098
        %3941 = vmatpush.bf16.msra.mxu0 %v3090
        %3942 = vmatmul.bf16.gmra.mxu0 %v1270
        %v3943 = vpop.f32.mrf.mxu0
        %v3944 = vadd.f32 %v3925, %v3943
        %v3945 = vpop.f32.mrf.mxu0
        %v3946 = vadd.f32 %v3927, %v3945
        %3947 = vmatmul.bf16.gmra.mxu0 %v1278
        %v3948 = vpop.f32.mrf.mxu0
        %v3949 = vadd.f32 %v3930, %v3948
        %v3950 = vpop.f32.mrf.mxu0
        %v3951 = vadd.f32 %v3932, %v3950
        %3952 = vdwg.mxu0
        %3953 = vmatpush.bf16.msra.mxu0 %v3210
        %3954 = vmatpush.bf16.msra.mxu0 %v3202
        %3955 = vmatpush.bf16.msra.mxu0 %v3194
        %3956 = vmatpush.bf16.msra.mxu0 %v3186
        %3957 = vmatpush.bf16.msra.mxu0 %v3178
        %3958 = vmatpush.bf16.msra.mxu0 %v3170
        %3959 = vmatpush.bf16.msra.mxu0 %v3162
        %3960 = vmatpush.bf16.msra.mxu0 %v3154
        %3961 = vmatmul.bf16.gmra.mxu0 %v1271
        %v3962 = vpop.f32.mrf.mxu0
        %v3963 = vadd.f32 %v3944, %v3962
        %v3964 = vpop.f32.mrf.mxu0
        %v3965 = vadd.f32 %v3946, %v3964
        %3966 = vmatmul.bf16.gmra.mxu0 %v1279
        %v3967 = vpop.f32.mrf.mxu0
        %v3968 = vadd.f32 %v3949, %v3967
        %v3969 = vpop.f32.mrf.mxu0
        %v3970 = vadd.f32 %v3951, %v3969
        %3971 = vdwg.mxu0
        %3972 = vmatpush.bf16.msra.mxu0 %v3274
        %3973 = vmatpush.bf16.msra.mxu0 %v3266
        %3974 = vmatpush.bf16.msra.mxu0 %v3258
        %3975 = vmatpush.bf16.msra.mxu0 %v3250
        %3976 = vmatpush.bf16.msra.mxu0 %v3242
        %3977 = vmatpush.bf16.msra.mxu0 %v3234
        %3978 = vmatpush.bf16.msra.mxu0 %v3226
        %3979 = vmatpush.bf16.msra.mxu0 %v3218
        %3980 = vmatmul.bf16.gmra.mxu0 %v1272
        %v3981 = vpop.f32.mrf.mxu0
        %v3982 = vadd.f32 %v3963, %v3981
        %v3983 = vpop.f32.mrf.mxu0
        %v3984 = vadd.f32 %v3965, %v3983
        %3985 = vmatmul.bf16.gmra.mxu0 %v1280
        %v3986 = vpop.f32.mrf.mxu0
        %v3987 = vadd.f32 %v3968, %v3986
        %v3988 = vpop.f32.mrf.mxu0
        %v3989 = vadd.f32 %v3970, %v3988
        %3990 = vdwg.mxu0
        %3991 = vmatpush.bf16.msra.mxu0 %v3338
        %3992 = vmatpush.bf16.msra.mxu0 %v3330
        %3993 = vmatpush.bf16.msra.mxu0 %v3322
        %3994 = vmatpush.bf16.msra.mxu0 %v3314
        %3995 = vmatpush.bf16.msra.mxu0 %v3306
        %3996 = vmatpush.bf16.msra.mxu0 %v3298
        %3997 = vmatpush.bf16.msra.mxu0 %v3290
        %3998 = vmatpush.bf16.msra.mxu0 %v3282
        %3999 = vmatmul.bf16.gmra.mxu0 %v1273
        %v4000 = vpop.f32.mrf.mxu0
        %v4001 = vadd.f32 %v3982, %v4000
        %v4002 = vpop.f32.mrf.mxu0
        %v4003 = vadd.f32 %v3984, %v4002
        %4004 = vmatmul.bf16.gmra.mxu0 %v1281
        %v4005 = vpop.f32.mrf.mxu0
        %v4006 = vadd.f32 %v3987, %v4005
        %v4007 = vpop.f32.mrf.mxu0
        %v4008 = vadd.f32 %v3989, %v4007
        %4009 = vdwg.mxu0
        %4010 = vmatpush.bf16.msra.mxu0 %v2891
        %4011 = vmatpush.bf16.msra.mxu0 %v2883
        %4012 = vmatpush.bf16.msra.mxu0 %v2875
        %4013 = vmatpush.bf16.msra.mxu0 %v2867
        %4014 = vmatpush.bf16.msra.mxu0 %v2859
        %4015 = vmatpush.bf16.msra.mxu0 %v2851
        %4016 = vmatpush.bf16.msra.mxu0 %v2843
        %4017 = vmatpush.bf16.msra.mxu0 %v2835
        %4018 = vmatmul.bf16.gmra.mxu0 %v1266
        %v4019 = vpop.f32.mrf.mxu0
        %v4020 = vadd.f32 0.0, %v4019
        %v4021 = vpop.f32.mrf.mxu0
        %v4022 = vadd.f32 0.0, %v4021
        %4023 = vmatmul.bf16.gmra.mxu0 %v1274
        %v4024 = vpop.f32.mrf.mxu0
        %v4025 = vadd.f32 0.0, %v4024
        %v4026 = vpop.f32.mrf.mxu0
        %v4027 = vadd.f32 0.0, %v4026
        %4028 = vdwg.mxu0
        %4029 = vmatpush.bf16.msra.mxu0 %v2955
        %4030 = vmatpush.bf16.msra.mxu0 %v2947
        %4031 = vmatpush.bf16.msra.mxu0 %v2939
        %4032 = vmatpush.bf16.msra.mxu0 %v2931
        %4033 = vmatpush.bf16.msra.mxu0 %v2923
        %4034 = vmatpush.bf16.msra.mxu0 %v2915
        %4035 = vmatpush.bf16.msra.mxu0 %v2907
        %4036 = vmatpush.bf16.msra.mxu0 %v2899
        %4037 = vmatmul.bf16.gmra.mxu0 %v1267
        %v4038 = vpop.f32.mrf.mxu0
        %v4039 = vadd.f32 %v4020, %v4038
        %v4040 = vpop.f32.mrf.mxu0
        %v4041 = vadd.f32 %v4022, %v4040
        %4042 = vmatmul.bf16.gmra.mxu0 %v1275
        %v4043 = vpop.f32.mrf.mxu0
        %v4044 = vadd.f32 %v4025, %v4043
        %v4045 = vpop.f32.mrf.mxu0
        %v4046 = vadd.f32 %v4027, %v4045
        %4047 = vdwg.mxu0
        %4048 = vmatpush.bf16.msra.mxu0 %v3019
        %4049 = vmatpush.bf16.msra.mxu0 %v3011
        %4050 = vmatpush.bf16.msra.mxu0 %v3003
        %4051 = vmatpush.bf16.msra.mxu0 %v2995
        %4052 = vmatpush.bf16.msra.mxu0 %v2987
        %4053 = vmatpush.bf16.msra.mxu0 %v2979
        %4054 = vmatpush.bf16.msra.mxu0 %v2971
        %4055 = vmatpush.bf16.msra.mxu0 %v2963
        %4056 = vmatmul.bf16.gmra.mxu0 %v1268
        %v4057 = vpop.f32.mrf.mxu0
        %v4058 = vadd.f32 %v4039, %v4057
        %v4059 = vpop.f32.mrf.mxu0
        %v4060 = vadd.f32 %v4041, %v4059
        %4061 = vmatmul.bf16.gmra.mxu0 %v1276
        %v4062 = vpop.f32.mrf.mxu0
        %v4063 = vadd.f32 %v4044, %v4062
        %v4064 = vpop.f32.mrf.mxu0
        %v4065 = vadd.f32 %v4046, %v4064
        %4066 = vdwg.mxu0
        %4067 = vmatpush.bf16.msra.mxu0 %v3083
        %4068 = vmatpush.bf16.msra.mxu0 %v3075
        %4069 = vmatpush.bf16.msra.mxu0 %v3067
        %4070 = vmatpush.bf16.msra.mxu0 %v3059
        %4071 = vmatpush.bf16.msra.mxu0 %v3051
        %4072 = vmatpush.bf16.msra.mxu0 %v3043
        %4073 = vmatpush.bf16.msra.mxu0 %v3035
        %4074 = vmatpush.bf16.msra.mxu0 %v3027
        %4075 = vmatmul.bf16.gmra.mxu0 %v1269
        %v4076 = vpop.f32.mrf.mxu0
        %v4077 = vadd.f32 %v4058, %v4076
        %v4078 = vpop.f32.mrf.mxu0
        %v4079 = vadd.f32 %v4060, %v4078
        %4080 = vmatmul.bf16.gmra.mxu0 %v1277
        %v4081 = vpop.f32.mrf.mxu0
        %v4082 = vadd.f32 %v4063, %v4081
        %v4083 = vpop.f32.mrf.mxu0
        %v4084 = vadd.f32 %v4065, %v4083
        %4085 = vdwg.mxu0
        %4086 = vmatpush.bf16.msra.mxu0 %v3147
        %4087 = vmatpush.bf16.msra.mxu0 %v3139
        %4088 = vmatpush.bf16.msra.mxu0 %v3131
        %4089 = vmatpush.bf16.msra.mxu0 %v3123
        %4090 = vmatpush.bf16.msra.mxu0 %v3115
        %4091 = vmatpush.bf16.msra.mxu0 %v3107
        %4092 = vmatpush.bf16.msra.mxu0 %v3099
        %4093 = vmatpush.bf16.msra.mxu0 %v3091
        %4094 = vmatmul.bf16.gmra.mxu0 %v1270
        %v4095 = vpop.f32.mrf.mxu0
        %v4096 = vadd.f32 %v4077, %v4095
        %v4097 = vpop.f32.mrf.mxu0
        %v4098 = vadd.f32 %v4079, %v4097
        %4099 = vmatmul.bf16.gmra.mxu0 %v1278
        %v4100 = vpop.f32.mrf.mxu0
        %v4101 = vadd.f32 %v4082, %v4100
        %v4102 = vpop.f32.mrf.mxu0
        %v4103 = vadd.f32 %v4084, %v4102
        %4104 = vdwg.mxu0
        %4105 = vmatpush.bf16.msra.mxu0 %v3211
        %4106 = vmatpush.bf16.msra.mxu0 %v3203
        %4107 = vmatpush.bf16.msra.mxu0 %v3195
        %4108 = vmatpush.bf16.msra.mxu0 %v3187
        %4109 = vmatpush.bf16.msra.mxu0 %v3179
        %4110 = vmatpush.bf16.msra.mxu0 %v3171
        %4111 = vmatpush.bf16.msra.mxu0 %v3163
        %4112 = vmatpush.bf16.msra.mxu0 %v3155
        %4113 = vmatmul.bf16.gmra.mxu0 %v1271
        %v4114 = vpop.f32.mrf.mxu0
        %v4115 = vadd.f32 %v4096, %v4114
        %v4116 = vpop.f32.mrf.mxu0
        %v4117 = vadd.f32 %v4098, %v4116
        %4118 = vmatmul.bf16.gmra.mxu0 %v1279
        %v4119 = vpop.f32.mrf.mxu0
        %v4120 = vadd.f32 %v4101, %v4119
        %v4121 = vpop.f32.mrf.mxu0
        %v4122 = vadd.f32 %v4103, %v4121
        %4123 = vdwg.mxu0
        %4124 = vmatpush.bf16.msra.mxu0 %v3275
        %4125 = vmatpush.bf16.msra.mxu0 %v3267
        %4126 = vmatpush.bf16.msra.mxu0 %v3259
        %4127 = vmatpush.bf16.msra.mxu0 %v3251
        %4128 = vmatpush.bf16.msra.mxu0 %v3243
        %4129 = vmatpush.bf16.msra.mxu0 %v3235
        %4130 = vmatpush.bf16.msra.mxu0 %v3227
        %4131 = vmatpush.bf16.msra.mxu0 %v3219
        %4132 = vmatmul.bf16.gmra.mxu0 %v1272
        %v4133 = vpop.f32.mrf.mxu0
        %v4134 = vadd.f32 %v4115, %v4133
        %v4135 = vpop.f32.mrf.mxu0
        %v4136 = vadd.f32 %v4117, %v4135
        %4137 = vmatmul.bf16.gmra.mxu0 %v1280
        %v4138 = vpop.f32.mrf.mxu0
        %v4139 = vadd.f32 %v4120, %v4138
        %v4140 = vpop.f32.mrf.mxu0
        %v4141 = vadd.f32 %v4122, %v4140
        %4142 = vdwg.mxu0
        %4143 = vmatpush.bf16.msra.mxu0 %v3339
        %4144 = vmatpush.bf16.msra.mxu0 %v3331
        %4145 = vmatpush.bf16.msra.mxu0 %v3323
        %4146 = vmatpush.bf16.msra.mxu0 %v3315
        %4147 = vmatpush.bf16.msra.mxu0 %v3307
        %4148 = vmatpush.bf16.msra.mxu0 %v3299
        %4149 = vmatpush.bf16.msra.mxu0 %v3291
        %4150 = vmatpush.bf16.msra.mxu0 %v3283
        %4151 = vmatmul.bf16.gmra.mxu0 %v1273
        %v4152 = vpop.f32.mrf.mxu0
        %v4153 = vadd.f32 %v4134, %v4152
        %v4154 = vpop.f32.mrf.mxu0
        %v4155 = vadd.f32 %v4136, %v4154
        %4156 = vmatmul.bf16.gmra.mxu0 %v1281
        %v4157 = vpop.f32.mrf.mxu0
        %v4158 = vadd.f32 %v4139, %v4157
        %v4159 = vpop.f32.mrf.mxu0
        %v4160 = vadd.f32 %v4141, %v4159
        %4161 = vdwg.mxu0
        %4162 = vmatpush.bf16.msra.mxu0 %v2892
        %4163 = vmatpush.bf16.msra.mxu0 %v2884
        %4164 = vmatpush.bf16.msra.mxu0 %v2876
        %4165 = vmatpush.bf16.msra.mxu0 %v2868
        %4166 = vmatpush.bf16.msra.mxu0 %v2860
        %4167 = vmatpush.bf16.msra.mxu0 %v2852
        %4168 = vmatpush.bf16.msra.mxu0 %v2844
        %4169 = vmatpush.bf16.msra.mxu0 %v2836
        %4170 = vmatmul.bf16.gmra.mxu0 %v1266
        %v4171 = vpop.f32.mrf.mxu0
        %v4172 = vadd.f32 0.0, %v4171
        %v4173 = vpop.f32.mrf.mxu0
        %v4174 = vadd.f32 0.0, %v4173
        %4175 = vmatmul.bf16.gmra.mxu0 %v1274
        %v4176 = vpop.f32.mrf.mxu0
        %v4177 = vadd.f32 0.0, %v4176
        %v4178 = vpop.f32.mrf.mxu0
        %v4179 = vadd.f32 0.0, %v4178
        %4180 = vdwg.mxu0
        %4181 = vmatpush.bf16.msra.mxu0 %v2956
        %4182 = vmatpush.bf16.msra.mxu0 %v2948
        %4183 = vmatpush.bf16.msra.mxu0 %v2940
        %4184 = vmatpush.bf16.msra.mxu0 %v2932
        %4185 = vmatpush.bf16.msra.mxu0 %v2924
        %4186 = vmatpush.bf16.msra.mxu0 %v2916
        %4187 = vmatpush.bf16.msra.mxu0 %v2908
        %4188 = vmatpush.bf16.msra.mxu0 %v2900
        %4189 = vmatmul.bf16.gmra.mxu0 %v1267
        %v4190 = vpop.f32.mrf.mxu0
        %v4191 = vadd.f32 %v4172, %v4190
        %v4192 = vpop.f32.mrf.mxu0
        %v4193 = vadd.f32 %v4174, %v4192
        %4194 = vmatmul.bf16.gmra.mxu0 %v1275
        %v4195 = vpop.f32.mrf.mxu0
        %v4196 = vadd.f32 %v4177, %v4195
        %v4197 = vpop.f32.mrf.mxu0
        %v4198 = vadd.f32 %v4179, %v4197
        %4199 = vdwg.mxu0
        %4200 = vmatpush.bf16.msra.mxu0 %v3020
        %4201 = vmatpush.bf16.msra.mxu0 %v3012
        %4202 = vmatpush.bf16.msra.mxu0 %v3004
        %4203 = vmatpush.bf16.msra.mxu0 %v2996
        %4204 = vmatpush.bf16.msra.mxu0 %v2988
        %4205 = vmatpush.bf16.msra.mxu0 %v2980
        %4206 = vmatpush.bf16.msra.mxu0 %v2972
        %4207 = vmatpush.bf16.msra.mxu0 %v2964
        %4208 = vmatmul.bf16.gmra.mxu0 %v1268
        %v4209 = vpop.f32.mrf.mxu0
        %v4210 = vadd.f32 %v4191, %v4209
        %v4211 = vpop.f32.mrf.mxu0
        %v4212 = vadd.f32 %v4193, %v4211
        %4213 = vmatmul.bf16.gmra.mxu0 %v1276
        %v4214 = vpop.f32.mrf.mxu0
        %v4215 = vadd.f32 %v4196, %v4214
        %v4216 = vpop.f32.mrf.mxu0
        %v4217 = vadd.f32 %v4198, %v4216
        %4218 = vdwg.mxu0
        %4219 = vmatpush.bf16.msra.mxu0 %v3084
        %4220 = vmatpush.bf16.msra.mxu0 %v3076
        %4221 = vmatpush.bf16.msra.mxu0 %v3068
        %4222 = vmatpush.bf16.msra.mxu0 %v3060
        %4223 = vmatpush.bf16.msra.mxu0 %v3052
        %4224 = vmatpush.bf16.msra.mxu0 %v3044
        %4225 = vmatpush.bf16.msra.mxu0 %v3036
        %4226 = vmatpush.bf16.msra.mxu0 %v3028
        %4227 = vmatmul.bf16.gmra.mxu0 %v1269
        %v4228 = vpop.f32.mrf.mxu0
        %v4229 = vadd.f32 %v4210, %v4228
        %v4230 = vpop.f32.mrf.mxu0
        %v4231 = vadd.f32 %v4212, %v4230
        %4232 = vmatmul.bf16.gmra.mxu0 %v1277
        %v4233 = vpop.f32.mrf.mxu0
        %v4234 = vadd.f32 %v4215, %v4233
        %v4235 = vpop.f32.mrf.mxu0
        %v4236 = vadd.f32 %v4217, %v4235
        %4237 = vdwg.mxu0
        %4238 = vmatpush.bf16.msra.mxu0 %v3148
        %4239 = vmatpush.bf16.msra.mxu0 %v3140
        %4240 = vmatpush.bf16.msra.mxu0 %v3132
        %4241 = vmatpush.bf16.msra.mxu0 %v3124
        %4242 = vmatpush.bf16.msra.mxu0 %v3116
        %4243 = vmatpush.bf16.msra.mxu0 %v3108
        %4244 = vmatpush.bf16.msra.mxu0 %v3100
        %4245 = vmatpush.bf16.msra.mxu0 %v3092
        %4246 = vmatmul.bf16.gmra.mxu0 %v1270
        %v4247 = vpop.f32.mrf.mxu0
        %v4248 = vadd.f32 %v4229, %v4247
        %v4249 = vpop.f32.mrf.mxu0
        %v4250 = vadd.f32 %v4231, %v4249
        %4251 = vmatmul.bf16.gmra.mxu0 %v1278
        %v4252 = vpop.f32.mrf.mxu0
        %v4253 = vadd.f32 %v4234, %v4252
        %v4254 = vpop.f32.mrf.mxu0
        %v4255 = vadd.f32 %v4236, %v4254
        %4256 = vdwg.mxu0
        %4257 = vmatpush.bf16.msra.mxu0 %v3212
        %4258 = vmatpush.bf16.msra.mxu0 %v3204
        %4259 = vmatpush.bf16.msra.mxu0 %v3196
        %4260 = vmatpush.bf16.msra.mxu0 %v3188
        %4261 = vmatpush.bf16.msra.mxu0 %v3180
        %4262 = vmatpush.bf16.msra.mxu0 %v3172
        %4263 = vmatpush.bf16.msra.mxu0 %v3164
        %4264 = vmatpush.bf16.msra.mxu0 %v3156
        %4265 = vmatmul.bf16.gmra.mxu0 %v1271
        %v4266 = vpop.f32.mrf.mxu0
        %v4267 = vadd.f32 %v4248, %v4266
        %v4268 = vpop.f32.mrf.mxu0
        %v4269 = vadd.f32 %v4250, %v4268
        %4270 = vmatmul.bf16.gmra.mxu0 %v1279
        %v4271 = vpop.f32.mrf.mxu0
        %v4272 = vadd.f32 %v4253, %v4271
        %v4273 = vpop.f32.mrf.mxu0
        %v4274 = vadd.f32 %v4255, %v4273
        %4275 = vdwg.mxu0
        %4276 = vmatpush.bf16.msra.mxu0 %v3276
        %4277 = vmatpush.bf16.msra.mxu0 %v3268
        %4278 = vmatpush.bf16.msra.mxu0 %v3260
        %4279 = vmatpush.bf16.msra.mxu0 %v3252
        %4280 = vmatpush.bf16.msra.mxu0 %v3244
        %4281 = vmatpush.bf16.msra.mxu0 %v3236
        %4282 = vmatpush.bf16.msra.mxu0 %v3228
        %4283 = vmatpush.bf16.msra.mxu0 %v3220
        %4284 = vmatmul.bf16.gmra.mxu0 %v1272
        %v4285 = vpop.f32.mrf.mxu0
        %v4286 = vadd.f32 %v4267, %v4285
        %v4287 = vpop.f32.mrf.mxu0
        %v4288 = vadd.f32 %v4269, %v4287
        %4289 = vmatmul.bf16.gmra.mxu0 %v1280
        %v4290 = vpop.f32.mrf.mxu0
        %v4291 = vadd.f32 %v4272, %v4290
        %v4292 = vpop.f32.mrf.mxu0
        %v4293 = vadd.f32 %v4274, %v4292
        %4294 = vdwg.mxu0
        %4295 = vmatpush.bf16.msra.mxu0 %v3340
        %4296 = vmatpush.bf16.msra.mxu0 %v3332
        %4297 = vmatpush.bf16.msra.mxu0 %v3324
        %4298 = vmatpush.bf16.msra.mxu0 %v3316
        %4299 = vmatpush.bf16.msra.mxu0 %v3308
        %4300 = vmatpush.bf16.msra.mxu0 %v3300
        %4301 = vmatpush.bf16.msra.mxu0 %v3292
        %4302 = vmatpush.bf16.msra.mxu0 %v3284
        %4303 = vmatmul.bf16.gmra.mxu0 %v1273
        %v4304 = vpop.f32.mrf.mxu0
        %v4305 = vadd.f32 %v4286, %v4304
        %v4306 = vpop.f32.mrf.mxu0
        %v4307 = vadd.f32 %v4288, %v4306
        %4308 = vmatmul.bf16.gmra.mxu0 %v1281
        %v4309 = vpop.f32.mrf.mxu0
        %v4310 = vadd.f32 %v4291, %v4309
        %v4311 = vpop.f32.mrf.mxu0
        %v4312 = vadd.f32 %v4293, %v4311
        %4313 = vdwg.mxu0
        %4314 = vmatpush.bf16.msra.mxu0 %v2893
        %4315 = vmatpush.bf16.msra.mxu0 %v2885
        %4316 = vmatpush.bf16.msra.mxu0 %v2877
        %4317 = vmatpush.bf16.msra.mxu0 %v2869
        %4318 = vmatpush.bf16.msra.mxu0 %v2861
        %4319 = vmatpush.bf16.msra.mxu0 %v2853
        %4320 = vmatpush.bf16.msra.mxu0 %v2845
        %4321 = vmatpush.bf16.msra.mxu0 %v2837
        %4322 = vmatmul.bf16.gmra.mxu0 %v1266
        %v4323 = vpop.f32.mrf.mxu0
        %v4324 = vadd.f32 0.0, %v4323
        %v4325 = vpop.f32.mrf.mxu0
        %v4326 = vadd.f32 0.0, %v4325
        %4327 = vmatmul.bf16.gmra.mxu0 %v1274
        %v4328 = vpop.f32.mrf.mxu0
        %v4329 = vadd.f32 0.0, %v4328
        %v4330 = vpop.f32.mrf.mxu0
        %v4331 = vadd.f32 0.0, %v4330
        %4332 = vdwg.mxu0
        %4333 = vmatpush.bf16.msra.mxu0 %v2957
        %4334 = vmatpush.bf16.msra.mxu0 %v2949
        %4335 = vmatpush.bf16.msra.mxu0 %v2941
        %4336 = vmatpush.bf16.msra.mxu0 %v2933
        %4337 = vmatpush.bf16.msra.mxu0 %v2925
        %4338 = vmatpush.bf16.msra.mxu0 %v2917
        %4339 = vmatpush.bf16.msra.mxu0 %v2909
        %4340 = vmatpush.bf16.msra.mxu0 %v2901
        %4341 = vmatmul.bf16.gmra.mxu0 %v1267
        %v4342 = vpop.f32.mrf.mxu0
        %v4343 = vadd.f32 %v4324, %v4342
        %v4344 = vpop.f32.mrf.mxu0
        %v4345 = vadd.f32 %v4326, %v4344
        %4346 = vmatmul.bf16.gmra.mxu0 %v1275
        %v4347 = vpop.f32.mrf.mxu0
        %v4348 = vadd.f32 %v4329, %v4347
        %v4349 = vpop.f32.mrf.mxu0
        %v4350 = vadd.f32 %v4331, %v4349
        %4351 = vdwg.mxu0
        %4352 = vmatpush.bf16.msra.mxu0 %v3021
        %4353 = vmatpush.bf16.msra.mxu0 %v3013
        %4354 = vmatpush.bf16.msra.mxu0 %v3005
        %4355 = vmatpush.bf16.msra.mxu0 %v2997
        %4356 = vmatpush.bf16.msra.mxu0 %v2989
        %4357 = vmatpush.bf16.msra.mxu0 %v2981
        %4358 = vmatpush.bf16.msra.mxu0 %v2973
        %4359 = vmatpush.bf16.msra.mxu0 %v2965
        %4360 = vmatmul.bf16.gmra.mxu0 %v1268
        %v4361 = vpop.f32.mrf.mxu0
        %v4362 = vadd.f32 %v4343, %v4361
        %v4363 = vpop.f32.mrf.mxu0
        %v4364 = vadd.f32 %v4345, %v4363
        %4365 = vmatmul.bf16.gmra.mxu0 %v1276
        %v4366 = vpop.f32.mrf.mxu0
        %v4367 = vadd.f32 %v4348, %v4366
        %v4368 = vpop.f32.mrf.mxu0
        %v4369 = vadd.f32 %v4350, %v4368
        %4370 = vdwg.mxu0
        %4371 = vmatpush.bf16.msra.mxu0 %v3085
        %4372 = vmatpush.bf16.msra.mxu0 %v3077
        %4373 = vmatpush.bf16.msra.mxu0 %v3069
        %4374 = vmatpush.bf16.msra.mxu0 %v3061
        %4375 = vmatpush.bf16.msra.mxu0 %v3053
        %4376 = vmatpush.bf16.msra.mxu0 %v3045
        %4377 = vmatpush.bf16.msra.mxu0 %v3037
        %4378 = vmatpush.bf16.msra.mxu0 %v3029
        %4379 = vmatmul.bf16.gmra.mxu0 %v1269
        %v4380 = vpop.f32.mrf.mxu0
        %v4381 = vadd.f32 %v4362, %v4380
        %v4382 = vpop.f32.mrf.mxu0
        %v4383 = vadd.f32 %v4364, %v4382
        %4384 = vmatmul.bf16.gmra.mxu0 %v1277
        %v4385 = vpop.f32.mrf.mxu0
        %v4386 = vadd.f32 %v4367, %v4385
        %v4387 = vpop.f32.mrf.mxu0
        %v4388 = vadd.f32 %v4369, %v4387
        %4389 = vdwg.mxu0
        %4390 = vmatpush.bf16.msra.mxu0 %v3149
        %4391 = vmatpush.bf16.msra.mxu0 %v3141
        %4392 = vmatpush.bf16.msra.mxu0 %v3133
        %4393 = vmatpush.bf16.msra.mxu0 %v3125
        %4394 = vmatpush.bf16.msra.mxu0 %v3117
        %4395 = vmatpush.bf16.msra.mxu0 %v3109
        %4396 = vmatpush.bf16.msra.mxu0 %v3101
        %4397 = vmatpush.bf16.msra.mxu0 %v3093
        %4398 = vmatmul.bf16.gmra.mxu0 %v1270
        %v4399 = vpop.f32.mrf.mxu0
        %v4400 = vadd.f32 %v4381, %v4399
        %v4401 = vpop.f32.mrf.mxu0
        %v4402 = vadd.f32 %v4383, %v4401
        %4403 = vmatmul.bf16.gmra.mxu0 %v1278
        %v4404 = vpop.f32.mrf.mxu0
        %v4405 = vadd.f32 %v4386, %v4404
        %v4406 = vpop.f32.mrf.mxu0
        %v4407 = vadd.f32 %v4388, %v4406
        %4408 = vdwg.mxu0
        %4409 = vmatpush.bf16.msra.mxu0 %v3213
        %4410 = vmatpush.bf16.msra.mxu0 %v3205
        %4411 = vmatpush.bf16.msra.mxu0 %v3197
        %4412 = vmatpush.bf16.msra.mxu0 %v3189
        %4413 = vmatpush.bf16.msra.mxu0 %v3181
        %4414 = vmatpush.bf16.msra.mxu0 %v3173
        %4415 = vmatpush.bf16.msra.mxu0 %v3165
        %4416 = vmatpush.bf16.msra.mxu0 %v3157
        %4417 = vmatmul.bf16.gmra.mxu0 %v1271
        %v4418 = vpop.f32.mrf.mxu0
        %v4419 = vadd.f32 %v4400, %v4418
        %v4420 = vpop.f32.mrf.mxu0
        %v4421 = vadd.f32 %v4402, %v4420
        %4422 = vmatmul.bf16.gmra.mxu0 %v1279
        %v4423 = vpop.f32.mrf.mxu0
        %v4424 = vadd.f32 %v4405, %v4423
        %v4425 = vpop.f32.mrf.mxu0
        %v4426 = vadd.f32 %v4407, %v4425
        %4427 = vdwg.mxu0
        %4428 = vmatpush.bf16.msra.mxu0 %v3277
        %4429 = vmatpush.bf16.msra.mxu0 %v3269
        %4430 = vmatpush.bf16.msra.mxu0 %v3261
        %4431 = vmatpush.bf16.msra.mxu0 %v3253
        %4432 = vmatpush.bf16.msra.mxu0 %v3245
        %4433 = vmatpush.bf16.msra.mxu0 %v3237
        %4434 = vmatpush.bf16.msra.mxu0 %v3229
        %4435 = vmatpush.bf16.msra.mxu0 %v3221
        %4436 = vmatmul.bf16.gmra.mxu0 %v1272
        %v4437 = vpop.f32.mrf.mxu0
        %v4438 = vadd.f32 %v4419, %v4437
        %v4439 = vpop.f32.mrf.mxu0
        %v4440 = vadd.f32 %v4421, %v4439
        %4441 = vmatmul.bf16.gmra.mxu0 %v1280
        %v4442 = vpop.f32.mrf.mxu0
        %v4443 = vadd.f32 %v4424, %v4442
        %v4444 = vpop.f32.mrf.mxu0
        %v4445 = vadd.f32 %v4426, %v4444
        %4446 = vdwg.mxu0
        %4447 = vmatpush.bf16.msra.mxu0 %v3341
        %4448 = vmatpush.bf16.msra.mxu0 %v3333
        %4449 = vmatpush.bf16.msra.mxu0 %v3325
        %4450 = vmatpush.bf16.msra.mxu0 %v3317
        %4451 = vmatpush.bf16.msra.mxu0 %v3309
        %4452 = vmatpush.bf16.msra.mxu0 %v3301
        %4453 = vmatpush.bf16.msra.mxu0 %v3293
        %4454 = vmatpush.bf16.msra.mxu0 %v3285
        %4455 = vmatmul.bf16.gmra.mxu0 %v1273
        %v4456 = vpop.f32.mrf.mxu0
        %v4457 = vadd.f32 %v4438, %v4456
        %v4458 = vpop.f32.mrf.mxu0
        %v4459 = vadd.f32 %v4440, %v4458
        %4460 = vmatmul.bf16.gmra.mxu0 %v1281
        %v4461 = vpop.f32.mrf.mxu0
        %v4462 = vadd.f32 %v4443, %v4461
        %v4463 = vpop.f32.mrf.mxu0
        %v4464 = vadd.f32 %v4445, %v4463
        %4465 = vdwg.mxu0
        %4466 = vmatpush.bf16.msra.mxu0 %v2894
        %4467 = vmatpush.bf16.msra.mxu0 %v2886
        %4468 = vmatpush.bf16.msra.mxu0 %v2878
        %4469 = vmatpush.bf16.msra.mxu0 %v2870
        %4470 = vmatpush.bf16.msra.mxu0 %v2862
        %4471 = vmatpush.bf16.msra.mxu0 %v2854
        %4472 = vmatpush.bf16.msra.mxu0 %v2846
        %4473 = vmatpush.bf16.msra.mxu0 %v2838
        %4474 = vmatmul.bf16.gmra.mxu0 %v1266
        %v4475 = vpop.f32.mrf.mxu0
        %v4476 = vadd.f32 0.0, %v4475
        %v4477 = vpop.f32.mrf.mxu0
        %v4478 = vadd.f32 0.0, %v4477
        %4479 = vmatmul.bf16.gmra.mxu0 %v1274
        %v4480 = vpop.f32.mrf.mxu0
        %v4481 = vadd.f32 0.0, %v4480
        %v4482 = vpop.f32.mrf.mxu0
        %v4483 = vadd.f32 0.0, %v4482
        %4484 = vdwg.mxu0
        %4485 = vmatpush.bf16.msra.mxu0 %v2958
        %4486 = vmatpush.bf16.msra.mxu0 %v2950
        %4487 = vmatpush.bf16.msra.mxu0 %v2942
        %4488 = vmatpush.bf16.msra.mxu0 %v2934
        %4489 = vmatpush.bf16.msra.mxu0 %v2926
        %4490 = vmatpush.bf16.msra.mxu0 %v2918
        %4491 = vmatpush.bf16.msra.mxu0 %v2910
        %4492 = vmatpush.bf16.msra.mxu0 %v2902
        %4493 = vmatmul.bf16.gmra.mxu0 %v1267
        %v4494 = vpop.f32.mrf.mxu0
        %v4495 = vadd.f32 %v4476, %v4494
        %v4496 = vpop.f32.mrf.mxu0
        %v4497 = vadd.f32 %v4478, %v4496
        %4498 = vmatmul.bf16.gmra.mxu0 %v1275
        %v4499 = vpop.f32.mrf.mxu0
        %v4500 = vadd.f32 %v4481, %v4499
        %v4501 = vpop.f32.mrf.mxu0
        %v4502 = vadd.f32 %v4483, %v4501
        %4503 = vdwg.mxu0
        %4504 = vmatpush.bf16.msra.mxu0 %v3022
        %4505 = vmatpush.bf16.msra.mxu0 %v3014
        %4506 = vmatpush.bf16.msra.mxu0 %v3006
        %4507 = vmatpush.bf16.msra.mxu0 %v2998
        %4508 = vmatpush.bf16.msra.mxu0 %v2990
        %4509 = vmatpush.bf16.msra.mxu0 %v2982
        %4510 = vmatpush.bf16.msra.mxu0 %v2974
        %4511 = vmatpush.bf16.msra.mxu0 %v2966
        %4512 = vmatmul.bf16.gmra.mxu0 %v1268
        %v4513 = vpop.f32.mrf.mxu0
        %v4514 = vadd.f32 %v4495, %v4513
        %v4515 = vpop.f32.mrf.mxu0
        %v4516 = vadd.f32 %v4497, %v4515
        %4517 = vmatmul.bf16.gmra.mxu0 %v1276
        %v4518 = vpop.f32.mrf.mxu0
        %v4519 = vadd.f32 %v4500, %v4518
        %v4520 = vpop.f32.mrf.mxu0
        %v4521 = vadd.f32 %v4502, %v4520
        %4522 = vdwg.mxu0
        %4523 = vmatpush.bf16.msra.mxu0 %v3086
        %4524 = vmatpush.bf16.msra.mxu0 %v3078
        %4525 = vmatpush.bf16.msra.mxu0 %v3070
        %4526 = vmatpush.bf16.msra.mxu0 %v3062
        %4527 = vmatpush.bf16.msra.mxu0 %v3054
        %4528 = vmatpush.bf16.msra.mxu0 %v3046
        %4529 = vmatpush.bf16.msra.mxu0 %v3038
        %4530 = vmatpush.bf16.msra.mxu0 %v3030
        %4531 = vmatmul.bf16.gmra.mxu0 %v1269
        %v4532 = vpop.f32.mrf.mxu0
        %v4533 = vadd.f32 %v4514, %v4532
        %v4534 = vpop.f32.mrf.mxu0
        %v4535 = vadd.f32 %v4516, %v4534
        %4536 = vmatmul.bf16.gmra.mxu0 %v1277
        %v4537 = vpop.f32.mrf.mxu0
        %v4538 = vadd.f32 %v4519, %v4537
        %v4539 = vpop.f32.mrf.mxu0
        %v4540 = vadd.f32 %v4521, %v4539
        %4541 = vdwg.mxu0
        %4542 = vmatpush.bf16.msra.mxu0 %v3150
        %4543 = vmatpush.bf16.msra.mxu0 %v3142
        %4544 = vmatpush.bf16.msra.mxu0 %v3134
        %4545 = vmatpush.bf16.msra.mxu0 %v3126
        %4546 = vmatpush.bf16.msra.mxu0 %v3118
        %4547 = vmatpush.bf16.msra.mxu0 %v3110
        %4548 = vmatpush.bf16.msra.mxu0 %v3102
        %4549 = vmatpush.bf16.msra.mxu0 %v3094
        %4550 = vmatmul.bf16.gmra.mxu0 %v1270
        %v4551 = vpop.f32.mrf.mxu0
        %v4552 = vadd.f32 %v4533, %v4551
        %v4553 = vpop.f32.mrf.mxu0
        %v4554 = vadd.f32 %v4535, %v4553
        %4555 = vmatmul.bf16.gmra.mxu0 %v1278
        %v4556 = vpop.f32.mrf.mxu0
        %v4557 = vadd.f32 %v4538, %v4556
        %v4558 = vpop.f32.mrf.mxu0
        %v4559 = vadd.f32 %v4540, %v4558
        %4560 = vdwg.mxu0
        %4561 = vmatpush.bf16.msra.mxu0 %v3214
        %4562 = vmatpush.bf16.msra.mxu0 %v3206
        %4563 = vmatpush.bf16.msra.mxu0 %v3198
        %4564 = vmatpush.bf16.msra.mxu0 %v3190
        %4565 = vmatpush.bf16.msra.mxu0 %v3182
        %4566 = vmatpush.bf16.msra.mxu0 %v3174
        %4567 = vmatpush.bf16.msra.mxu0 %v3166
        %4568 = vmatpush.bf16.msra.mxu0 %v3158
        %4569 = vmatmul.bf16.gmra.mxu0 %v1271
        %v4570 = vpop.f32.mrf.mxu0
        %v4571 = vadd.f32 %v4552, %v4570
        %v4572 = vpop.f32.mrf.mxu0
        %v4573 = vadd.f32 %v4554, %v4572
        %4574 = vmatmul.bf16.gmra.mxu0 %v1279
        %v4575 = vpop.f32.mrf.mxu0
        %v4576 = vadd.f32 %v4557, %v4575
        %v4577 = vpop.f32.mrf.mxu0
        %v4578 = vadd.f32 %v4559, %v4577
        %4579 = vdwg.mxu0
        %4580 = vmatpush.bf16.msra.mxu0 %v3278
        %4581 = vmatpush.bf16.msra.mxu0 %v3270
        %4582 = vmatpush.bf16.msra.mxu0 %v3262
        %4583 = vmatpush.bf16.msra.mxu0 %v3254
        %4584 = vmatpush.bf16.msra.mxu0 %v3246
        %4585 = vmatpush.bf16.msra.mxu0 %v3238
        %4586 = vmatpush.bf16.msra.mxu0 %v3230
        %4587 = vmatpush.bf16.msra.mxu0 %v3222
        %4588 = vmatmul.bf16.gmra.mxu0 %v1272
        %v4589 = vpop.f32.mrf.mxu0
        %v4590 = vadd.f32 %v4571, %v4589
        %v4591 = vpop.f32.mrf.mxu0
        %v4592 = vadd.f32 %v4573, %v4591
        %4593 = vmatmul.bf16.gmra.mxu0 %v1280
        %v4594 = vpop.f32.mrf.mxu0
        %v4595 = vadd.f32 %v4576, %v4594
        %v4596 = vpop.f32.mrf.mxu0
        %v4597 = vadd.f32 %v4578, %v4596
        %4598 = vdwg.mxu0
        %4599 = vmatpush.bf16.msra.mxu0 %v3342
        %4600 = vmatpush.bf16.msra.mxu0 %v3334
        %4601 = vmatpush.bf16.msra.mxu0 %v3326
        %4602 = vmatpush.bf16.msra.mxu0 %v3318
        %4603 = vmatpush.bf16.msra.mxu0 %v3310
        %4604 = vmatpush.bf16.msra.mxu0 %v3302
        %4605 = vmatpush.bf16.msra.mxu0 %v3294
        %4606 = vmatpush.bf16.msra.mxu0 %v3286
        %4607 = vmatmul.bf16.gmra.mxu0 %v1273
        %v4608 = vpop.f32.mrf.mxu0
        %v4609 = vadd.f32 %v4590, %v4608
        %v4610 = vpop.f32.mrf.mxu0
        %v4611 = vadd.f32 %v4592, %v4610
        %4612 = vmatmul.bf16.gmra.mxu0 %v1281
        %v4613 = vpop.f32.mrf.mxu0
        %v4614 = vadd.f32 %v4595, %v4613
        %v4615 = vpop.f32.mrf.mxu0
        %v4616 = vadd.f32 %v4597, %v4615
        %4617 = vdwg.mxu0
        %4618 = vmatpush.bf16.msra.mxu0 %v2895
        %4619 = vmatpush.bf16.msra.mxu0 %v2887
        %4620 = vmatpush.bf16.msra.mxu0 %v2879
        %4621 = vmatpush.bf16.msra.mxu0 %v2871
        %4622 = vmatpush.bf16.msra.mxu0 %v2863
        %4623 = vmatpush.bf16.msra.mxu0 %v2855
        %4624 = vmatpush.bf16.msra.mxu0 %v2847
        %4625 = vmatpush.bf16.msra.mxu0 %v2839
        %4626 = vmatmul.bf16.gmra.mxu0 %v1266
        %v4627 = vpop.f32.mrf.mxu0
        %v4628 = vadd.f32 0.0, %v4627
        %v4629 = vpop.f32.mrf.mxu0
        %v4630 = vadd.f32 0.0, %v4629
        %4631 = vmatmul.bf16.gmra.mxu0 %v1274
        %v4632 = vpop.f32.mrf.mxu0
        %v4633 = vadd.f32 0.0, %v4632
        %v4634 = vpop.f32.mrf.mxu0
        %v4635 = vadd.f32 0.0, %v4634
        %4636 = vdwg.mxu0
        %4637 = vmatpush.bf16.msra.mxu0 %v2959
        %4638 = vmatpush.bf16.msra.mxu0 %v2951
        %4639 = vmatpush.bf16.msra.mxu0 %v2943
        %4640 = vmatpush.bf16.msra.mxu0 %v2935
        %4641 = vmatpush.bf16.msra.mxu0 %v2927
        %4642 = vmatpush.bf16.msra.mxu0 %v2919
        %4643 = vmatpush.bf16.msra.mxu0 %v2911
        %4644 = vmatpush.bf16.msra.mxu0 %v2903
        %4645 = vmatmul.bf16.gmra.mxu0 %v1267
        %v4646 = vpop.f32.mrf.mxu0
        %v4647 = vadd.f32 %v4628, %v4646
        %v4648 = vpop.f32.mrf.mxu0
        %v4649 = vadd.f32 %v4630, %v4648
        %4650 = vmatmul.bf16.gmra.mxu0 %v1275
        %v4651 = vpop.f32.mrf.mxu0
        %v4652 = vadd.f32 %v4633, %v4651
        %v4653 = vpop.f32.mrf.mxu0
        %v4654 = vadd.f32 %v4635, %v4653
        %4655 = vdwg.mxu0
        %4656 = vmatpush.bf16.msra.mxu0 %v3023
        %4657 = vmatpush.bf16.msra.mxu0 %v3015
        %4658 = vmatpush.bf16.msra.mxu0 %v3007
        %4659 = vmatpush.bf16.msra.mxu0 %v2999
        %4660 = vmatpush.bf16.msra.mxu0 %v2991
        %4661 = vmatpush.bf16.msra.mxu0 %v2983
        %4662 = vmatpush.bf16.msra.mxu0 %v2975
        %4663 = vmatpush.bf16.msra.mxu0 %v2967
        %4664 = vmatmul.bf16.gmra.mxu0 %v1268
        %v4665 = vpop.f32.mrf.mxu0
        %v4666 = vadd.f32 %v4647, %v4665
        %v4667 = vpop.f32.mrf.mxu0
        %v4668 = vadd.f32 %v4649, %v4667
        %4669 = vmatmul.bf16.gmra.mxu0 %v1276
        %v4670 = vpop.f32.mrf.mxu0
        %v4671 = vadd.f32 %v4652, %v4670
        %v4672 = vpop.f32.mrf.mxu0
        %v4673 = vadd.f32 %v4654, %v4672
        %4674 = vdwg.mxu0
        %4675 = vmatpush.bf16.msra.mxu0 %v3087
        %4676 = vmatpush.bf16.msra.mxu0 %v3079
        %4677 = vmatpush.bf16.msra.mxu0 %v3071
        %4678 = vmatpush.bf16.msra.mxu0 %v3063
        %4679 = vmatpush.bf16.msra.mxu0 %v3055
        %4680 = vmatpush.bf16.msra.mxu0 %v3047
        %4681 = vmatpush.bf16.msra.mxu0 %v3039
        %4682 = vmatpush.bf16.msra.mxu0 %v3031
        %4683 = vmatmul.bf16.gmra.mxu0 %v1269
        %v4684 = vpop.f32.mrf.mxu0
        %v4685 = vadd.f32 %v4666, %v4684
        %v4686 = vpop.f32.mrf.mxu0
        %v4687 = vadd.f32 %v4668, %v4686
        %4688 = vmatmul.bf16.gmra.mxu0 %v1277
        %v4689 = vpop.f32.mrf.mxu0
        %v4690 = vadd.f32 %v4671, %v4689
        %v4691 = vpop.f32.mrf.mxu0
        %v4692 = vadd.f32 %v4673, %v4691
        %4693 = vdwg.mxu0
        %4694 = vmatpush.bf16.msra.mxu0 %v3151
        %4695 = vmatpush.bf16.msra.mxu0 %v3143
        %4696 = vmatpush.bf16.msra.mxu0 %v3135
        %4697 = vmatpush.bf16.msra.mxu0 %v3127
        %4698 = vmatpush.bf16.msra.mxu0 %v3119
        %4699 = vmatpush.bf16.msra.mxu0 %v3111
        %4700 = vmatpush.bf16.msra.mxu0 %v3103
        %4701 = vmatpush.bf16.msra.mxu0 %v3095
        %4702 = vmatmul.bf16.gmra.mxu0 %v1270
        %v4703 = vpop.f32.mrf.mxu0
        %v4704 = vadd.f32 %v4685, %v4703
        %v4705 = vpop.f32.mrf.mxu0
        %v4706 = vadd.f32 %v4687, %v4705
        %4707 = vmatmul.bf16.gmra.mxu0 %v1278
        %v4708 = vpop.f32.mrf.mxu0
        %v4709 = vadd.f32 %v4690, %v4708
        %v4710 = vpop.f32.mrf.mxu0
        %v4711 = vadd.f32 %v4692, %v4710
        %4712 = vdwg.mxu0
        %4713 = vmatpush.bf16.msra.mxu0 %v3215
        %4714 = vmatpush.bf16.msra.mxu0 %v3207
        %4715 = vmatpush.bf16.msra.mxu0 %v3199
        %4716 = vmatpush.bf16.msra.mxu0 %v3191
        %4717 = vmatpush.bf16.msra.mxu0 %v3183
        %4718 = vmatpush.bf16.msra.mxu0 %v3175
        %4719 = vmatpush.bf16.msra.mxu0 %v3167
        %4720 = vmatpush.bf16.msra.mxu0 %v3159
        %4721 = vmatmul.bf16.gmra.mxu0 %v1271
        %v4722 = vpop.f32.mrf.mxu0
        %v4723 = vadd.f32 %v4704, %v4722
        %v4724 = vpop.f32.mrf.mxu0
        %v4725 = vadd.f32 %v4706, %v4724
        %4726 = vmatmul.bf16.gmra.mxu0 %v1279
        %v4727 = vpop.f32.mrf.mxu0
        %v4728 = vadd.f32 %v4709, %v4727
        %v4729 = vpop.f32.mrf.mxu0
        %v4730 = vadd.f32 %v4711, %v4729
        %4731 = vdwg.mxu0
        %4732 = vmatpush.bf16.msra.mxu0 %v3279
        %4733 = vmatpush.bf16.msra.mxu0 %v3271
        %4734 = vmatpush.bf16.msra.mxu0 %v3263
        %4735 = vmatpush.bf16.msra.mxu0 %v3255
        %4736 = vmatpush.bf16.msra.mxu0 %v3247
        %4737 = vmatpush.bf16.msra.mxu0 %v3239
        %4738 = vmatpush.bf16.msra.mxu0 %v3231
        %4739 = vmatpush.bf16.msra.mxu0 %v3223
        %4740 = vmatmul.bf16.gmra.mxu0 %v1272
        %v4741 = vpop.f32.mrf.mxu0
        %v4742 = vadd.f32 %v4723, %v4741
        %v4743 = vpop.f32.mrf.mxu0
        %v4744 = vadd.f32 %v4725, %v4743
        %4745 = vmatmul.bf16.gmra.mxu0 %v1280
        %v4746 = vpop.f32.mrf.mxu0
        %v4747 = vadd.f32 %v4728, %v4746
        %v4748 = vpop.f32.mrf.mxu0
        %v4749 = vadd.f32 %v4730, %v4748
        %4750 = vdwg.mxu0
        %4751 = vmatpush.bf16.msra.mxu0 %v3343
        %4752 = vmatpush.bf16.msra.mxu0 %v3335
        %4753 = vmatpush.bf16.msra.mxu0 %v3327
        %4754 = vmatpush.bf16.msra.mxu0 %v3319
        %4755 = vmatpush.bf16.msra.mxu0 %v3311
        %4756 = vmatpush.bf16.msra.mxu0 %v3303
        %4757 = vmatpush.bf16.msra.mxu0 %v3295
        %4758 = vmatpush.bf16.msra.mxu0 %v3287
        %4759 = vmatmul.bf16.gmra.mxu0 %v1273
        %v4760 = vpop.f32.mrf.mxu0
        %v4761 = vadd.f32 %v4742, %v4760
        %v4762 = vpop.f32.mrf.mxu0
        %v4763 = vadd.f32 %v4744, %v4762
        %4764 = vmatmul.bf16.gmra.mxu0 %v1281
        %v4765 = vpop.f32.mrf.mxu0
        %v4766 = vadd.f32 %v4747, %v4765
        %v4767 = vpop.f32.mrf.mxu0
        %v4768 = vadd.f32 %v4749, %v4767
        %4769 = vdwg.mxu0
        %4770 = vmatpush.bf16.msra.mxu0 %v2896
        %4771 = vmatpush.bf16.msra.mxu0 %v2888
        %4772 = vmatpush.bf16.msra.mxu0 %v2880
        %4773 = vmatpush.bf16.msra.mxu0 %v2872
        %4774 = vmatpush.bf16.msra.mxu0 %v2864
        %4775 = vmatpush.bf16.msra.mxu0 %v2856
        %4776 = vmatpush.bf16.msra.mxu0 %v2848
        %4777 = vmatpush.bf16.msra.mxu0 %v2840
        %4778 = vmatmul.bf16.gmra.mxu0 %v1266
        %v4779 = vpop.f32.mrf.mxu0
        %v4780 = vadd.f32 0.0, %v4779
        %v4781 = vpop.f32.mrf.mxu0
        %v4782 = vadd.f32 0.0, %v4781
        %4783 = vmatmul.bf16.gmra.mxu0 %v1274
        %v4784 = vpop.f32.mrf.mxu0
        %v4785 = vadd.f32 0.0, %v4784
        %v4786 = vpop.f32.mrf.mxu0
        %v4787 = vadd.f32 0.0, %v4786
        %4788 = vdwg.mxu0
        %4789 = vmatpush.bf16.msra.mxu0 %v2960
        %4790 = vmatpush.bf16.msra.mxu0 %v2952
        %4791 = vmatpush.bf16.msra.mxu0 %v2944
        %4792 = vmatpush.bf16.msra.mxu0 %v2936
        %4793 = vmatpush.bf16.msra.mxu0 %v2928
        %4794 = vmatpush.bf16.msra.mxu0 %v2920
        %4795 = vmatpush.bf16.msra.mxu0 %v2912
        %4796 = vmatpush.bf16.msra.mxu0 %v2904
        %4797 = vmatmul.bf16.gmra.mxu0 %v1267
        %v4798 = vpop.f32.mrf.mxu0
        %v4799 = vadd.f32 %v4780, %v4798
        %v4800 = vpop.f32.mrf.mxu0
        %v4801 = vadd.f32 %v4782, %v4800
        %4802 = vmatmul.bf16.gmra.mxu0 %v1275
        %v4803 = vpop.f32.mrf.mxu0
        %v4804 = vadd.f32 %v4785, %v4803
        %v4805 = vpop.f32.mrf.mxu0
        %v4806 = vadd.f32 %v4787, %v4805
        %4807 = vdwg.mxu0
        %4808 = vmatpush.bf16.msra.mxu0 %v3024
        %4809 = vmatpush.bf16.msra.mxu0 %v3016
        %4810 = vmatpush.bf16.msra.mxu0 %v3008
        %4811 = vmatpush.bf16.msra.mxu0 %v3000
        %4812 = vmatpush.bf16.msra.mxu0 %v2992
        %4813 = vmatpush.bf16.msra.mxu0 %v2984
        %4814 = vmatpush.bf16.msra.mxu0 %v2976
        %4815 = vmatpush.bf16.msra.mxu0 %v2968
        %4816 = vmatmul.bf16.gmra.mxu0 %v1268
        %v4817 = vpop.f32.mrf.mxu0
        %v4818 = vadd.f32 %v4799, %v4817
        %v4819 = vpop.f32.mrf.mxu0
        %v4820 = vadd.f32 %v4801, %v4819
        %4821 = vmatmul.bf16.gmra.mxu0 %v1276
        %v4822 = vpop.f32.mrf.mxu0
        %v4823 = vadd.f32 %v4804, %v4822
        %v4824 = vpop.f32.mrf.mxu0
        %v4825 = vadd.f32 %v4806, %v4824
        %4826 = vdwg.mxu0
        %4827 = vmatpush.bf16.msra.mxu0 %v3088
        %4828 = vmatpush.bf16.msra.mxu0 %v3080
        %4829 = vmatpush.bf16.msra.mxu0 %v3072
        %4830 = vmatpush.bf16.msra.mxu0 %v3064
        %4831 = vmatpush.bf16.msra.mxu0 %v3056
        %4832 = vmatpush.bf16.msra.mxu0 %v3048
        %4833 = vmatpush.bf16.msra.mxu0 %v3040
        %4834 = vmatpush.bf16.msra.mxu0 %v3032
        %4835 = vmatmul.bf16.gmra.mxu0 %v1269
        %v4836 = vpop.f32.mrf.mxu0
        %v4837 = vadd.f32 %v4818, %v4836
        %v4838 = vpop.f32.mrf.mxu0
        %v4839 = vadd.f32 %v4820, %v4838
        %4840 = vmatmul.bf16.gmra.mxu0 %v1277
        %v4841 = vpop.f32.mrf.mxu0
        %v4842 = vadd.f32 %v4823, %v4841
        %v4843 = vpop.f32.mrf.mxu0
        %v4844 = vadd.f32 %v4825, %v4843
        %4845 = vdwg.mxu0
        %4846 = vmatpush.bf16.msra.mxu0 %v3152
        %4847 = vmatpush.bf16.msra.mxu0 %v3144
        %4848 = vmatpush.bf16.msra.mxu0 %v3136
        %4849 = vmatpush.bf16.msra.mxu0 %v3128
        %4850 = vmatpush.bf16.msra.mxu0 %v3120
        %4851 = vmatpush.bf16.msra.mxu0 %v3112
        %4852 = vmatpush.bf16.msra.mxu0 %v3104
        %4853 = vmatpush.bf16.msra.mxu0 %v3096
        %4854 = vmatmul.bf16.gmra.mxu0 %v1270
        %v4855 = vpop.f32.mrf.mxu0
        %v4856 = vadd.f32 %v4837, %v4855
        %v4857 = vpop.f32.mrf.mxu0
        %v4858 = vadd.f32 %v4839, %v4857
        %4859 = vmatmul.bf16.gmra.mxu0 %v1278
        %v4860 = vpop.f32.mrf.mxu0
        %v4861 = vadd.f32 %v4842, %v4860
        %v4862 = vpop.f32.mrf.mxu0
        %v4863 = vadd.f32 %v4844, %v4862
        %4864 = vdwg.mxu0
        %4865 = vmatpush.bf16.msra.mxu0 %v3216
        %4866 = vmatpush.bf16.msra.mxu0 %v3208
        %4867 = vmatpush.bf16.msra.mxu0 %v3200
        %4868 = vmatpush.bf16.msra.mxu0 %v3192
        %4869 = vmatpush.bf16.msra.mxu0 %v3184
        %4870 = vmatpush.bf16.msra.mxu0 %v3176
        %4871 = vmatpush.bf16.msra.mxu0 %v3168
        %4872 = vmatpush.bf16.msra.mxu0 %v3160
        %4873 = vmatmul.bf16.gmra.mxu0 %v1271
        %v4874 = vpop.f32.mrf.mxu0
        %v4875 = vadd.f32 %v4856, %v4874
        %v4876 = vpop.f32.mrf.mxu0
        %v4877 = vadd.f32 %v4858, %v4876
        %4878 = vmatmul.bf16.gmra.mxu0 %v1279
        %v4879 = vpop.f32.mrf.mxu0
        %v4880 = vadd.f32 %v4861, %v4879
        %v4881 = vpop.f32.mrf.mxu0
        %v4882 = vadd.f32 %v4863, %v4881
        %4883 = vdwg.mxu0
        %4884 = vmatpush.bf16.msra.mxu0 %v3280
        %4885 = vmatpush.bf16.msra.mxu0 %v3272
        %4886 = vmatpush.bf16.msra.mxu0 %v3264
        %4887 = vmatpush.bf16.msra.mxu0 %v3256
        %4888 = vmatpush.bf16.msra.mxu0 %v3248
        %4889 = vmatpush.bf16.msra.mxu0 %v3240
        %4890 = vmatpush.bf16.msra.mxu0 %v3232
        %4891 = vmatpush.bf16.msra.mxu0 %v3224
        %4892 = vmatmul.bf16.gmra.mxu0 %v1272
        %v4893 = vpop.f32.mrf.mxu0
        %v4894 = vadd.f32 %v4875, %v4893
        %v4895 = vpop.f32.mrf.mxu0
        %v4896 = vadd.f32 %v4877, %v4895
        %4897 = vmatmul.bf16.gmra.mxu0 %v1280
        %v4898 = vpop.f32.mrf.mxu0
        %v4899 = vadd.f32 %v4880, %v4898
        %v4900 = vpop.f32.mrf.mxu0
        %v4901 = vadd.f32 %v4882, %v4900
        %4902 = vdwg.mxu0
        %4903 = vmatpush.bf16.msra.mxu0 %v3344
        %4904 = vmatpush.bf16.msra.mxu0 %v3336
        %4905 = vmatpush.bf16.msra.mxu0 %v3328
        %4906 = vmatpush.bf16.msra.mxu0 %v3320
        %4907 = vmatpush.bf16.msra.mxu0 %v3312
        %4908 = vmatpush.bf16.msra.mxu0 %v3304
        %4909 = vmatpush.bf16.msra.mxu0 %v3296
        %4910 = vmatpush.bf16.msra.mxu0 %v3288
        %4911 = vmatmul.bf16.gmra.mxu0 %v1273
        %v4912 = vpop.f32.mrf.mxu0
        %v4913 = vadd.f32 %v4894, %v4912
        %v4914 = vpop.f32.mrf.mxu0
        %v4915 = vadd.f32 %v4896, %v4914
        %4916 = vmatmul.bf16.gmra.mxu0 %v1281
        %v4917 = vpop.f32.mrf.mxu0
        %v4918 = vadd.f32 %v4899, %v4917
        %v4919 = vpop.f32.mrf.mxu0
        %v4920 = vadd.f32 %v4901, %v4919
        %4921 = vdwg.mxu0
        %4922 = vmatpush.bf16.msra.mxu0 %v2897
        %4923 = vmatpush.bf16.msra.mxu0 %v2889
        %4924 = vmatpush.bf16.msra.mxu0 %v2881
        %4925 = vmatpush.bf16.msra.mxu0 %v2873
        %4926 = vmatpush.bf16.msra.mxu0 %v2865
        %4927 = vmatpush.bf16.msra.mxu0 %v2857
        %4928 = vmatpush.bf16.msra.mxu0 %v2849
        %4929 = vmatpush.bf16.msra.mxu0 %v2841
        %4930 = vmatmul.bf16.gmra.mxu0 %v1266
        %v4931 = vpop.f32.mrf.mxu0
        %v4932 = vadd.f32 0.0, %v4931
        %v4933 = vpop.f32.mrf.mxu0
        %v4934 = vadd.f32 0.0, %v4933
        %4935 = vmatmul.bf16.gmra.mxu0 %v1274
        %v4936 = vpop.f32.mrf.mxu0
        %v4937 = vadd.f32 0.0, %v4936
        %v4938 = vpop.f32.mrf.mxu0
        %v4939 = vadd.f32 0.0, %v4938
        %4940 = vdwg.mxu0
        %4941 = vmatpush.bf16.msra.mxu0 %v2961
        %4942 = vmatpush.bf16.msra.mxu0 %v2953
        %4943 = vmatpush.bf16.msra.mxu0 %v2945
        %4944 = vmatpush.bf16.msra.mxu0 %v2937
        %4945 = vmatpush.bf16.msra.mxu0 %v2929
        %4946 = vmatpush.bf16.msra.mxu0 %v2921
        %4947 = vmatpush.bf16.msra.mxu0 %v2913
        %4948 = vmatpush.bf16.msra.mxu0 %v2905
        %4949 = vmatmul.bf16.gmra.mxu0 %v1267
        %v4950 = vpop.f32.mrf.mxu0
        %v4951 = vadd.f32 %v4932, %v4950
        %v4952 = vpop.f32.mrf.mxu0
        %v4953 = vadd.f32 %v4934, %v4952
        %4954 = vmatmul.bf16.gmra.mxu0 %v1275
        %v4955 = vpop.f32.mrf.mxu0
        %v4956 = vadd.f32 %v4937, %v4955
        %v4957 = vpop.f32.mrf.mxu0
        %v4958 = vadd.f32 %v4939, %v4957
        %4959 = vdwg.mxu0
        %4960 = vmatpush.bf16.msra.mxu0 %v3025
        %4961 = vmatpush.bf16.msra.mxu0 %v3017
        %4962 = vmatpush.bf16.msra.mxu0 %v3009
        %4963 = vmatpush.bf16.msra.mxu0 %v3001
        %4964 = vmatpush.bf16.msra.mxu0 %v2993
        %4965 = vmatpush.bf16.msra.mxu0 %v2985
        %4966 = vmatpush.bf16.msra.mxu0 %v2977
        %4967 = vmatpush.bf16.msra.mxu0 %v2969
        %4968 = vmatmul.bf16.gmra.mxu0 %v1268
        %v4969 = vpop.f32.mrf.mxu0
        %v4970 = vadd.f32 %v4951, %v4969
        %v4971 = vpop.f32.mrf.mxu0
        %v4972 = vadd.f32 %v4953, %v4971
        %4973 = vmatmul.bf16.gmra.mxu0 %v1276
        %v4974 = vpop.f32.mrf.mxu0
        %v4975 = vadd.f32 %v4956, %v4974
        %v4976 = vpop.f32.mrf.mxu0
        %v4977 = vadd.f32 %v4958, %v4976
        %4978 = vdwg.mxu0
        %4979 = vmatpush.bf16.msra.mxu0 %v3089
        %4980 = vmatpush.bf16.msra.mxu0 %v3081
        %4981 = vmatpush.bf16.msra.mxu0 %v3073
        %4982 = vmatpush.bf16.msra.mxu0 %v3065
        %4983 = vmatpush.bf16.msra.mxu0 %v3057
        %4984 = vmatpush.bf16.msra.mxu0 %v3049
        %4985 = vmatpush.bf16.msra.mxu0 %v3041
        %4986 = vmatpush.bf16.msra.mxu0 %v3033
        %4987 = vmatmul.bf16.gmra.mxu0 %v1269
        %v4988 = vpop.f32.mrf.mxu0
        %v4989 = vadd.f32 %v4970, %v4988
        %v4990 = vpop.f32.mrf.mxu0
        %v4991 = vadd.f32 %v4972, %v4990
        %4992 = vmatmul.bf16.gmra.mxu0 %v1277
        %v4993 = vpop.f32.mrf.mxu0
        %v4994 = vadd.f32 %v4975, %v4993
        %v4995 = vpop.f32.mrf.mxu0
        %v4996 = vadd.f32 %v4977, %v4995
        %4997 = vdwg.mxu0
        %4998 = vmatpush.bf16.msra.mxu0 %v3153
        %4999 = vmatpush.bf16.msra.mxu0 %v3145
        %5000 = vmatpush.bf16.msra.mxu0 %v3137
        %5001 = vmatpush.bf16.msra.mxu0 %v3129
        %5002 = vmatpush.bf16.msra.mxu0 %v3121
        %5003 = vmatpush.bf16.msra.mxu0 %v3113
        %5004 = vmatpush.bf16.msra.mxu0 %v3105
        %5005 = vmatpush.bf16.msra.mxu0 %v3097
        %5006 = vmatmul.bf16.gmra.mxu0 %v1270
        %v5007 = vpop.f32.mrf.mxu0
        %v5008 = vadd.f32 %v4989, %v5007
        %v5009 = vpop.f32.mrf.mxu0
        %v5010 = vadd.f32 %v4991, %v5009
        %5011 = vmatmul.bf16.gmra.mxu0 %v1278
        %v5012 = vpop.f32.mrf.mxu0
        %v5013 = vadd.f32 %v4994, %v5012
        %v5014 = vpop.f32.mrf.mxu0
        %v5015 = vadd.f32 %v4996, %v5014
        %5016 = vdwg.mxu0
        %5017 = vmatpush.bf16.msra.mxu0 %v3217
        %5018 = vmatpush.bf16.msra.mxu0 %v3209
        %5019 = vmatpush.bf16.msra.mxu0 %v3201
        %5020 = vmatpush.bf16.msra.mxu0 %v3193
        %5021 = vmatpush.bf16.msra.mxu0 %v3185
        %5022 = vmatpush.bf16.msra.mxu0 %v3177
        %5023 = vmatpush.bf16.msra.mxu0 %v3169
        %5024 = vmatpush.bf16.msra.mxu0 %v3161
        %5025 = vmatmul.bf16.gmra.mxu0 %v1271
        %v5026 = vpop.f32.mrf.mxu0
        %v5027 = vadd.f32 %v5008, %v5026
        %v5028 = vpop.f32.mrf.mxu0
        %v5029 = vadd.f32 %v5010, %v5028
        %5030 = vmatmul.bf16.gmra.mxu0 %v1279
        %v5031 = vpop.f32.mrf.mxu0
        %v5032 = vadd.f32 %v5013, %v5031
        %v5033 = vpop.f32.mrf.mxu0
        %v5034 = vadd.f32 %v5015, %v5033
        %5035 = vdwg.mxu0
        %5036 = vmatpush.bf16.msra.mxu0 %v3281
        %5037 = vmatpush.bf16.msra.mxu0 %v3273
        %5038 = vmatpush.bf16.msra.mxu0 %v3265
        %5039 = vmatpush.bf16.msra.mxu0 %v3257
        %5040 = vmatpush.bf16.msra.mxu0 %v3249
        %5041 = vmatpush.bf16.msra.mxu0 %v3241
        %5042 = vmatpush.bf16.msra.mxu0 %v3233
        %5043 = vmatpush.bf16.msra.mxu0 %v3225
        %5044 = vmatmul.bf16.gmra.mxu0 %v1272
        %v5045 = vpop.f32.mrf.mxu0
        %v5046 = vadd.f32 %v5027, %v5045
        %v5047 = vpop.f32.mrf.mxu0
        %v5048 = vadd.f32 %v5029, %v5047
        %5049 = vmatmul.bf16.gmra.mxu0 %v1280
        %v5050 = vpop.f32.mrf.mxu0
        %v5051 = vadd.f32 %v5032, %v5050
        %v5052 = vpop.f32.mrf.mxu0
        %v5053 = vadd.f32 %v5034, %v5052
        %5054 = vdwg.mxu0
        %5055 = vmatpush.bf16.msra.mxu0 %v3345
        %5056 = vmatpush.bf16.msra.mxu0 %v3337
        %5057 = vmatpush.bf16.msra.mxu0 %v3329
        %5058 = vmatpush.bf16.msra.mxu0 %v3321
        %5059 = vmatpush.bf16.msra.mxu0 %v3313
        %5060 = vmatpush.bf16.msra.mxu0 %v3305
        %5061 = vmatpush.bf16.msra.mxu0 %v3297
        %5062 = vmatpush.bf16.msra.mxu0 %v3289
        %5063 = vmatmul.bf16.gmra.mxu0 %v1273
        %v5064 = vpop.f32.mrf.mxu0
        %v5065 = vadd.f32 %v5046, %v5064
        %v5066 = vpop.f32.mrf.mxu0
        %v5067 = vadd.f32 %v5048, %v5066
        %5068 = vmatmul.bf16.gmra.mxu0 %v1281
        %v5069 = vpop.f32.mrf.mxu0
        %v5070 = vadd.f32 %v5051, %v5069
        %v5071 = vpop.f32.mrf.mxu0
        %v5072 = vadd.f32 %v5053, %v5071
        %5073 = vdwg.mxu0
        %v5074 = vmul.f32 %v4001, %v4001
        %v5075 = vmul.f32 %v4153, %v4153
        %v5076 = vmul.f32 %v4305, %v4305
        %v5077 = vmul.f32 %v4457, %v4457
        %v5078 = vmul.f32 %v4609, %v4609
        %v5079 = vmul.f32 %v4761, %v4761
        %v5080 = vmul.f32 %v4913, %v4913
        %v5081 = vmul.f32 %v5065, %v5065
        %v5082 = vmul.f32 %v4003, %v4003
        %v5083 = vmul.f32 %v4155, %v4155
        %v5084 = vmul.f32 %v4307, %v4307
        %v5085 = vmul.f32 %v4459, %v4459
        %v5086 = vmul.f32 %v4611, %v4611
        %v5087 = vmul.f32 %v4763, %v4763
        %v5088 = vmul.f32 %v4915, %v4915
        %v5089 = vmul.f32 %v5067, %v5067
        %v5090 = vmul.f32 %v4006, %v4006
        %v5091 = vmul.f32 %v4158, %v4158
        %v5092 = vmul.f32 %v4310, %v4310
        %v5093 = vmul.f32 %v4462, %v4462
        %v5094 = vmul.f32 %v4614, %v4614
        %v5095 = vmul.f32 %v4766, %v4766
        %v5096 = vmul.f32 %v4918, %v4918
        %v5097 = vmul.f32 %v5070, %v5070
        %v5098 = vmul.f32 %v4008, %v4008
        %v5099 = vmul.f32 %v4160, %v4160
        %v5100 = vmul.f32 %v4312, %v4312
        %v5101 = vmul.f32 %v4464, %v4464
        %v5102 = vmul.f32 %v4616, %v4616
        %v5103 = vmul.f32 %v4768, %v4768
        %v5104 = vmul.f32 %v4920, %v4920
        %v5105 = vmul.f32 %v5072, %v5072
        %v5106 = vpack.c.bf16 %v5082, %v5074
        %v5107 = vpack.c.bf16 %v5083, %v5075
        %v5108 = vpack.c.bf16 %v5084, %v5076
        %v5109 = vpack.c.bf16 %v5085, %v5077
        %v5110 = vpack.c.bf16 %v5086, %v5078
        %v5111 = vpack.c.bf16 %v5087, %v5079
        %v5112 = vpack.c.bf16 %v5088, %v5080
        %v5113 = vpack.c.bf16 %v5089, %v5081
        %v5114 = vpack.c.bf16 %v5098, %v5090
        %v5115 = vpack.c.bf16 %v5099, %v5091
        %v5116 = vpack.c.bf16 %v5100, %v5092
        %v5117 = vpack.c.bf16 %v5101, %v5093
        %v5118 = vpack.c.bf16 %v5102, %v5094
        %v5119 = vpack.c.bf16 %v5103, %v5095
        %v5120 = vpack.c.bf16 %v5104, %v5096
        %v5121 = vpack.c.bf16 %v5105, %v5097
        %v5122 = vld [vmem:[#allocation5] sm:$0xf]
        %v5123 = vld [vmem:[#allocation5 + $0x4] sm:$0xf]
        %v5124 = vld [vmem:[#allocation5 + $0x8] sm:$0xf]
        %v5125 = vld [vmem:[#allocation5 + $0xc] sm:$0xf]
        %v5126 = vld [vmem:[#allocation5 + $0x10] sm:$0xf]
        %v5127 = vld [vmem:[#allocation5 + $0x14] sm:$0xf]
        %v5128 = vld [vmem:[#allocation5 + $0x18] sm:$0xf]
        %v5129 = vld [vmem:[#allocation5 + $0x1c] sm:$0xf]
        %v5130 = vld [vmem:[#allocation5 + $0x20] sm:$0xf]
        %v5131 = vld [vmem:[#allocation5 + $0x24] sm:$0xf]
        %v5132 = vld [vmem:[#allocation5 + $0x28] sm:$0xf]
        %v5133 = vld [vmem:[#allocation5 + $0x2c] sm:$0xf]
        %v5134 = vld [vmem:[#allocation5 + $0x30] sm:$0xf]
        %v5135 = vld [vmem:[#allocation5 + $0x34] sm:$0xf]
        %v5136 = vld [vmem:[#allocation5 + $0x38] sm:$0xf]
        %v5137 = vld [vmem:[#allocation5 + $0x3c] sm:$0xf]
        %v5138 = vld [vmem:[#allocation5 + $0x40] sm:$0xf]
        %v5139 = vld [vmem:[#allocation5 + $0x44] sm:$0xf]
        %v5140 = vld [vmem:[#allocation5 + $0x48] sm:$0xf]
        %v5141 = vld [vmem:[#allocation5 + $0x4c] sm:$0xf]
        %v5142 = vld [vmem:[#allocation5 + $0x50] sm:$0xf]
        %v5143 = vld [vmem:[#allocation5 + $0x54] sm:$0xf]
        %v5144 = vld [vmem:[#allocation5 + $0x58] sm:$0xf]
        %v5145 = vld [vmem:[#allocation5 + $0x5c] sm:$0xf]
        %v5146 = vld [vmem:[#allocation5 + $0x60] sm:$0xf]
        %v5147 = vld [vmem:[#allocation5 + $0x64] sm:$0xf]
        %v5148 = vld [vmem:[#allocation5 + $0x68] sm:$0xf]
        %v5149 = vld [vmem:[#allocation5 + $0x6c] sm:$0xf]
        %v5150 = vld [vmem:[#allocation5 + $0x70] sm:$0xf]
        %v5151 = vld [vmem:[#allocation5 + $0x74] sm:$0xf]
        %v5152 = vld [vmem:[#allocation5 + $0x78] sm:$0xf]
        %v5153 = vld [vmem:[#allocation5 + $0x7c] sm:$0xf]
        %v5154 = vld [vmem:[#allocation5 + $0x80] sm:$0xf]
        %v5155 = vld [vmem:[#allocation5 + $0x84] sm:$0xf]
        %v5156 = vld [vmem:[#allocation5 + $0x88] sm:$0xf]
        %v5157 = vld [vmem:[#allocation5 + $0x8c] sm:$0xf]
        %v5158 = vld [vmem:[#allocation5 + $0x90] sm:$0xf]
        %v5159 = vld [vmem:[#allocation5 + $0x94] sm:$0xf]
        %v5160 = vld [vmem:[#allocation5 + $0x98] sm:$0xf]
        %v5161 = vld [vmem:[#allocation5 + $0x9c] sm:$0xf]
        %v5162 = vld [vmem:[#allocation5 + $0xa0] sm:$0xf]
        %v5163 = vld [vmem:[#allocation5 + $0xa4] sm:$0xf]
        %v5164 = vld [vmem:[#allocation5 + $0xa8] sm:$0xf]
        %v5165 = vld [vmem:[#allocation5 + $0xac] sm:$0xf]
        %v5166 = vld [vmem:[#allocation5 + $0xb0] sm:$0xf]
        %v5167 = vld [vmem:[#allocation5 + $0xb4] sm:$0xf]
        %v5168 = vld [vmem:[#allocation5 + $0xb8] sm:$0xf]
        %v5169 = vld [vmem:[#allocation5 + $0xbc] sm:$0xf]
        %v5170 = vld [vmem:[#allocation5 + $0xc0] sm:$0xf]
        %v5171 = vld [vmem:[#allocation5 + $0xc4] sm:$0xf]
        %v5172 = vld [vmem:[#allocation5 + $0xc8] sm:$0xf]
        %v5173 = vld [vmem:[#allocation5 + $0xcc] sm:$0xf]
        %v5174 = vld [vmem:[#allocation5 + $0xd0] sm:$0xf]
        %v5175 = vld [vmem:[#allocation5 + $0xd4] sm:$0xf]
        %v5176 = vld [vmem:[#allocation5 + $0xd8] sm:$0xf]
        %v5177 = vld [vmem:[#allocation5 + $0xdc] sm:$0xf]
        %v5178 = vld [vmem:[#allocation5 + $0xe0] sm:$0xf]
        %v5179 = vld [vmem:[#allocation5 + $0xe4] sm:$0xf]
        %v5180 = vld [vmem:[#allocation5 + $0xe8] sm:$0xf]
        %v5181 = vld [vmem:[#allocation5 + $0xec] sm:$0xf]
        %v5182 = vld [vmem:[#allocation5 + $0xf0] sm:$0xf]
        %v5183 = vld [vmem:[#allocation5 + $0xf4] sm:$0xf]
        %v5184 = vld [vmem:[#allocation5 + $0xf8] sm:$0xf]
        %v5185 = vld [vmem:[#allocation5 + $0xfc] sm:$0xf]
        %v5186 = vld [vmem:[#allocation5 + $0x100] sm:$0xf]
        %v5187 = vld [vmem:[#allocation5 + $0x104] sm:$0xf]
        %v5188 = vld [vmem:[#allocation5 + $0x108] sm:$0xf]
        %v5189 = vld [vmem:[#allocation5 + $0x10c] sm:$0xf]
        %v5190 = vld [vmem:[#allocation5 + $0x110] sm:$0xf]
        %v5191 = vld [vmem:[#allocation5 + $0x114] sm:$0xf]
        %v5192 = vld [vmem:[#allocation5 + $0x118] sm:$0xf]
        %v5193 = vld [vmem:[#allocation5 + $0x11c] sm:$0xf]
        %v5194 = vld [vmem:[#allocation5 + $0x120] sm:$0xf]
        %v5195 = vld [vmem:[#allocation5 + $0x124] sm:$0xf]
        %v5196 = vld [vmem:[#allocation5 + $0x128] sm:$0xf]
        %v5197 = vld [vmem:[#allocation5 + $0x12c] sm:$0xf]
        %v5198 = vld [vmem:[#allocation5 + $0x130] sm:$0xf]
        %v5199 = vld [vmem:[#allocation5 + $0x134] sm:$0xf]
        %v5200 = vld [vmem:[#allocation5 + $0x138] sm:$0xf]
        %v5201 = vld [vmem:[#allocation5 + $0x13c] sm:$0xf]
        %v5202 = vld [vmem:[#allocation5 + $0x140] sm:$0xf]
        %v5203 = vld [vmem:[#allocation5 + $0x144] sm:$0xf]
        %v5204 = vld [vmem:[#allocation5 + $0x148] sm:$0xf]
        %v5205 = vld [vmem:[#allocation5 + $0x14c] sm:$0xf]
        %v5206 = vld [vmem:[#allocation5 + $0x150] sm:$0xf]
        %v5207 = vld [vmem:[#allocation5 + $0x154] sm:$0xf]
        %v5208 = vld [vmem:[#allocation5 + $0x158] sm:$0xf]
        %v5209 = vld [vmem:[#allocation5 + $0x15c] sm:$0xf]
        %v5210 = vld [vmem:[#allocation5 + $0x160] sm:$0xf]
        %v5211 = vld [vmem:[#allocation5 + $0x164] sm:$0xf]
        %v5212 = vld [vmem:[#allocation5 + $0x168] sm:$0xf]
        %v5213 = vld [vmem:[#allocation5 + $0x16c] sm:$0xf]
        %v5214 = vld [vmem:[#allocation5 + $0x170] sm:$0xf]
        %v5215 = vld [vmem:[#allocation5 + $0x174] sm:$0xf]
        %v5216 = vld [vmem:[#allocation5 + $0x178] sm:$0xf]
        %v5217 = vld [vmem:[#allocation5 + $0x17c] sm:$0xf]
        %v5218 = vld [vmem:[#allocation5 + $0x180] sm:$0xf]
        %v5219 = vld [vmem:[#allocation5 + $0x184] sm:$0xf]
        %v5220 = vld [vmem:[#allocation5 + $0x188] sm:$0xf]
        %v5221 = vld [vmem:[#allocation5 + $0x18c] sm:$0xf]
        %v5222 = vld [vmem:[#allocation5 + $0x190] sm:$0xf]
        %v5223 = vld [vmem:[#allocation5 + $0x194] sm:$0xf]
        %v5224 = vld [vmem:[#allocation5 + $0x198] sm:$0xf]
        %v5225 = vld [vmem:[#allocation5 + $0x19c] sm:$0xf]
        %v5226 = vld [vmem:[#allocation5 + $0x1a0] sm:$0xf]
        %v5227 = vld [vmem:[#allocation5 + $0x1a4] sm:$0xf]
        %v5228 = vld [vmem:[#allocation5 + $0x1a8] sm:$0xf]
        %v5229 = vld [vmem:[#allocation5 + $0x1ac] sm:$0xf]
        %v5230 = vld [vmem:[#allocation5 + $0x1b0] sm:$0xf]
        %v5231 = vld [vmem:[#allocation5 + $0x1b4] sm:$0xf]
        %v5232 = vld [vmem:[#allocation5 + $0x1b8] sm:$0xf]
        %v5233 = vld [vmem:[#allocation5 + $0x1bc] sm:$0xf]
        %v5234 = vld [vmem:[#allocation5 + $0x1c0] sm:$0xf]
        %v5235 = vld [vmem:[#allocation5 + $0x1c4] sm:$0xf]
        %v5236 = vld [vmem:[#allocation5 + $0x1c8] sm:$0xf]
        %v5237 = vld [vmem:[#allocation5 + $0x1cc] sm:$0xf]
        %v5238 = vld [vmem:[#allocation5 + $0x1d0] sm:$0xf]
        %v5239 = vld [vmem:[#allocation5 + $0x1d4] sm:$0xf]
        %v5240 = vld [vmem:[#allocation5 + $0x1d8] sm:$0xf]
        %v5241 = vld [vmem:[#allocation5 + $0x1dc] sm:$0xf]
        %v5242 = vld [vmem:[#allocation5 + $0x1e0] sm:$0xf]
        %v5243 = vld [vmem:[#allocation5 + $0x1e4] sm:$0xf]
        %v5244 = vld [vmem:[#allocation5 + $0x1e8] sm:$0xf]
        %v5245 = vld [vmem:[#allocation5 + $0x1ec] sm:$0xf]
        %v5246 = vld [vmem:[#allocation5 + $0x1f0] sm:$0xf]
        %v5247 = vld [vmem:[#allocation5 + $0x1f4] sm:$0xf]
        %v5248 = vld [vmem:[#allocation5 + $0x1f8] sm:$0xf]
        %v5249 = vld [vmem:[#allocation5 + $0x1fc] sm:$0xf]
        %v5378 = vunpack.c.l.b16 %v5122
        %v5379 = vunpack.c.l.b16 %v5123
        %v5380 = vunpack.c.l.b16 %v5124
        %v5381 = vunpack.c.l.b16 %v5125
        %v5382 = vunpack.c.l.b16 %v5126
        %v5383 = vunpack.c.l.b16 %v5127
        %v5384 = vunpack.c.l.b16 %v5128
        %v5385 = vunpack.c.l.b16 %v5129
        %v5386 = vunpack.c.l.b16 %v5130
        %v5387 = vunpack.c.l.b16 %v5131
        %v5388 = vunpack.c.l.b16 %v5132
        %v5389 = vunpack.c.l.b16 %v5133
        %v5390 = vunpack.c.l.b16 %v5134
        %v5391 = vunpack.c.l.b16 %v5135
        %v5392 = vunpack.c.l.b16 %v5136
        %v5393 = vunpack.c.l.b16 %v5137
        %v5394 = vunpack.c.l.b16 %v5138
        %v5395 = vunpack.c.l.b16 %v5139
        %v5396 = vunpack.c.l.b16 %v5140
        %v5397 = vunpack.c.l.b16 %v5141
        %v5398 = vunpack.c.l.b16 %v5142
        %v5399 = vunpack.c.l.b16 %v5143
        %v5400 = vunpack.c.l.b16 %v5144
        %v5401 = vunpack.c.l.b16 %v5145
        %v5402 = vunpack.c.l.b16 %v5146
        %v5403 = vunpack.c.l.b16 %v5147
        %v5404 = vunpack.c.l.b16 %v5148
        %v5405 = vunpack.c.l.b16 %v5149
        %v5406 = vunpack.c.l.b16 %v5150
        %v5407 = vunpack.c.l.b16 %v5151
        %v5408 = vunpack.c.l.b16 %v5152
        %v5409 = vunpack.c.l.b16 %v5153
        %v5410 = vunpack.c.l.b16 %v5154
        %v5411 = vunpack.c.l.b16 %v5155
        %v5412 = vunpack.c.l.b16 %v5156
        %v5413 = vunpack.c.l.b16 %v5157
        %v5414 = vunpack.c.l.b16 %v5158
        %v5415 = vunpack.c.l.b16 %v5159
        %v5416 = vunpack.c.l.b16 %v5160
        %v5417 = vunpack.c.l.b16 %v5161
        %v5418 = vunpack.c.l.b16 %v5162
        %v5419 = vunpack.c.l.b16 %v5163
        %v5420 = vunpack.c.l.b16 %v5164
        %v5421 = vunpack.c.l.b16 %v5165
        %v5422 = vunpack.c.l.b16 %v5166
        %v5423 = vunpack.c.l.b16 %v5167
        %v5424 = vunpack.c.l.b16 %v5168
        %v5425 = vunpack.c.l.b16 %v5169
        %v5426 = vunpack.c.l.b16 %v5170
        %v5427 = vunpack.c.l.b16 %v5171
        %v5428 = vunpack.c.l.b16 %v5172
        %v5429 = vunpack.c.l.b16 %v5173
        %v5430 = vunpack.c.l.b16 %v5174
        %v5431 = vunpack.c.l.b16 %v5175
        %v5432 = vunpack.c.l.b16 %v5176
        %v5433 = vunpack.c.l.b16 %v5177
        %v5434 = vunpack.c.l.b16 %v5178
        %v5435 = vunpack.c.l.b16 %v5179
        %v5436 = vunpack.c.l.b16 %v5180
        %v5437 = vunpack.c.l.b16 %v5181
        %v5438 = vunpack.c.l.b16 %v5182
        %v5439 = vunpack.c.l.b16 %v5183
        %v5440 = vunpack.c.l.b16 %v5184
        %v5441 = vunpack.c.l.b16 %v5185
        %v5442 = vunpack.c.l.b16 %v5186
        %v5443 = vunpack.c.l.b16 %v5187
        %v5444 = vunpack.c.l.b16 %v5188
        %v5445 = vunpack.c.l.b16 %v5189
        %v5446 = vunpack.c.l.b16 %v5190
        %v5447 = vunpack.c.l.b16 %v5191
        %v5448 = vunpack.c.l.b16 %v5192
        %v5449 = vunpack.c.l.b16 %v5193
        %v5450 = vunpack.c.l.b16 %v5194
        %v5451 = vunpack.c.l.b16 %v5195
        %v5452 = vunpack.c.l.b16 %v5196
        %v5453 = vunpack.c.l.b16 %v5197
        %v5454 = vunpack.c.l.b16 %v5198
        %v5455 = vunpack.c.l.b16 %v5199
        %v5456 = vunpack.c.l.b16 %v5200
        %v5457 = vunpack.c.l.b16 %v5201
        %v5458 = vunpack.c.l.b16 %v5202
        %v5459 = vunpack.c.l.b16 %v5203
        %v5460 = vunpack.c.l.b16 %v5204
        %v5461 = vunpack.c.l.b16 %v5205
        %v5462 = vunpack.c.l.b16 %v5206
        %v5463 = vunpack.c.l.b16 %v5207
        %v5464 = vunpack.c.l.b16 %v5208
        %v5465 = vunpack.c.l.b16 %v5209
        %v5466 = vunpack.c.l.b16 %v5210
        %v5467 = vunpack.c.l.b16 %v5211
        %v5468 = vunpack.c.l.b16 %v5212
        %v5469 = vunpack.c.l.b16 %v5213
        %v5470 = vunpack.c.l.b16 %v5214
        %v5471 = vunpack.c.l.b16 %v5215
        %v5472 = vunpack.c.l.b16 %v5216
        %v5473 = vunpack.c.l.b16 %v5217
        %v5474 = vunpack.c.l.b16 %v5218
        %v5475 = vunpack.c.l.b16 %v5219
        %v5476 = vunpack.c.l.b16 %v5220
        %v5477 = vunpack.c.l.b16 %v5221
        %v5478 = vunpack.c.l.b16 %v5222
        %v5479 = vunpack.c.l.b16 %v5223
        %v5480 = vunpack.c.l.b16 %v5224
        %v5481 = vunpack.c.l.b16 %v5225
        %v5482 = vunpack.c.l.b16 %v5226
        %v5483 = vunpack.c.l.b16 %v5227
        %v5484 = vunpack.c.l.b16 %v5228
        %v5485 = vunpack.c.l.b16 %v5229
        %v5486 = vunpack.c.l.b16 %v5230
        %v5487 = vunpack.c.l.b16 %v5231
        %v5488 = vunpack.c.l.b16 %v5232
        %v5489 = vunpack.c.l.b16 %v5233
        %v5490 = vunpack.c.l.b16 %v5234
        %v5491 = vunpack.c.l.b16 %v5235
        %v5492 = vunpack.c.l.b16 %v5236
        %v5493 = vunpack.c.l.b16 %v5237
        %v5494 = vunpack.c.l.b16 %v5238
        %v5495 = vunpack.c.l.b16 %v5239
        %v5496 = vunpack.c.l.b16 %v5240
        %v5497 = vunpack.c.l.b16 %v5241
        %v5498 = vunpack.c.l.b16 %v5242
        %v5499 = vunpack.c.l.b16 %v5243
        %v5500 = vunpack.c.l.b16 %v5244
        %v5501 = vunpack.c.l.b16 %v5245
        %v5502 = vunpack.c.l.b16 %v5246
        %v5503 = vunpack.c.l.b16 %v5247
        %v5504 = vunpack.c.l.b16 %v5248
        %v5505 = vunpack.c.l.b16 %v5249
        %v5506 = vpack.c.b16 %v5379, %v5378
        %v5507 = vpack.c.b16 %v5381, %v5380
        %v5508 = vpack.c.b16 %v5383, %v5382
        %v5509 = vpack.c.b16 %v5385, %v5384
        %v5510 = vpack.c.b16 %v5387, %v5386
        %v5511 = vpack.c.b16 %v5389, %v5388
        %v5512 = vpack.c.b16 %v5391, %v5390
        %v5513 = vpack.c.b16 %v5393, %v5392
        %v5514 = vpack.c.b16 %v5395, %v5394
        %v5515 = vpack.c.b16 %v5397, %v5396
        %v5516 = vpack.c.b16 %v5399, %v5398
        %v5517 = vpack.c.b16 %v5401, %v5400
        %v5518 = vpack.c.b16 %v5403, %v5402
        %v5519 = vpack.c.b16 %v5405, %v5404
        %v5520 = vpack.c.b16 %v5407, %v5406
        %v5521 = vpack.c.b16 %v5409, %v5408
        %v5522 = vpack.c.b16 %v5411, %v5410
        %v5523 = vpack.c.b16 %v5413, %v5412
        %v5524 = vpack.c.b16 %v5415, %v5414
        %v5525 = vpack.c.b16 %v5417, %v5416
        %v5526 = vpack.c.b16 %v5419, %v5418
        %v5527 = vpack.c.b16 %v5421, %v5420
        %v5528 = vpack.c.b16 %v5423, %v5422
        %v5529 = vpack.c.b16 %v5425, %v5424
        %v5530 = vpack.c.b16 %v5427, %v5426
        %v5531 = vpack.c.b16 %v5429, %v5428
        %v5532 = vpack.c.b16 %v5431, %v5430
        %v5533 = vpack.c.b16 %v5433, %v5432
        %v5534 = vpack.c.b16 %v5435, %v5434
        %v5535 = vpack.c.b16 %v5437, %v5436
        %v5536 = vpack.c.b16 %v5439, %v5438
        %v5537 = vpack.c.b16 %v5441, %v5440
        %v5538 = vpack.c.b16 %v5443, %v5442
        %v5539 = vpack.c.b16 %v5445, %v5444
        %v5540 = vpack.c.b16 %v5447, %v5446
        %v5541 = vpack.c.b16 %v5449, %v5448
        %v5542 = vpack.c.b16 %v5451, %v5450
        %v5543 = vpack.c.b16 %v5453, %v5452
        %v5544 = vpack.c.b16 %v5455, %v5454
        %v5545 = vpack.c.b16 %v5457, %v5456
        %v5546 = vpack.c.b16 %v5459, %v5458
        %v5547 = vpack.c.b16 %v5461, %v5460
        %v5548 = vpack.c.b16 %v5463, %v5462
        %v5549 = vpack.c.b16 %v5465, %v5464
        %v5550 = vpack.c.b16 %v5467, %v5466
        %v5551 = vpack.c.b16 %v5469, %v5468
        %v5552 = vpack.c.b16 %v5471, %v5470
        %v5553 = vpack.c.b16 %v5473, %v5472
        %v5554 = vpack.c.b16 %v5475, %v5474
        %v5555 = vpack.c.b16 %v5477, %v5476
        %v5556 = vpack.c.b16 %v5479, %v5478
        %v5557 = vpack.c.b16 %v5481, %v5480
        %v5558 = vpack.c.b16 %v5483, %v5482
        %v5559 = vpack.c.b16 %v5485, %v5484
        %v5560 = vpack.c.b16 %v5487, %v5486
        %v5561 = vpack.c.b16 %v5489, %v5488
        %v5562 = vpack.c.b16 %v5491, %v5490
        %v5563 = vpack.c.b16 %v5493, %v5492
        %v5564 = vpack.c.b16 %v5495, %v5494
        %v5565 = vpack.c.b16 %v5497, %v5496
        %v5566 = vpack.c.b16 %v5499, %v5498
        %v5567 = vpack.c.b16 %v5501, %v5500
        %v5568 = vpack.c.b16 %v5503, %v5502
        %v5569 = vpack.c.b16 %v5505, %v5504
        %5634 = vmatpush.bf16.msra.mxu0 %v5513
        %5635 = vmatpush.bf16.msra.mxu0 %v5512
        %5636 = vmatpush.bf16.msra.mxu0 %v5511
        %5637 = vmatpush.bf16.msra.mxu0 %v5510
        %5638 = vmatpush.bf16.msra.mxu0 %v5509
        %5639 = vmatpush.bf16.msra.mxu0 %v5508
        %5640 = vmatpush.bf16.msra.mxu0 %v5507
        %5641 = vmatpush.bf16.msra.mxu0 %v5506
        %5642 = vmatmul.bf16.gmra.mxu0 %v5106
        %v5643 = vpop.f32.mrf.mxu0
        %v5644 = vadd.f32 0.0, %v5643
        %v5645 = vpop.f32.mrf.mxu0
        %v5646 = vadd.f32 0.0, %v5645
        %5647 = vmatmul.bf16.gmra.mxu0 %v5114
        %v5648 = vpop.f32.mrf.mxu0
        %v5649 = vadd.f32 0.0, %v5648
        %v5650 = vpop.f32.mrf.mxu0
        %v5651 = vadd.f32 0.0, %v5650
        %5652 = vdwg.mxu0
        %5653 = vmatpush.bf16.msra.mxu0 %v5521
        %5654 = vmatpush.bf16.msra.mxu0 %v5520
        %5655 = vmatpush.bf16.msra.mxu0 %v5519
        %5656 = vmatpush.bf16.msra.mxu0 %v5518
        %5657 = vmatpush.bf16.msra.mxu0 %v5517
        %5658 = vmatpush.bf16.msra.mxu0 %v5516
        %5659 = vmatpush.bf16.msra.mxu0 %v5515
        %5660 = vmatpush.bf16.msra.mxu0 %v5514
        %5661 = vmatmul.bf16.gmra.mxu0 %v5107
        %v5662 = vpop.f32.mrf.mxu0
        %v5663 = vadd.f32 %v5644, %v5662
        %v5664 = vpop.f32.mrf.mxu0
        %v5665 = vadd.f32 %v5646, %v5664
        %5666 = vmatmul.bf16.gmra.mxu0 %v5115
        %v5667 = vpop.f32.mrf.mxu0
        %v5668 = vadd.f32 %v5649, %v5667
        %v5669 = vpop.f32.mrf.mxu0
        %v5670 = vadd.f32 %v5651, %v5669
        %5671 = vdwg.mxu0
        %5672 = vmatpush.bf16.msra.mxu0 %v5529
        %5673 = vmatpush.bf16.msra.mxu0 %v5528
        %5674 = vmatpush.bf16.msra.mxu0 %v5527
        %5675 = vmatpush.bf16.msra.mxu0 %v5526
        %5676 = vmatpush.bf16.msra.mxu0 %v5525
        %5677 = vmatpush.bf16.msra.mxu0 %v5524
        %5678 = vmatpush.bf16.msra.mxu0 %v5523
        %5679 = vmatpush.bf16.msra.mxu0 %v5522
        %5680 = vmatmul.bf16.gmra.mxu0 %v5108
        %v5681 = vpop.f32.mrf.mxu0
        %v5682 = vadd.f32 %v5663, %v5681
        %v5683 = vpop.f32.mrf.mxu0
        %v5684 = vadd.f32 %v5665, %v5683
        %5685 = vmatmul.bf16.gmra.mxu0 %v5116
        %v5686 = vpop.f32.mrf.mxu0
        %v5687 = vadd.f32 %v5668, %v5686
        %v5688 = vpop.f32.mrf.mxu0
        %v5689 = vadd.f32 %v5670, %v5688
        %5690 = vdwg.mxu0
        %5691 = vmatpush.bf16.msra.mxu0 %v5537
        %5692 = vmatpush.bf16.msra.mxu0 %v5536
        %5693 = vmatpush.bf16.msra.mxu0 %v5535
        %5694 = vmatpush.bf16.msra.mxu0 %v5534
        %5695 = vmatpush.bf16.msra.mxu0 %v5533
        %5696 = vmatpush.bf16.msra.mxu0 %v5532
        %5697 = vmatpush.bf16.msra.mxu0 %v5531
        %5698 = vmatpush.bf16.msra.mxu0 %v5530
        %5699 = vmatmul.bf16.gmra.mxu0 %v5109
        %v5700 = vpop.f32.mrf.mxu0
        %v5701 = vadd.f32 %v5682, %v5700
        %v5702 = vpop.f32.mrf.mxu0
        %v5703 = vadd.f32 %v5684, %v5702
        %5704 = vmatmul.bf16.gmra.mxu0 %v5117
        %v5705 = vpop.f32.mrf.mxu0
        %v5706 = vadd.f32 %v5687, %v5705
        %v5707 = vpop.f32.mrf.mxu0
        %v5708 = vadd.f32 %v5689, %v5707
        %5709 = vdwg.mxu0
        %5710 = vmatpush.bf16.msra.mxu0 %v5545
        %5711 = vmatpush.bf16.msra.mxu0 %v5544
        %5712 = vmatpush.bf16.msra.mxu0 %v5543
        %5713 = vmatpush.bf16.msra.mxu0 %v5542
        %5714 = vmatpush.bf16.msra.mxu0 %v5541
        %5715 = vmatpush.bf16.msra.mxu0 %v5540
        %5716 = vmatpush.bf16.msra.mxu0 %v5539
        %5717 = vmatpush.bf16.msra.mxu0 %v5538
        %5718 = vmatmul.bf16.gmra.mxu0 %v5110
        %v5719 = vpop.f32.mrf.mxu0
        %v5720 = vadd.f32 %v5701, %v5719
        %v5721 = vpop.f32.mrf.mxu0
        %v5722 = vadd.f32 %v5703, %v5721
        %5723 = vmatmul.bf16.gmra.mxu0 %v5118
        %v5724 = vpop.f32.mrf.mxu0
        %v5725 = vadd.f32 %v5706, %v5724
        %v5726 = vpop.f32.mrf.mxu0
        %v5727 = vadd.f32 %v5708, %v5726
        %5728 = vdwg.mxu0
        %5729 = vmatpush.bf16.msra.mxu0 %v5553
        %5730 = vmatpush.bf16.msra.mxu0 %v5552
        %5731 = vmatpush.bf16.msra.mxu0 %v5551
        %5732 = vmatpush.bf16.msra.mxu0 %v5550
        %5733 = vmatpush.bf16.msra.mxu0 %v5549
        %5734 = vmatpush.bf16.msra.mxu0 %v5548
        %5735 = vmatpush.bf16.msra.mxu0 %v5547
        %5736 = vmatpush.bf16.msra.mxu0 %v5546
        %5737 = vmatmul.bf16.gmra.mxu0 %v5111
        %v5738 = vpop.f32.mrf.mxu0
        %v5739 = vadd.f32 %v5720, %v5738
        %v5740 = vpop.f32.mrf.mxu0
        %v5741 = vadd.f32 %v5722, %v5740
        %5742 = vmatmul.bf16.gmra.mxu0 %v5119
        %v5743 = vpop.f32.mrf.mxu0
        %v5744 = vadd.f32 %v5725, %v5743
        %v5745 = vpop.f32.mrf.mxu0
        %v5746 = vadd.f32 %v5727, %v5745
        %5747 = vdwg.mxu0
        %5748 = vmatpush.bf16.msra.mxu0 %v5561
        %5749 = vmatpush.bf16.msra.mxu0 %v5560
        %5750 = vmatpush.bf16.msra.mxu0 %v5559
        %5751 = vmatpush.bf16.msra.mxu0 %v5558
        %5752 = vmatpush.bf16.msra.mxu0 %v5557
        %5753 = vmatpush.bf16.msra.mxu0 %v5556
        %5754 = vmatpush.bf16.msra.mxu0 %v5555
        %5755 = vmatpush.bf16.msra.mxu0 %v5554
        %5756 = vmatmul.bf16.gmra.mxu0 %v5112
        %v5757 = vpop.f32.mrf.mxu0
        %v5758 = vadd.f32 %v5739, %v5757
        %v5759 = vpop.f32.mrf.mxu0
        %v5760 = vadd.f32 %v5741, %v5759
        %5761 = vmatmul.bf16.gmra.mxu0 %v5120
        %v5762 = vpop.f32.mrf.mxu0
        %v5763 = vadd.f32 %v5744, %v5762
        %v5764 = vpop.f32.mrf.mxu0
        %v5765 = vadd.f32 %v5746, %v5764
        %5766 = vdwg.mxu0
        %5767 = vmatpush.bf16.msra.mxu0 %v5569
        %5768 = vmatpush.bf16.msra.mxu0 %v5568
        %5769 = vmatpush.bf16.msra.mxu0 %v5567
        %5770 = vmatpush.bf16.msra.mxu0 %v5566
        %5771 = vmatpush.bf16.msra.mxu0 %v5565
        %5772 = vmatpush.bf16.msra.mxu0 %v5564
        %5773 = vmatpush.bf16.msra.mxu0 %v5563
        %5774 = vmatpush.bf16.msra.mxu0 %v5562
        %5775 = vmatmul.bf16.gmra.mxu0 %v5113
        %v5776 = vpop.f32.mrf.mxu0
        %v5777 = vadd.f32 %v5758, %v5776
        %v5778 = vpop.f32.mrf.mxu0
        %v5779 = vadd.f32 %v5760, %v5778
        %5780 = vmatmul.bf16.gmra.mxu0 %v5121
        %v5781 = vpop.f32.mrf.mxu0
        %v5782 = vadd.f32 %v5763, %v5781
        %v5783 = vpop.f32.mrf.mxu0
        %v5784 = vadd.f32 %v5765, %v5783
        %5785 = vdwg.mxu0
        %v5786 = vmax.f32 %v5777, 1e-10
        %v5787 = vmax.f32 %v5779, 1e-10
        %v5788 = vmax.f32 %v5782, 1e-10
        %v5789 = vmax.f32 %v5784, 1e-10
        %v5790 = vlog2.pop %v5786
        %v5791 = vmul.f32 %v5790, 0.6931472
        %v5792 = vlog2.pop %v5787
        %v5793 = vmul.f32 %v5792, 0.6931472
        %v5794 = vlog2.pop %v5788
        %v5795 = vmul.f32 %v5794, 0.6931472
        %v5796 = vlog2.pop %v5789
        %v5797 = vmul.f32 %v5796, 0.6931472
        %v5798 = vmul.f32 %v5791, 4.3429446
        %v5799 = vmul.f32 %v5793, 4.3429446
        %v5800 = vmul.f32 %v5795, 4.3429446
        %v5801 = vmul.f32 %v5797, 4.3429446
        %5802 = vst [vmem:[%s240] sm:$0xff] %v5798
        %5803 = vst [vmem:[%s240 + $0x8] sm:$0xff] %v5799
        %5804 = vst [vmem:[%s240 + $0x10] sm:$0xff] %v5800
        %5805 = vst [vmem:[%s240 + $0x18] sm:$0xff] %v5801
        %s5806 = smul.u32 4, %s21
        %p5807 = scmp.lt.s32.totalorder %s20, 1
        %s5808 = scalar_select %p5807, %s20, 1
        %p5809 = scmp.lt.s32.totalorder %s5806, 3
        %s5810 = scalar_select %p5809, %s5806, 3
        %s5811 = smul.addr %s5808, 4
        %s5812 = sadd.s32 %s5810, %s5811
        %s5813 = smul.addr %s5812, 8
        %s5814 = scalar_lea.vmem %s3, %s5813
        // Predicated region
        $region41: #{atst_feature_forward.1} parent=31 // pred_check
          %p5815 = pneg %p118
        $region42: #{atst_feature_forward.1} parent=31 // pred_check_branch
          %5817 = sbr.rel (%p5815) target = $region44
        $region43: #{atst_feature_forward.1} parent=31 // pred_region
          %s5818 = smul.u32 4, %s21
        $region44: #{atst_feature_forward.1} parent=31 // pred_fallthru
          _
      $region32: #{atst_feature_forward.1} parent=5 // pred_fallthru
        _
      %p5819 = scmp.le.s32.totalorder 2, %s11
      // Predicated region
      $region45: #{atst_feature_forward.1} parent=5 // pred_check
        %p5820 = pneg %p5819
      $region46: #{atst_feature_forward.1} parent=5 // pred_check_branch
        %5822 = sbr.rel (%p5820) target = $region48
      $region47: #{atst_feature_forward.1} parent=5 // pred_region
        %s5823 = ssub.s32 %s11, 2
        // Predicated region
        $region49: #{atst_feature_forward.1} parent=47 // pred_check
          %p5824 = pneg %p124
        $region50: #{atst_feature_forward.1} parent=47 // pred_check_branch
          %5826 = sbr.rel (%p5824) target = $region52
        $region51: #{atst_feature_forward.1} parent=47 // pred_region
          %s5827 = smul.u32 4, %s23
          %p5828 = scmp.lt.s32.totalorder %s22, 1
          %s5829 = scalar_select %p5828, %s22, 1
          %p5830 = scmp.lt.s32.totalorder %s5827, 3
          %s5831 = scalar_select %p5830, %s5827, 3
          %s5832 = smul.addr %s5829, 4
          %s5833 = sadd.s32 %s5831, %s5832
          %s5834 = smul.addr %s5833, 8
          %s5835 = scalar_lea.vmem %s3, %s5834
        $region52: #{atst_feature_forward.1} parent=47 // pred_fallthru
          _
      $region48: #{atst_feature_forward.1} parent=5 // pred_fallthru
        _
    $region6: #{atst_feature_forward.1} parent=1 // loop_footer
      %s15 = sadd.s32 1, %s11
    $region7: #{atst_feature_forward.1} parent=1 // loop_footer_branch
      %10 = sbr.rel target = $region3
    $region8: #{atst_feature_forward.1} parent=1 // loop_exit
      _
    %5836 = vsyncpa [#allocation4], 1
    %s5837 = scalar_lea.sflag [#allocation4], 1
    %5838 = vsyncpa %s5837, 1
    %5839 = vsyncpa [#allocation6], 1

</llo_original>
